<compile_context>
chip_gen: v5e
topology: v5e:2x2
jax: 0.10.0
libtpu: 0.0.40
codegen_flags: <defaults>
</compile_context>

<pallas_src>
import jax
import jax.numpy as jnp
from jax.experimental import pallas as pl
from jax.experimental.pallas import tpu as pltpu


# ----------------------------------------------------------------------------
# Fused Pallas kernel
# ----------------------------------------------------------------------------
def dstnet_kernel(xcols_ref, wc_ref, bc_ref,
                  wih0_ref, b0_ref, whh0_ref,
                  wih1_ref, b1_ref, whh1_ref,
                  wq_ref, bq_ref, wk_ref, bk_ref, wv_ref, bv_ref, wo_ref, bo_ref,
                  selmat_ref,
                  w1_ref, b1d_ref, w2_ref, b2d_ref, w3_ref, b3d_ref,
                  o_ref,
                  g0_scr, g1_scr, s0_scr, s1_scr):
    """Whole DSTNET forward (eval mode) in one kernel.

    xcols : (T*Bp, 3C)   im2col'd conv input, time-major, batch padded to Bp.
    g*_scr: (T*Bp, 4H)   pre-computed LSTM gate slabs (order i,f,o,g).
    s*_scr: (T*Bp, H)    hidden-state sequences of LSTM layers 0 / 1.
    o_ref : (Bp, out)    head output (padded batch rows sliced off outside).
    """
    f32 = jnp.float32
    TBp = xcols_ref.shape[0]
    H = whh0_ref.shape[0]
    Bp = o_ref.shape[0]
    T = TBp // Bp

    # ---- 1. Conv1d(k=3, pad=1) + ReLU fused with LSTM layer-0 input proj ----
    y = jnp.maximum(
        jnp.dot(xcols_ref[...], wc_ref[...], preferred_element_type=f32)
        + bc_ref[...], 0.0)
    g0_scr[...] = (jnp.dot(y, wih0_ref[...], preferred_element_type=f32)
                   + b0_ref[...])

    # ---- 2/3. serial LSTM recurrences (gate order i, f, o, g) ----
    def lstm_scan(g_scr, whh, seq_scr):
        def step(t, carry):
            h, c = carry
            r0 = pl.multiple_of(t * Bp, 8)
            gates = g_scr[pl.ds(r0, Bp), :] + jnp.dot(
                h, whh, preferred_element_type=f32)
            sig = jax.nn.sigmoid(gates[:, :3 * H])          # i, f, o contiguous
            g = jnp.tanh(gates[:, 3 * H:])
            c = sig[:, H:2 * H] * c + sig[:, :H] * g
            h = sig[:, 2 * H:] * jnp.tanh(c)
            seq_scr[pl.ds(r0, Bp), :] = h
            return h, c

        zeros = jnp.zeros((Bp, H), f32)
        jax.lax.fori_loop(0, T, step, (zeros, zeros), unroll=True)

    lstm_scan(g0_scr, whh0_ref[...], s0_scr)
    # layer-1 input projection as ONE batched matmul (off the serial path)
    g1_scr[...] = (jnp.dot(s0_scr[...], wih1_ref[...], preferred_element_type=f32)
                   + b1_ref[...])
    lstm_scan(g1_scr, whh1_ref[...], s1_scr)

    # ---- 4. single-query (last time step) multi-head self-attention --------
    x = s1_scr[...]                                                   # (TBp, H)
    k = jnp.dot(x, wk_ref[...], preferred_element_type=f32) + bk_ref[...]
    v = jnp.dot(x, wv_ref[...], preferred_element_type=f32) + bv_ref[...]
    q = (jnp.dot(x[TBp - Bp:, :], wq_ref[...], preferred_element_type=f32)
         + bq_ref[...])                                               # (Bp, H)

    # per-head dot products broadcast back over each head's lanes, with the
    # 1/sqrt(head_dim) scale folded into the block-diagonal selector matrix
    scores = jnp.dot(k * jnp.tile(q, (T, 1)), selmat_ref[...],
                     preferred_element_type=f32)                      # (TBp, H)

    # per-(batch, head) max over time (static per-timestep tiles of (Bp, H))
    m = scores[0:Bp, :]
    for t in range(1, T):
        m = jnp.maximum(m, scores[t * Bp:(t + 1) * Bp, :])

    denom = jnp.zeros((Bp, H), f32)
    acc = jnp.zeros((Bp, H), f32)
    for t in range(T):
        e_t = jnp.exp(scores[t * Bp:(t + 1) * Bp, :] - m)
        denom = denom + e_t
        acc = acc + e_t * v[t * Bp:(t + 1) * Bp, :]
    ctx = acc * pl.reciprocal(denom, approx=True)                     # (Bp, H)
    attn = jnp.dot(ctx, wo_ref[...], preferred_element_type=f32) + bo_ref[...]

    # ---- 5. dense1 -> relu -> dense2 -> relu -> dense3 (lane-padded dims) --
    h1 = jnp.maximum(
        jnp.dot(attn, w1_ref[...], preferred_element_type=f32) + b1d_ref[...], 0.0)
    h2 = jnp.maximum(
        jnp.dot(h1, w2_ref[...], preferred_element_type=f32) + b2d_ref[...], 0.0)
    o_ref[...] = (
        jnp.dot(h2, w3_ref[...], preferred_element_type=f32) + b3d_ref[...])


# ----------------------------------------------------------------------------
# Model glue (pure-JAX, trace-time parameter prep + one pallas_call)
# ----------------------------------------------------------------------------
def im2col_k3_time_major(x):
    """x: (B, T, C) -> (T*B, 3C), rows ordered time-major (t slow, b fast)."""
    B, T, C = x.shape
    xp = jnp.pad(x, ((0, 0), (1, 1), (0, 0)))
    cols = jnp.stack([xp[:, d:d + T, :] for d in range(3)], axis=2)   # (B,T,3,C)
    return jnp.transpose(cols, (1, 0, 2, 3)).reshape(T * B, 3 * C)


def conv_weight_to_mat(w):
    """PyTorch Conv1d weight (C_out, C_in, K) -> (K*C_in, C_out) for im2col."""
    return jnp.transpose(w, (2, 1, 0)).reshape(-1, w.shape[0])


def reorder_gates(a):
    """Last-dim 4H gate order (i,f,g,o) [PyTorch] -> (i,f,o,g): sigmoid runs on
    one contiguous 3H slice, tanh on one H slice inside the kernel."""
    i, f, g, o = jnp.split(a, 4, axis=-1)
    return jnp.concatenate([i, f, o, g], axis=-1)


def _round_up(n, m):
    return ((n + m - 1) // m) * m


def dstnet_forward(x, p, num_heads=4):
    """x: (B, T, input_size) float32 -> (B, output_size)."""
    B, T, _ = x.shape
    H = p["w_hh_0"].shape[0]
    Bp = max(8, _round_up(B, 8))            # pad batch to full sublane tiles
    TBp = T * Bp

    # ---- parameter prep (cheap, trace-time) ----
    wc = conv_weight_to_mat(p["conv1_w"])                     # (3C, 32)
    bc = p["conv1_b"][None, :]
    wih0 = reorder_gates(p["w_ih_0"])
    whh0 = reorder_gates(p["w_hh_0"])
    b0 = reorder_gates(p["b_0"])[None, :]
    wih1 = reorder_gates(p["w_ih_1"])
    whh1 = reorder_gates(p["w_hh_1"])
    b1 = reorder_gates(p["b_1"])[None, :]

    # block-diagonal head-selector (ones within each head's hd x hd block),
    # with the 1/sqrt(head_dim) attention scale folded in
    hd = H // num_heads
    selmat = ((jnp.arange(H)[:, None] // hd) == (jnp.arange(H)[None, :] // hd)
              ).astype(jnp.float32) * (1.0 / float(hd) ** 0.5)

    # dense head: pad hidden dims to lane multiples (zero padding is exact)
    d1, d2 = p["d1_w"].shape[1], p["d2_w"].shape[1]
    d1p, d2p = _round_up(d1, 128), _round_up(d2, 128)
    w1p = jnp.pad(p["d1_w"], ((0, 0), (0, d1p - d1)))
    b1p = jnp.pad(p["d1_b"], ((0, d1p - d1),))[None, :]
    w2p = jnp.pad(p["d2_w"], ((0, d1p - d1), (0, d2p - d2)))
    b2p = jnp.pad(p["d2_b"], ((0, d2p - d2),))[None, :]
    w3p = jnp.pad(p["d3_w"], ((0, d2p - d2), (0, 0)))
    b3p = p["d3_b"][None, :]
    out_dim = p["d3_w"].shape[1]

    # ---- input prep: pad batch to Bp (zero rows), im2col for the k=3 conv ----
    xpad = jnp.pad(x, ((0, Bp - B), (0, 0), (0, 0)))
    xcols = im2col_k3_time_major(xpad)                        # (T*Bp, 3C)

    # TODO(synk): nn.Dropout and the MHA attention dropout are training-only
    # stochastic ops; implemented as identity (eval-mode semantics).
    out = pl.pallas_call(
        dstnet_kernel,
        out_shape=jax.ShapeDtypeStruct((Bp, out_dim), jnp.float32),
        scratch_shapes=[
            pltpu.VMEM((TBp, 4 * H), jnp.float32),   # gates, layer 0
            pltpu.VMEM((TBp, 4 * H), jnp.float32),   # gates, layer 1
            pltpu.VMEM((TBp, H), jnp.float32),       # hidden seq, layer 0
            pltpu.VMEM((TBp, H), jnp.float32),       # hidden seq, layer 1
        ],
        compiler_params=pltpu.CompilerParams(vmem_limit_bytes=32 * 1024 * 1024),
    )(xcols, wc, bc, wih0, b0, whh0, wih1, b1, whh1,
      p["wq"], p["bq"][None, :], p["wk"], p["bk"][None, :],
      p["wv"], p["bv"][None, :], p["wo"], p["bo"][None, :],
      selmat, w1p, b1p, w2p, b2p, w3p, b3p)
    return out[:B]


# ----------------------------------------------------------------------------
# Pure-JAX reference (same math, no Pallas) for the correctness check
# ----------------------------------------------------------------------------
def _lstm_layer_ref(x, w_ih, w_hh, b):
    B, T, _ = x.shape
    H = w_hh.shape[0]
    h = jnp.zeros((B, H), jnp.float32)
    c = jnp.zeros((B, H), jnp.float32)
    outs = []
    for t in range(T):
        g = x[:, t, :] @ w_ih + h @ w_hh + b
        i = jax.nn.sigmoid(g[:, :H])
        f = jax.nn.sigmoid(g[:, H:2 * H])
        gg = jnp.tanh(g[:, 2 * H:3 * H])
        o = jax.nn.sigmoid(g[:, 3 * H:])
        c = f * c + i * gg
        h = o * jnp.tanh(c)
        outs.append(h)
    return jnp.stack(outs, axis=1)


def _mha_last_ref(x, p, nh):
    B, T, E = x.shape
    hd = E // nh
    q = x @ p["wq"] + p["bq"]
    k = x @ p["wk"] + p["bk"]
    v = x @ p["wv"] + p["bv"]
    qh = q.reshape(B, T, nh, hd).transpose(0, 2, 1, 3)
    kh = k.reshape(B, T, nh, hd).transpose(0, 2, 1, 3)
    vh = v.reshape(B, T, nh, hd).transpose(0, 2, 1, 3)
    s = jnp.einsum("bhqd,bhkd->bhqk", qh, kh) / jnp.sqrt(hd)
    a = jax.nn.softmax(s, axis=-1)
    ctx = jnp.einsum("bhqk,bhkd->bhqd", a, vh).transpose(0, 2, 1, 3).reshape(B, T, E)
    return (ctx @ p["wo"] + p["bo"])[:, -1, :]


def dstnet_forward_ref(x, p, num_heads=4):
    B, T, _ = x.shape
    y = jnp.maximum(
        im2col_k3_time_major(x) @ conv_weight_to_mat(p["conv1_w"]) + p["conv1_b"], 0.0)
    y = y.reshape(T, B, 32).transpose(1, 0, 2)                # (B, T, 32)
    l0 = _lstm_layer_ref(y, p["w_ih_0"], p["w_hh_0"], p["b_0"])
    l1 = _lstm_layer_ref(l0, p["w_ih_1"], p["w_hh_1"], p["b_1"])
    a = _mha_last_ref(l1, p, num_heads)                       # (B, H)
    h1 = jnp.maximum(a @ p["d1_w"] + p["d1_b"], 0.0)
    h2 = jnp.maximum(h1 @ p["d2_w"] + p["d2_b"], 0.0)
    return h2 @ p["d3_w"] + p["d3_b"]


# ----------------------------------------------------------------------------
# Deterministic parameter init (PyTorch gate order i,f,g,o; weights stored
# already transposed to (in, out))
# ----------------------------------------------------------------------------
def init_params(key, input_size, hidden_size=64, output_size=1):
    ks = iter(jax.random.split(key, 64))

    def u(shape, k):
        return jax.random.uniform(next(ks), shape, jnp.float32, -k, k)

    H = hidden_size
    p = {}
    kc = 1.0 / (input_size * 3) ** 0.5
    p["conv1_w"] = u((32, input_size, 3), kc)
    p["conv1_b"] = u((32,), kc)

    kl = 1.0 / H ** 0.5
    p["w_ih_0"] = u((32, 4 * H), kl)
    p["w_hh_0"] = u((H, 4 * H), kl)
    p["b_0"] = u((4 * H,), kl) + u((4 * H,), kl)              # b_ih + b_hh
    p["w_ih_1"] = u((H, 4 * H), kl)
    p["w_hh_1"] = u((H, 4 * H), kl)
    p["b_1"] = u((4 * H,), kl) + u((4 * H,), kl)

    ka = 1.0 / H ** 0.5
    for n in ("wq", "wk", "wv", "wo"):
        p[n] = u((H, H), ka)
    for n in ("bq", "bk", "bv", "bo"):
        p[n] = u((H,), ka)

    p["d1_w"] = u((H, 400), 1.0 / H ** 0.5)
    p["d1_b"] = u((400,), 1.0 / H ** 0.5)
    p["d2_w"] = u((400, 100), 1.0 / 400 ** 0.5)
    p["d2_b"] = u((100,), 1.0 / 400 ** 0.5)
    p["d3_w"] = u((100, output_size), 0.1)
    p["d3_b"] = u((output_size,), 0.1)
    return p


if __name__ == "__main__":
    B, T, INPUT_SIZE = 2, 8, 4
    HIDDEN, OUT, HEADS = 64, 1, 4

    key = jax.random.PRNGKey(0)
    kx, kp = jax.random.split(key)
    x = jax.random.normal(kx, (B, T, INPUT_SIZE), jnp.float32)
    params = init_params(kp, INPUT_SIZE, HIDDEN, OUT)

    out = jax.block_until_ready(dstnet_forward(x, params, HEADS))
    ref = jax.block_until_ready(dstnet_forward_ref(x, params, HEADS))

    assert out.shape == (B, OUT), out.shape
    assert jnp.allclose(out, ref, rtol=2e-3, atol=2e-3), (out, ref)
    print("KERNEL_OK")
</pallas_src>

<mosaic_0001>
module attributes {stable_mosaic.version = 11 : i64} {
  func.func @dstnet_kernel(%arg0: memref<64x12xf32, #tpu.memory_space<vmem>>, %arg1: memref<12x32xf32, #tpu.memory_space<vmem>>, %arg2: memref<1x32xf32, #tpu.memory_space<vmem>>, %arg3: memref<32x256xf32, #tpu.memory_space<vmem>>, %arg4: memref<1x256xf32, #tpu.memory_space<vmem>>, %arg5: memref<64x256xf32, #tpu.memory_space<vmem>>, %arg6: memref<64x256xf32, #tpu.memory_space<vmem>>, %arg7: memref<1x256xf32, #tpu.memory_space<vmem>>, %arg8: memref<64x256xf32, #tpu.memory_space<vmem>>, %arg9: memref<64x64xf32, #tpu.memory_space<vmem>>, %arg10: memref<1x64xf32, #tpu.memory_space<vmem>>, %arg11: memref<64x64xf32, #tpu.memory_space<vmem>>, %arg12: memref<1x64xf32, #tpu.memory_space<vmem>>, %arg13: memref<64x64xf32, #tpu.memory_space<vmem>>, %arg14: memref<1x64xf32, #tpu.memory_space<vmem>>, %arg15: memref<64x64xf32, #tpu.memory_space<vmem>>, %arg16: memref<1x64xf32, #tpu.memory_space<vmem>>, %arg17: memref<64x64xf32, #tpu.memory_space<vmem>>, %arg18: memref<64x512xf32, #tpu.memory_space<vmem>>, %arg19: memref<1x512xf32, #tpu.memory_space<vmem>>, %arg20: memref<512x128xf32, #tpu.memory_space<vmem>>, %arg21: memref<1x128xf32, #tpu.memory_space<vmem>>, %arg22: memref<128x1xf32, #tpu.memory_space<vmem>>, %arg23: memref<1x1xf32, #tpu.memory_space<vmem>>, %arg24: memref<8x1xf32, #tpu.memory_space<vmem>>, %arg25: memref<64x256xf32, #tpu.memory_space<vmem>>, %arg26: memref<64x256xf32, #tpu.memory_space<vmem>>, %arg27: memref<64x64xf32, #tpu.memory_space<vmem>>, %arg28: memref<64x64xf32, #tpu.memory_space<vmem>>) attributes {dimension_semantics = [], scalar_prefetch = 0 : i64, scratch_operands = 4 : i64, tpu.core_type = #tpu.core_type<tc>} {
    %c0 = arith.constant 0 : index
    %c0_0 = arith.constant 0 : index
    %0 = vector.load %arg0[%c0, %c0_0] : memref<64x12xf32, #tpu.memory_space<vmem>>, vector<64x12xf32>
    %c0_1 = arith.constant 0 : index
    %c0_2 = arith.constant 0 : index
    %1 = vector.load %arg1[%c0_1, %c0_2] : memref<12x32xf32, #tpu.memory_space<vmem>>, vector<12x32xf32>
    %cst = arith.constant dense<0.000000e+00> : vector<64x32xf32>
    %2 = tpu.matmul %0, %1, %cst {dimension_numbers = #tpu.dot_dimension_numbers<[1], [0], [0], [1], [0, 0, 1, 1], [], []>} : vector<64x12xf32>, vector<12x32xf32>, vector<64x32xf32> -> vector<64x32xf32>
    %c0_3 = arith.constant 0 : index
    %c0_4 = arith.constant 0 : index
    %3 = vector.load %arg2[%c0_3, %c0_4] : memref<1x32xf32, #tpu.memory_space<vmem>>, vector<1x32xf32>
    %4 = vector.broadcast %3 : vector<1x32xf32> to vector<64x32xf32>
    %5 = arith.addf %2, %4 : vector<64x32xf32>
    %cst_5 = arith.constant 0.000000e+00 : f32
    %6 = vector.broadcast %cst_5 : f32 to vector<64x32xf32>
    %7 = arith.maximumf %5, %6 : vector<64x32xf32>
    %c0_6 = arith.constant 0 : index
    %c0_7 = arith.constant 0 : index
    %8 = vector.load %arg3[%c0_6, %c0_7] : memref<32x256xf32, #tpu.memory_space<vmem>>, vector<32x256xf32>
    %cst_8 = arith.constant dense<0.000000e+00> : vector<64x256xf32>
    %9 = tpu.matmul %7, %8, %cst_8 {dimension_numbers = #tpu.dot_dimension_numbers<[1], [0], [0], [1], [0, 0, 1, 1], [], []>} : vector<64x32xf32>, vector<32x256xf32>, vector<64x256xf32> -> vector<64x256xf32>
    %c0_9 = arith.constant 0 : index
    %c0_10 = arith.constant 0 : index
    %10 = vector.load %arg4[%c0_9, %c0_10] : memref<1x256xf32, #tpu.memory_space<vmem>>, vector<1x256xf32>
    %11 = vector.broadcast %10 : vector<1x256xf32> to vector<64x256xf32>
    %12 = arith.addf %9, %11 : vector<64x256xf32>
    %c0_11 = arith.constant 0 : index
    %c0_12 = arith.constant 0 : index
    %13 = vector.load %arg25[%c0_11, %c0_12] : memref<64x256xf32, #tpu.memory_space<vmem>>, vector<64x256xf32>
    tpu.vector_store %arg25[%c0_11, %c0_12], %12 {strides = array<i32>} : memref<64x256xf32, #tpu.memory_space<vmem>>, vector<64x256xf32>,
    %c0_13 = arith.constant 0 : index
    %c0_14 = arith.constant 0 : index
    %14 = vector.load %arg5[%c0_13, %c0_14] : memref<64x256xf32, #tpu.memory_space<vmem>>, vector<64x256xf32>
    %cst_15 = arith.constant 0.000000e+00 : f32
    %15 = vector.broadcast %cst_15 : f32 to vector<8x64xf32>
    %c0_i32 = arith.constant 0 : i32
    %c8_i32 = arith.constant 8 : i32
    %16 = arith.muli %c0_i32, %c8_i32 : i32
    %17 = tpu.assume_multiple %16, 8 : i32
    %18 = arith.index_cast %17 : i32 to index
    %c0_16 = arith.constant 0 : index
    %19 = vector.load %arg25[%18, %c0_16] : memref<64x256xf32, #tpu.memory_space<vmem>>, vector<8x256xf32>
    %cst_17 = arith.constant dense<0.000000e+00> : vector<8x256xf32>
    %20 = tpu.matmul %15, %14, %cst_17 {dimension_numbers = #tpu.dot_dimension_numbers<[1], [0], [0], [1], [0, 0, 1, 1], [], []>} : vector<8x64xf32>, vector<64x256xf32>, vector<8x256xf32> -> vector<8x256xf32>
    %21 = arith.addf %19, %20 : vector<8x256xf32>
    %22 = vector.extract_strided_slice %21 {offsets = [0, 0], sizes = [8, 192], strides = [1, 1]} : vector<8x256xf32> to vector<8x192xf32>
    %23 = arith.negf %22 : vector<8x192xf32>
    %24 = math.exp %23 : vector<8x192xf32>
    %cst_18 = arith.constant 1.000000e+00 : f32
    %25 = vector.broadcast %cst_18 : f32 to vector<8x192xf32>
    %26 = arith.addf %25, %24 : vector<8x192xf32>
    %27 = arith.divf %25, %26 : vector<8x192xf32>
    %28 = vector.extract_strided_slice %21 {offsets = [0, 192], sizes = [8, 64], strides = [1, 1]} : vector<8x256xf32> to vector<8x64xf32>
    %29 = math.tanh %28 : vector<8x64xf32>
    %30 = vector.extract_strided_slice %27 {offsets = [0, 64], sizes = [8, 64], strides = [1, 1]} : vector<8x192xf32> to vector<8x64xf32>
    %31 = arith.mulf %30, %15 : vector<8x64xf32>
    %32 = vector.extract_strided_slice %27 {offsets = [0, 0], sizes = [8, 64], strides = [1, 1]} : vector<8x192xf32> to vector<8x64xf32>
    %33 = arith.mulf %32, %29 : vector<8x64xf32>
    %34 = arith.addf %31, %33 : vector<8x64xf32>
    %35 = vector.extract_strided_slice %27 {offsets = [0, 128], sizes = [8, 64], strides = [1, 1]} : vector<8x192xf32> to vector<8x64xf32>
    %36 = math.tanh %34 : vector<8x64xf32>
    %37 = arith.mulf %35, %36 : vector<8x64xf32>
    %38 = arith.index_cast %17 : i32 to index
    %c0_19 = arith.constant 0 : index
    %39 = vector.load %arg27[%38, %c0_19] : memref<64x64xf32, #tpu.memory_space<vmem>>, vector<8x64xf32>
    tpu.vector_store %arg27[%38, %c0_19], %37 {strides = array<i32>} : memref<64x64xf32, #tpu.memory_space<vmem>>, vector<8x64xf32>,
    %c1_i32 = arith.constant 1 : i32
    %c8_i32_20 = arith.constant 8 : i32
    %40 = arith.muli %c1_i32, %c8_i32_20 : i32
    %41 = tpu.assume_multiple %40, 8 : i32
    %42 = arith.index_cast %41 : i32 to index
    %c0_21 = arith.constant 0 : index
    %43 = vector.load %arg25[%42, %c0_21] : memref<64x256xf32, #tpu.memory_space<vmem>>, vector<8x256xf32>
    %cst_22 = arith.constant dense<0.000000e+00> : vector<8x256xf32>
    %44 = tpu.matmul %37, %14, %cst_22 {dimension_numbers = #tpu.dot_dimension_numbers<[1], [0], [0], [1], [0, 0, 1, 1], [], []>} : vector<8x64xf32>, vector<64x256xf32>, vector<8x256xf32> -> vector<8x256xf32>
    %45 = arith.addf %43, %44 : vector<8x256xf32>
    %46 = vector.extract_strided_slice %45 {offsets = [0, 0], sizes = [8, 192], strides = [1, 1]} : vector<8x256xf32> to vector<8x192xf32>
    %47 = arith.negf %46 : vector<8x192xf32>
    %48 = math.exp %47 : vector<8x192xf32>
    %cst_23 = arith.constant 1.000000e+00 : f32
    %49 = vector.broadcast %cst_23 : f32 to vector<8x192xf32>
    %50 = arith.addf %49, %48 : vector<8x192xf32>
    %51 = arith.divf %49, %50 : vector<8x192xf32>
    %52 = vector.extract_strided_slice %45 {offsets = [0, 192], sizes = [8, 64], strides = [1, 1]} : vector<8x256xf32> to vector<8x64xf32>
    %53 = math.tanh %52 : vector<8x64xf32>
    %54 = vector.extract_strided_slice %51 {offsets = [0, 64], sizes = [8, 64], strides = [1, 1]} : vector<8x192xf32> to vector<8x64xf32>
    %55 = arith.mulf %54, %34 : vector<8x64xf32>
    %56 = vector.extract_strided_slice %51 {offsets = [0, 0], sizes = [8, 64], strides = [1, 1]} : vector<8x192xf32> to vector<8x64xf32>
    %57 = arith.mulf %56, %53 : vector<8x64xf32>
    %58 = arith.addf %55, %57 : vector<8x64xf32>
    %59 = vector.extract_strided_slice %51 {offsets = [0, 128], sizes = [8, 64], strides = [1, 1]} : vector<8x192xf32> to vector<8x64xf32>
    %60 = math.tanh %58 : vector<8x64xf32>
    %61 = arith.mulf %59, %60 : vector<8x64xf32>
    %62 = arith.index_cast %41 : i32 to index
    %c0_24 = arith.constant 0 : index
    %63 = vector.load %arg27[%62, %c0_24] : memref<64x64xf32, #tpu.memory_space<vmem>>, vector<8x64xf32>
    tpu.vector_store %arg27[%62, %c0_24], %61 {strides = array<i32>} : memref<64x64xf32, #tpu.memory_space<vmem>>, vector<8x64xf32>,
    %c2_i32 = arith.constant 2 : i32
    %c8_i32_25 = arith.constant 8 : i32
    %64 = arith.muli %c2_i32, %c8_i32_25 : i32
    %65 = tpu.assume_multiple %64, 8 : i32
    %66 = arith.index_cast %65 : i32 to index
    %c0_26 = arith.constant 0 : index
    %67 = vector.load %arg25[%66, %c0_26] : memref<64x256xf32, #tpu.memory_space<vmem>>, vector<8x256xf32>
    %cst_27 = arith.constant dense<0.000000e+00> : vector<8x256xf32>
    %68 = tpu.matmul %61, %14, %cst_27 {dimension_numbers = #tpu.dot_dimension_numbers<[1], [0], [0], [1], [0, 0, 1, 1], [], []>} : vector<8x64xf32>, vector<64x256xf32>, vector<8x256xf32> -> vector<8x256xf32>
    %69 = arith.addf %67, %68 : vector<8x256xf32>
    %70 = vector.extract_strided_slice %69 {offsets = [0, 0], sizes = [8, 192], strides = [1, 1]} : vector<8x256xf32> to vector<8x192xf32>
    %71 = arith.negf %70 : vector<8x192xf32>
    %72 = math.exp %71 : vector<8x192xf32>
    %cst_28 = arith.constant 1.000000e+00 : f32
    %73 = vector.broadcast %cst_28 : f32 to vector<8x192xf32>
    %74 = arith.addf %73, %72 : vector<8x192xf32>
    %75 = arith.divf %73, %74 : vector<8x192xf32>
    %76 = vector.extract_strided_slice %69 {offsets = [0, 192], sizes = [8, 64], strides = [1, 1]} : vector<8x256xf32> to vector<8x64xf32>
    %77 = math.tanh %76 : vector<8x64xf32>
    %78 = vector.extract_strided_slice %75 {offsets = [0, 64], sizes = [8, 64], strides = [1, 1]} : vector<8x192xf32> to vector<8x64xf32>
    %79 = arith.mulf %78, %58 : vector<8x64xf32>
    %80 = vector.extract_strided_slice %75 {offsets = [0, 0], sizes = [8, 64], strides = [1, 1]} : vector<8x192xf32> to vector<8x64xf32>
    %81 = arith.mulf %80, %77 : vector<8x64xf32>
    %82 = arith.addf %79, %81 : vector<8x64xf32>
    %83 = vector.extract_strided_slice %75 {offsets = [0, 128], sizes = [8, 64], strides = [1, 1]} : vector<8x192xf32> to vector<8x64xf32>
    %84 = math.tanh %82 : vector<8x64xf32>
    %85 = arith.mulf %83, %84 : vector<8x64xf32>
    %86 = arith.index_cast %65 : i32 to index
    %c0_29 = arith.constant 0 : index
    %87 = vector.load %arg27[%86, %c0_29] : memref<64x64xf32, #tpu.memory_space<vmem>>, vector<8x64xf32>
    tpu.vector_store %arg27[%86, %c0_29], %85 {strides = array<i32>} : memref<64x64xf32, #tpu.memory_space<vmem>>, vector<8x64xf32>,
    %c3_i32 = arith.constant 3 : i32
    %c8_i32_30 = arith.constant 8 : i32
    %88 = arith.muli %c3_i32, %c8_i32_30 : i32
    %89 = tpu.assume_multiple %88, 8 : i32
    %90 = arith.index_cast %89 : i32 to index
    %c0_31 = arith.constant 0 : index
    %91 = vector.load %arg25[%90, %c0_31] : memref<64x256xf32, #tpu.memory_space<vmem>>, vector<8x256xf32>
    %cst_32 = arith.constant dense<0.000000e+00> : vector<8x256xf32>
    %92 = tpu.matmul %85, %14, %cst_32 {dimension_numbers = #tpu.dot_dimension_numbers<[1], [0], [0], [1], [0, 0, 1, 1], [], []>} : vector<8x64xf32>, vector<64x256xf32>, vector<8x256xf32> -> vector<8x256xf32>
    %93 = arith.addf %91, %92 : vector<8x256xf32>
    %94 = vector.extract_strided_slice %93 {offsets = [0, 0], sizes = [8, 192], strides = [1, 1]} : vector<8x256xf32> to vector<8x192xf32>
    %95 = arith.negf %94 : vector<8x192xf32>
    %96 = math.exp %95 : vector<8x192xf32>
    %cst_33 = arith.constant 1.000000e+00 : f32
    %97 = vector.broadcast %cst_33 : f32 to vector<8x192xf32>
    %98 = arith.addf %97, %96 : vector<8x192xf32>
    %99 = arith.divf %97, %98 : vector<8x192xf32>
    %100 = vector.extract_strided_slice %93 {offsets = [0, 192], sizes = [8, 64], strides = [1, 1]} : vector<8x256xf32> to vector<8x64xf32>
    %101 = math.tanh %100 : vector<8x64xf32>
    %102 = vector.extract_strided_slice %99 {offsets = [0, 64], sizes = [8, 64], strides = [1, 1]} : vector<8x192xf32> to vector<8x64xf32>
    %103 = arith.mulf %102, %82 : vector<8x64xf32>
    %104 = vector.extract_strided_slice %99 {offsets = [0, 0], sizes = [8, 64], strides = [1, 1]} : vector<8x192xf32> to vector<8x64xf32>
    %105 = arith.mulf %104, %101 : vector<8x64xf32>
    %106 = arith.addf %103, %105 : vector<8x64xf32>
    %107 = vector.extract_strided_slice %99 {offsets = [0, 128], sizes = [8, 64], strides = [1, 1]} : vector<8x192xf32> to vector<8x64xf32>
    %108 = math.tanh %106 : vector<8x64xf32>
    %109 = arith.mulf %107, %108 : vector<8x64xf32>
    %110 = arith.index_cast %89 : i32 to index
    %c0_34 = arith.constant 0 : index
    %111 = vector.load %arg27[%110, %c0_34] : memref<64x64xf32, #tpu.memory_space<vmem>>, vector<8x64xf32>
    tpu.vector_store %arg27[%110, %c0_34], %109 {strides = array<i32>} : memref<64x64xf32, #tpu.memory_space<vmem>>, vector<8x64xf32>,
    %c4_i32 = arith.constant 4 : i32
    %c8_i32_35 = arith.constant 8 : i32
    %112 = arith.muli %c4_i32, %c8_i32_35 : i32
    %113 = tpu.assume_multiple %112, 8 : i32
    %114 = arith.index_cast %113 : i32 to index
    %c0_36 = arith.constant 0 : index
    %115 = vector.load %arg25[%114, %c0_36] : memref<64x256xf32, #tpu.memory_space<vmem>>, vector<8x256xf32>
    %cst_37 = arith.constant dense<0.000000e+00> : vector<8x256xf32>
    %116 = tpu.matmul %109, %14, %cst_37 {dimension_numbers = #tpu.dot_dimension_numbers<[1], [0], [0], [1], [0, 0, 1, 1], [], []>} : vector<8x64xf32>, vector<64x256xf32>, vector<8x256xf32> -> vector<8x256xf32>
    %117 = arith.addf %115, %116 : vector<8x256xf32>
    %118 = vector.extract_strided_slice %117 {offsets = [0, 0], sizes = [8, 192], strides = [1, 1]} : vector<8x256xf32> to vector<8x192xf32>
    %119 = arith.negf %118 : vector<8x192xf32>
    %120 = math.exp %119 : vector<8x192xf32>
    %cst_38 = arith.constant 1.000000e+00 : f32
    %121 = vector.broadcast %cst_38 : f32 to vector<8x192xf32>
    %122 = arith.addf %121, %120 : vector<8x192xf32>
    %123 = arith.divf %121, %122 : vector<8x192xf32>
    %124 = vector.extract_strided_slice %117 {offsets = [0, 192], sizes = [8, 64], strides = [1, 1]} : vector<8x256xf32> to vector<8x64xf32>
    %125 = math.tanh %124 : vector<8x64xf32>
    %126 = vector.extract_strided_slice %123 {offsets = [0, 64], sizes = [8, 64], strides = [1, 1]} : vector<8x192xf32> to vector<8x64xf32>
    %127 = arith.mulf %126, %106 : vector<8x64xf32>
    %128 = vector.extract_strided_slice %123 {offsets = [0, 0], sizes = [8, 64], strides = [1, 1]} : vector<8x192xf32> to vector<8x64xf32>
    %129 = arith.mulf %128, %125 : vector<8x64xf32>
    %130 = arith.addf %127, %129 : vector<8x64xf32>
    %131 = vector.extract_strided_slice %123 {offsets = [0, 128], sizes = [8, 64], strides = [1, 1]} : vector<8x192xf32> to vector<8x64xf32>
    %132 = math.tanh %130 : vector<8x64xf32>
    %133 = arith.mulf %131, %132 : vector<8x64xf32>
    %134 = arith.index_cast %113 : i32 to index
    %c0_39 = arith.constant 0 : index
    %135 = vector.load %arg27[%134, %c0_39] : memref<64x64xf32, #tpu.memory_space<vmem>>, vector<8x64xf32>
    tpu.vector_store %arg27[%134, %c0_39], %133 {strides = array<i32>} : memref<64x64xf32, #tpu.memory_space<vmem>>, vector<8x64xf32>,
    %c5_i32 = arith.constant 5 : i32
    %c8_i32_40 = arith.constant 8 : i32
    %136 = arith.muli %c5_i32, %c8_i32_40 : i32
    %137 = tpu.assume_multiple %136, 8 : i32
    %138 = arith.index_cast %137 : i32 to index
    %c0_41 = arith.constant 0 : index
    %139 = vector.load %arg25[%138, %c0_41] : memref<64x256xf32, #tpu.memory_space<vmem>>, vector<8x256xf32>
    %cst_42 = arith.constant dense<0.000000e+00> : vector<8x256xf32>
    %140 = tpu.matmul %133, %14, %cst_42 {dimension_numbers = #tpu.dot_dimension_numbers<[1], [0], [0], [1], [0, 0, 1, 1], [], []>} : vector<8x64xf32>, vector<64x256xf32>, vector<8x256xf32> -> vector<8x256xf32>
    %141 = arith.addf %139, %140 : vector<8x256xf32>
    %142 = vector.extract_strided_slice %141 {offsets = [0, 0], sizes = [8, 192], strides = [1, 1]} : vector<8x256xf32> to vector<8x192xf32>
    %143 = arith.negf %142 : vector<8x192xf32>
    %144 = math.exp %143 : vector<8x192xf32>
    %cst_43 = arith.constant 1.000000e+00 : f32
    %145 = vector.broadcast %cst_43 : f32 to vector<8x192xf32>
    %146 = arith.addf %145, %144 : vector<8x192xf32>
    %147 = arith.divf %145, %146 : vector<8x192xf32>
    %148 = vector.extract_strided_slice %141 {offsets = [0, 192], sizes = [8, 64], strides = [1, 1]} : vector<8x256xf32> to vector<8x64xf32>
    %149 = math.tanh %148 : vector<8x64xf32>
    %150 = vector.extract_strided_slice %147 {offsets = [0, 64], sizes = [8, 64], strides = [1, 1]} : vector<8x192xf32> to vector<8x64xf32>
    %151 = arith.mulf %150, %130 : vector<8x64xf32>
    %152 = vector.extract_strided_slice %147 {offsets = [0, 0], sizes = [8, 64], strides = [1, 1]} : vector<8x192xf32> to vector<8x64xf32>
    %153 = arith.mulf %152, %149 : vector<8x64xf32>
    %154 = arith.addf %151, %153 : vector<8x64xf32>
    %155 = vector.extract_strided_slice %147 {offsets = [0, 128], sizes = [8, 64], strides = [1, 1]} : vector<8x192xf32> to vector<8x64xf32>
    %156 = math.tanh %154 : vector<8x64xf32>
    %157 = arith.mulf %155, %156 : vector<8x64xf32>
    %158 = arith.index_cast %137 : i32 to index
    %c0_44 = arith.constant 0 : index
    %159 = vector.load %arg27[%158, %c0_44] : memref<64x64xf32, #tpu.memory_space<vmem>>, vector<8x64xf32>
    tpu.vector_store %arg27[%158, %c0_44], %157 {strides = array<i32>} : memref<64x64xf32, #tpu.memory_space<vmem>>, vector<8x64xf32>,
    %c6_i32 = arith.constant 6 : i32
    %c8_i32_45 = arith.constant 8 : i32
    %160 = arith.muli %c6_i32, %c8_i32_45 : i32
    %161 = tpu.assume_multiple %160, 8 : i32
    %162 = arith.index_cast %161 : i32 to index
    %c0_46 = arith.constant 0 : index
    %163 = vector.load %arg25[%162, %c0_46] : memref<64x256xf32, #tpu.memory_space<vmem>>, vector<8x256xf32>
    %cst_47 = arith.constant dense<0.000000e+00> : vector<8x256xf32>
    %164 = tpu.matmul %157, %14, %cst_47 {dimension_numbers = #tpu.dot_dimension_numbers<[1], [0], [0], [1], [0, 0, 1, 1], [], []>} : vector<8x64xf32>, vector<64x256xf32>, vector<8x256xf32> -> vector<8x256xf32>
    %165 = arith.addf %163, %164 : vector<8x256xf32>
    %166 = vector.extract_strided_slice %165 {offsets = [0, 0], sizes = [8, 192], strides = [1, 1]} : vector<8x256xf32> to vector<8x192xf32>
    %167 = arith.negf %166 : vector<8x192xf32>
    %168 = math.exp %167 : vector<8x192xf32>
    %cst_48 = arith.constant 1.000000e+00 : f32
    %169 = vector.broadcast %cst_48 : f32 to vector<8x192xf32>
    %170 = arith.addf %169, %168 : vector<8x192xf32>
    %171 = arith.divf %169, %170 : vector<8x192xf32>
    %172 = vector.extract_strided_slice %165 {offsets = [0, 192], sizes = [8, 64], strides = [1, 1]} : vector<8x256xf32> to vector<8x64xf32>
    %173 = math.tanh %172 : vector<8x64xf32>
    %174 = vector.extract_strided_slice %171 {offsets = [0, 64], sizes = [8, 64], strides = [1, 1]} : vector<8x192xf32> to vector<8x64xf32>
    %175 = arith.mulf %174, %154 : vector<8x64xf32>
    %176 = vector.extract_strided_slice %171 {offsets = [0, 0], sizes = [8, 64], strides = [1, 1]} : vector<8x192xf32> to vector<8x64xf32>
    %177 = arith.mulf %176, %173 : vector<8x64xf32>
    %178 = arith.addf %175, %177 : vector<8x64xf32>
    %179 = vector.extract_strided_slice %171 {offsets = [0, 128], sizes = [8, 64], strides = [1, 1]} : vector<8x192xf32> to vector<8x64xf32>
    %180 = math.tanh %178 : vector<8x64xf32>
    %181 = arith.mulf %179, %180 : vector<8x64xf32>
    %182 = arith.index_cast %161 : i32 to index
    %c0_49 = arith.constant 0 : index
    %183 = vector.load %arg27[%182, %c0_49] : memref<64x64xf32, #tpu.memory_space<vmem>>, vector<8x64xf32>
    tpu.vector_store %arg27[%182, %c0_49], %181 {strides = array<i32>} : memref<64x64xf32, #tpu.memory_space<vmem>>, vector<8x64xf32>,
    %c7_i32 = arith.constant 7 : i32
    %c8_i32_50 = arith.constant 8 : i32
    %184 = arith.muli %c7_i32, %c8_i32_50 : i32
    %185 = tpu.assume_multiple %184, 8 : i32
    %186 = arith.index_cast %185 : i32 to index
    %c0_51 = arith.constant 0 : index
    %187 = vector.load %arg25[%186, %c0_51] : memref<64x256xf32, #tpu.memory_space<vmem>>, vector<8x256xf32>
    %cst_52 = arith.constant dense<0.000000e+00> : vector<8x256xf32>
    %188 = tpu.matmul %181, %14, %cst_52 {dimension_numbers = #tpu.dot_dimension_numbers<[1], [0], [0], [1], [0, 0, 1, 1], [], []>} : vector<8x64xf32>, vector<64x256xf32>, vector<8x256xf32> -> vector<8x256xf32>
    %189 = arith.addf %187, %188 : vector<8x256xf32>
    %190 = vector.extract_strided_slice %189 {offsets = [0, 0], sizes = [8, 192], strides = [1, 1]} : vector<8x256xf32> to vector<8x192xf32>
    %191 = arith.negf %190 : vector<8x192xf32>
    %192 = math.exp %191 : vector<8x192xf32>
    %cst_53 = arith.constant 1.000000e+00 : f32
    %193 = vector.broadcast %cst_53 : f32 to vector<8x192xf32>
    %194 = arith.addf %193, %192 : vector<8x192xf32>
    %195 = arith.divf %193, %194 : vector<8x192xf32>
    %196 = vector.extract_strided_slice %189 {offsets = [0, 192], sizes = [8, 64], strides = [1, 1]} : vector<8x256xf32> to vector<8x64xf32>
    %197 = math.tanh %196 : vector<8x64xf32>
    %198 = vector.extract_strided_slice %195 {offsets = [0, 64], sizes = [8, 64], strides = [1, 1]} : vector<8x192xf32> to vector<8x64xf32>
    %199 = arith.mulf %198, %178 : vector<8x64xf32>
    %200 = vector.extract_strided_slice %195 {offsets = [0, 0], sizes = [8, 64], strides = [1, 1]} : vector<8x192xf32> to vector<8x64xf32>
    %201 = arith.mulf %200, %197 : vector<8x64xf32>
    %202 = arith.addf %199, %201 : vector<8x64xf32>
    %203 = vector.extract_strided_slice %195 {offsets = [0, 128], sizes = [8, 64], strides = [1, 1]} : vector<8x192xf32> to vector<8x64xf32>
    %204 = math.tanh %202 : vector<8x64xf32>
    %205 = arith.mulf %203, %204 : vector<8x64xf32>
    %206 = arith.index_cast %185 : i32 to index
    %c0_54 = arith.constant 0 : index
    %207 = vector.load %arg27[%206, %c0_54] : memref<64x64xf32, #tpu.memory_space<vmem>>, vector<8x64xf32>
    tpu.vector_store %arg27[%206, %c0_54], %205 {strides = array<i32>} : memref<64x64xf32, #tpu.memory_space<vmem>>, vector<8x64xf32>,
    %c8_i32_55 = arith.constant 8 : i32
    %c0_56 = arith.constant 0 : index
    %c0_57 = arith.constant 0 : index
    %208 = vector.load %arg27[%c0_56, %c0_57] : memref<64x64xf32, #tpu.memory_space<vmem>>, vector<64x64xf32>
    %c0_58 = arith.constant 0 : index
    %c0_59 = arith.constant 0 : index
    %209 = vector.load %arg6[%c0_58, %c0_59] : memref<64x256xf32, #tpu.memory_space<vmem>>, vector<64x256xf32>
    %cst_60 = arith.constant dense<0.000000e+00> : vector<64x256xf32>
    %210 = tpu.matmul %208, %209, %cst_60 {dimension_numbers = #tpu.dot_dimension_numbers<[1], [0], [0], [1], [0, 0, 1, 1], [], []>} : vector<64x64xf32>, vector<64x256xf32>, vector<64x256xf32> -> vector<64x256xf32>
    %c0_61 = arith.constant 0 : index
    %c0_62 = arith.constant 0 : index
    %211 = vector.load %arg7[%c0_61, %c0_62] : memref<1x256xf32, #tpu.memory_space<vmem>>, vector<1x256xf32>
    %212 = vector.broadcast %211 : vector<1x256xf32> to vector<64x256xf32>
    %213 = arith.addf %210, %212 : vector<64x256xf32>
    %c0_63 = arith.constant 0 : index
    %c0_64 = arith.constant 0 : index
    %214 = vector.load %arg26[%c0_63, %c0_64] : memref<64x256xf32, #tpu.memory_space<vmem>>, vector<64x256xf32>
    tpu.vector_store %arg26[%c0_63, %c0_64], %213 {strides = array<i32>} : memref<64x256xf32, #tpu.memory_space<vmem>>, vector<64x256xf32>,
    %c0_65 = arith.constant 0 : index
    %c0_66 = arith.constant 0 : index
    %215 = vector.load %arg8[%c0_65, %c0_66] : memref<64x256xf32, #tpu.memory_space<vmem>>, vector<64x256xf32>
    %cst_67 = arith.constant 0.000000e+00 : f32
    %216 = vector.broadcast %cst_67 : f32 to vector<8x64xf32>
    %c0_i32_68 = arith.constant 0 : i32
    %c8_i32_69 = arith.constant 8 : i32
    %217 = arith.muli %c0_i32_68, %c8_i32_69 : i32
    %218 = tpu.assume_multiple %217, 8 : i32
    %219 = arith.index_cast %218 : i32 to index
    %c0_70 = arith.constant 0 : index
    %220 = vector.load %arg26[%219, %c0_70] : memref<64x256xf32, #tpu.memory_space<vmem>>, vector<8x256xf32>
    %cst_71 = arith.constant dense<0.000000e+00> : vector<8x256xf32>
    %221 = tpu.matmul %216, %215, %cst_71 {dimension_numbers = #tpu.dot_dimension_numbers<[1], [0], [0], [1], [0, 0, 1, 1], [], []>} : vector<8x64xf32>, vector<64x256xf32>, vector<8x256xf32> -> vector<8x256xf32>
    %222 = arith.addf %220, %221 : vector<8x256xf32>
    %223 = vector.extract_strided_slice %222 {offsets = [0, 0], sizes = [8, 192], strides = [1, 1]} : vector<8x256xf32> to vector<8x192xf32>
    %224 = arith.negf %223 : vector<8x192xf32>
    %225 = math.exp %224 : vector<8x192xf32>
    %cst_72 = arith.constant 1.000000e+00 : f32
    %226 = vector.broadcast %cst_72 : f32 to vector<8x192xf32>
    %227 = arith.addf %226, %225 : vector<8x192xf32>
    %228 = arith.divf %226, %227 : vector<8x192xf32>
    %229 = vector.extract_strided_slice %222 {offsets = [0, 192], sizes = [8, 64], strides = [1, 1]} : vector<8x256xf32> to vector<8x64xf32>
    %230 = math.tanh %229 : vector<8x64xf32>
    %231 = vector.extract_strided_slice %228 {offsets = [0, 64], sizes = [8, 64], strides = [1, 1]} : vector<8x192xf32> to vector<8x64xf32>
    %232 = arith.mulf %231, %216 : vector<8x64xf32>
    %233 = vector.extract_strided_slice %228 {offsets = [0, 0], sizes = [8, 64], strides = [1, 1]} : vector<8x192xf32> to vector<8x64xf32>
    %234 = arith.mulf %233, %230 : vector<8x64xf32>
    %235 = arith.addf %232, %234 : vector<8x64xf32>
    %236 = vector.extract_strided_slice %228 {offsets = [0, 128], sizes = [8, 64], strides = [1, 1]} : vector<8x192xf32> to vector<8x64xf32>
    %237 = math.tanh %235 : vector<8x64xf32>
    %238 = arith.mulf %236, %237 : vector<8x64xf32>
    %239 = arith.index_cast %218 : i32 to index
    %c0_73 = arith.constant 0 : index
    %240 = vector.load %arg28[%239, %c0_73] : memref<64x64xf32, #tpu.memory_space<vmem>>, vector<8x64xf32>
    tpu.vector_store %arg28[%239, %c0_73], %238 {strides = array<i32>} : memref<64x64xf32, #tpu.memory_space<vmem>>, vector<8x64xf32>,
    %c1_i32_74 = arith.constant 1 : i32
    %c8_i32_75 = arith.constant 8 : i32
    %241 = arith.muli %c1_i32_74, %c8_i32_75 : i32
    %242 = tpu.assume_multiple %241, 8 : i32
    %243 = arith.index_cast %242 : i32 to index
    %c0_76 = arith.constant 0 : index
    %244 = vector.load %arg26[%243, %c0_76] : memref<64x256xf32, #tpu.memory_space<vmem>>, vector<8x256xf32>
    %cst_77 = arith.constant dense<0.000000e+00> : vector<8x256xf32>
    %245 = tpu.matmul %238, %215, %cst_77 {dimension_numbers = #tpu.dot_dimension_numbers<[1], [0], [0], [1], [0, 0, 1, 1], [], []>} : vector<8x64xf32>, vector<64x256xf32>, vector<8x256xf32> -> vector<8x256xf32>
    %246 = arith.addf %244, %245 : vector<8x256xf32>
    %247 = vector.extract_strided_slice %246 {offsets = [0, 0], sizes = [8, 192], strides = [1, 1]} : vector<8x256xf32> to vector<8x192xf32>
    %248 = arith.negf %247 : vector<8x192xf32>
    %249 = math.exp %248 : vector<8x192xf32>
    %cst_78 = arith.constant 1.000000e+00 : f32
    %250 = vector.broadcast %cst_78 : f32 to vector<8x192xf32>
    %251 = arith.addf %250, %249 : vector<8x192xf32>
    %252 = arith.divf %250, %251 : vector<8x192xf32>
    %253 = vector.extract_strided_slice %246 {offsets = [0, 192], sizes = [8, 64], strides = [1, 1]} : vector<8x256xf32> to vector<8x64xf32>
    %254 = math.tanh %253 : vector<8x64xf32>
    %255 = vector.extract_strided_slice %252 {offsets = [0, 64], sizes = [8, 64], strides = [1, 1]} : vector<8x192xf32> to vector<8x64xf32>
    %256 = arith.mulf %255, %235 : vector<8x64xf32>
    %257 = vector.extract_strided_slice %252 {offsets = [0, 0], sizes = [8, 64], strides = [1, 1]} : vector<8x192xf32> to vector<8x64xf32>
    %258 = arith.mulf %257, %254 : vector<8x64xf32>
    %259 = arith.addf %256, %258 : vector<8x64xf32>
    %260 = vector.extract_strided_slice %252 {offsets = [0, 128], sizes = [8, 64], strides = [1, 1]} : vector<8x192xf32> to vector<8x64xf32>
    %261 = math.tanh %259 : vector<8x64xf32>
    %262 = arith.mulf %260, %261 : vector<8x64xf32>
    %263 = arith.index_cast %242 : i32 to index
    %c0_79 = arith.constant 0 : index
    %264 = vector.load %arg28[%263, %c0_79] : memref<64x64xf32, #tpu.memory_space<vmem>>, vector<8x64xf32>
    tpu.vector_store %arg28[%263, %c0_79], %262 {strides = array<i32>} : memref<64x64xf32, #tpu.memory_space<vmem>>, vector<8x64xf32>,
    %c2_i32_80 = arith.constant 2 : i32
    %c8_i32_81 = arith.constant 8 : i32
    %265 = arith.muli %c2_i32_80, %c8_i32_81 : i32
    %266 = tpu.assume_multiple %265, 8 : i32
    %267 = arith.index_cast %266 : i32 to index
    %c0_82 = arith.constant 0 : index
    %268 = vector.load %arg26[%267, %c0_82] : memref<64x256xf32, #tpu.memory_space<vmem>>, vector<8x256xf32>
    %cst_83 = arith.constant dense<0.000000e+00> : vector<8x256xf32>
    %269 = tpu.matmul %262, %215, %cst_83 {dimension_numbers = #tpu.dot_dimension_numbers<[1], [0], [0], [1], [0, 0, 1, 1], [], []>} : vector<8x64xf32>, vector<64x256xf32>, vector<8x256xf32> -> vector<8x256xf32>
    %270 = arith.addf %268, %269 : vector<8x256xf32>
    %271 = vector.extract_strided_slice %270 {offsets = [0, 0], sizes = [8, 192], strides = [1, 1]} : vector<8x256xf32> to vector<8x192xf32>
    %272 = arith.negf %271 : vector<8x192xf32>
    %273 = math.exp %272 : vector<8x192xf32>
    %cst_84 = arith.constant 1.000000e+00 : f32
    %274 = vector.broadcast %cst_84 : f32 to vector<8x192xf32>
    %275 = arith.addf %274, %273 : vector<8x192xf32>
    %276 = arith.divf %274, %275 : vector<8x192xf32>
    %277 = vector.extract_strided_slice %270 {offsets = [0, 192], sizes = [8, 64], strides = [1, 1]} : vector<8x256xf32> to vector<8x64xf32>
    %278 = math.tanh %277 : vector<8x64xf32>
    %279 = vector.extract_strided_slice %276 {offsets = [0, 64], sizes = [8, 64], strides = [1, 1]} : vector<8x192xf32> to vector<8x64xf32>
    %280 = arith.mulf %279, %259 : vector<8x64xf32>
    %281 = vector.extract_strided_slice %276 {offsets = [0, 0], sizes = [8, 64], strides = [1, 1]} : vector<8x192xf32> to vector<8x64xf32>
    %282 = arith.mulf %281, %278 : vector<8x64xf32>
    %283 = arith.addf %280, %282 : vector<8x64xf32>
    %284 = vector.extract_strided_slice %276 {offsets = [0, 128], sizes = [8, 64], strides = [1, 1]} : vector<8x192xf32> to vector<8x64xf32>
    %285 = math.tanh %283 : vector<8x64xf32>
    %286 = arith.mulf %284, %285 : vector<8x64xf32>
    %287 = arith.index_cast %266 : i32 to index
    %c0_85 = arith.constant 0 : index
    %288 = vector.load %arg28[%287, %c0_85] : memref<64x64xf32, #tpu.memory_space<vmem>>, vector<8x64xf32>
    tpu.vector_store %arg28[%287, %c0_85], %286 {strides = array<i32>} : memref<64x64xf32, #tpu.memory_space<vmem>>, vector<8x64xf32>,
    %c3_i32_86 = arith.constant 3 : i32
    %c8_i32_87 = arith.constant 8 : i32
    %289 = arith.muli %c3_i32_86, %c8_i32_87 : i32
    %290 = tpu.assume_multiple %289, 8 : i32
    %291 = arith.index_cast %290 : i32 to index
    %c0_88 = arith.constant 0 : index
    %292 = vector.load %arg26[%291, %c0_88] : memref<64x256xf32, #tpu.memory_space<vmem>>, vector<8x256xf32>
    %cst_89 = arith.constant dense<0.000000e+00> : vector<8x256xf32>
    %293 = tpu.matmul %286, %215, %cst_89 {dimension_numbers = #tpu.dot_dimension_numbers<[1], [0], [0], [1], [0, 0, 1, 1], [], []>} : vector<8x64xf32>, vector<64x256xf32>, vector<8x256xf32> -> vector<8x256xf32>
    %294 = arith.addf %292, %293 : vector<8x256xf32>
    %295 = vector.extract_strided_slice %294 {offsets = [0, 0], sizes = [8, 192], strides = [1, 1]} : vector<8x256xf32> to vector<8x192xf32>
    %296 = arith.negf %295 : vector<8x192xf32>
    %297 = math.exp %296 : vector<8x192xf32>
    %cst_90 = arith.constant 1.000000e+00 : f32
    %298 = vector.broadcast %cst_90 : f32 to vector<8x192xf32>
    %299 = arith.addf %298, %297 : vector<8x192xf32>
    %300 = arith.divf %298, %299 : vector<8x192xf32>
    %301 = vector.extract_strided_slice %294 {offsets = [0, 192], sizes = [8, 64], strides = [1, 1]} : vector<8x256xf32> to vector<8x64xf32>
    %302 = math.tanh %301 : vector<8x64xf32>
    %303 = vector.extract_strided_slice %300 {offsets = [0, 64], sizes = [8, 64], strides = [1, 1]} : vector<8x192xf32> to vector<8x64xf32>
    %304 = arith.mulf %303, %283 : vector<8x64xf32>
    %305 = vector.extract_strided_slice %300 {offsets = [0, 0], sizes = [8, 64], strides = [1, 1]} : vector<8x192xf32> to vector<8x64xf32>
    %306 = arith.mulf %305, %302 : vector<8x64xf32>
    %307 = arith.addf %304, %306 : vector<8x64xf32>
    %308 = vector.extract_strided_slice %300 {offsets = [0, 128], sizes = [8, 64], strides = [1, 1]} : vector<8x192xf32> to vector<8x64xf32>
    %309 = math.tanh %307 : vector<8x64xf32>
    %310 = arith.mulf %308, %309 : vector<8x64xf32>
    %311 = arith.index_cast %290 : i32 to index
    %c0_91 = arith.constant 0 : index
    %312 = vector.load %arg28[%311, %c0_91] : memref<64x64xf32, #tpu.memory_space<vmem>>, vector<8x64xf32>
    tpu.vector_store %arg28[%311, %c0_91], %310 {strides = array<i32>} : memref<64x64xf32, #tpu.memory_space<vmem>>, vector<8x64xf32>,
    %c4_i32_92 = arith.constant 4 : i32
    %c8_i32_93 = arith.constant 8 : i32
    %313 = arith.muli %c4_i32_92, %c8_i32_93 : i32
    %314 = tpu.assume_multiple %313, 8 : i32
    %315 = arith.index_cast %314 : i32 to index
    %c0_94 = arith.constant 0 : index
    %316 = vector.load %arg26[%315, %c0_94] : memref<64x256xf32, #tpu.memory_space<vmem>>, vector<8x256xf32>
    %cst_95 = arith.constant dense<0.000000e+00> : vector<8x256xf32>
    %317 = tpu.matmul %310, %215, %cst_95 {dimension_numbers = #tpu.dot_dimension_numbers<[1], [0], [0], [1], [0, 0, 1, 1], [], []>} : vector<8x64xf32>, vector<64x256xf32>, vector<8x256xf32> -> vector<8x256xf32>
    %318 = arith.addf %316, %317 : vector<8x256xf32>
    %319 = vector.extract_strided_slice %318 {offsets = [0, 0], sizes = [8, 192], strides = [1, 1]} : vector<8x256xf32> to vector<8x192xf32>
    %320 = arith.negf %319 : vector<8x192xf32>
    %321 = math.exp %320 : vector<8x192xf32>
    %cst_96 = arith.constant 1.000000e+00 : f32
    %322 = vector.broadcast %cst_96 : f32 to vector<8x192xf32>
    %323 = arith.addf %322, %321 : vector<8x192xf32>
    %324 = arith.divf %322, %323 : vector<8x192xf32>
    %325 = vector.extract_strided_slice %318 {offsets = [0, 192], sizes = [8, 64], strides = [1, 1]} : vector<8x256xf32> to vector<8x64xf32>
    %326 = math.tanh %325 : vector<8x64xf32>
    %327 = vector.extract_strided_slice %324 {offsets = [0, 64], sizes = [8, 64], strides = [1, 1]} : vector<8x192xf32> to vector<8x64xf32>
    %328 = arith.mulf %327, %307 : vector<8x64xf32>
    %329 = vector.extract_strided_slice %324 {offsets = [0, 0], sizes = [8, 64], strides = [1, 1]} : vector<8x192xf32> to vector<8x64xf32>
    %330 = arith.mulf %329, %326 : vector<8x64xf32>
    %331 = arith.addf %328, %330 : vector<8x64xf32>
    %332 = vector.extract_strided_slice %324 {offsets = [0, 128], sizes = [8, 64], strides = [1, 1]} : vector<8x192xf32> to vector<8x64xf32>
    %333 = math.tanh %331 : vector<8x64xf32>
    %334 = arith.mulf %332, %333 : vector<8x64xf32>
    %335 = arith.index_cast %314 : i32 to index
    %c0_97 = arith.constant 0 : index
    %336 = vector.load %arg28[%335, %c0_97] : memref<64x64xf32, #tpu.memory_space<vmem>>, vector<8x64xf32>
    tpu.vector_store %arg28[%335, %c0_97], %334 {strides = array<i32>} : memref<64x64xf32, #tpu.memory_space<vmem>>, vector<8x64xf32>,
    %c5_i32_98 = arith.constant 5 : i32
    %c8_i32_99 = arith.constant 8 : i32
    %337 = arith.muli %c5_i32_98, %c8_i32_99 : i32
    %338 = tpu.assume_multiple %337, 8 : i32
    %339 = arith.index_cast %338 : i32 to index
    %c0_100 = arith.constant 0 : index
    %340 = vector.load %arg26[%339, %c0_100] : memref<64x256xf32, #tpu.memory_space<vmem>>, vector<8x256xf32>
    %cst_101 = arith.constant dense<0.000000e+00> : vector<8x256xf32>
    %341 = tpu.matmul %334, %215, %cst_101 {dimension_numbers = #tpu.dot_dimension_numbers<[1], [0], [0], [1], [0, 0, 1, 1], [], []>} : vector<8x64xf32>, vector<64x256xf32>, vector<8x256xf32> -> vector<8x256xf32>
    %342 = arith.addf %340, %341 : vector<8x256xf32>
    %343 = vector.extract_strided_slice %342 {offsets = [0, 0], sizes = [8, 192], strides = [1, 1]} : vector<8x256xf32> to vector<8x192xf32>
    %344 = arith.negf %343 : vector<8x192xf32>
    %345 = math.exp %344 : vector<8x192xf32>
    %cst_102 = arith.constant 1.000000e+00 : f32
    %346 = vector.broadcast %cst_102 : f32 to vector<8x192xf32>
    %347 = arith.addf %346, %345 : vector<8x192xf32>
    %348 = arith.divf %346, %347 : vector<8x192xf32>
    %349 = vector.extract_strided_slice %342 {offsets = [0, 192], sizes = [8, 64], strides = [1, 1]} : vector<8x256xf32> to vector<8x64xf32>
    %350 = math.tanh %349 : vector<8x64xf32>
    %351 = vector.extract_strided_slice %348 {offsets = [0, 64], sizes = [8, 64], strides = [1, 1]} : vector<8x192xf32> to vector<8x64xf32>
    %352 = arith.mulf %351, %331 : vector<8x64xf32>
    %353 = vector.extract_strided_slice %348 {offsets = [0, 0], sizes = [8, 64], strides = [1, 1]} : vector<8x192xf32> to vector<8x64xf32>
    %354 = arith.mulf %353, %350 : vector<8x64xf32>
    %355 = arith.addf %352, %354 : vector<8x64xf32>
    %356 = vector.extract_strided_slice %348 {offsets = [0, 128], sizes = [8, 64], strides = [1, 1]} : vector<8x192xf32> to vector<8x64xf32>
    %357 = math.tanh %355 : vector<8x64xf32>
    %358 = arith.mulf %356, %357 : vector<8x64xf32>
    %359 = arith.index_cast %338 : i32 to index
    %c0_103 = arith.constant 0 : index
    %360 = vector.load %arg28[%359, %c0_103] : memref<64x64xf32, #tpu.memory_space<vmem>>, vector<8x64xf32>
    tpu.vector_store %arg28[%359, %c0_103], %358 {strides = array<i32>} : memref<64x64xf32, #tpu.memory_space<vmem>>, vector<8x64xf32>,
    %c6_i32_104 = arith.constant 6 : i32
    %c8_i32_105 = arith.constant 8 : i32
    %361 = arith.muli %c6_i32_104, %c8_i32_105 : i32
    %362 = tpu.assume_multiple %361, 8 : i32
    %363 = arith.index_cast %362 : i32 to index
    %c0_106 = arith.constant 0 : index
    %364 = vector.load %arg26[%363, %c0_106] : memref<64x256xf32, #tpu.memory_space<vmem>>, vector<8x256xf32>
    %cst_107 = arith.constant dense<0.000000e+00> : vector<8x256xf32>
    %365 = tpu.matmul %358, %215, %cst_107 {dimension_numbers = #tpu.dot_dimension_numbers<[1], [0], [0], [1], [0, 0, 1, 1], [], []>} : vector<8x64xf32>, vector<64x256xf32>, vector<8x256xf32> -> vector<8x256xf32>
    %366 = arith.addf %364, %365 : vector<8x256xf32>
    %367 = vector.extract_strided_slice %366 {offsets = [0, 0], sizes = [8, 192], strides = [1, 1]} : vector<8x256xf32> to vector<8x192xf32>
    %368 = arith.negf %367 : vector<8x192xf32>
    %369 = math.exp %368 : vector<8x192xf32>
    %cst_108 = arith.constant 1.000000e+00 : f32
    %370 = vector.broadcast %cst_108 : f32 to vector<8x192xf32>
    %371 = arith.addf %370, %369 : vector<8x192xf32>
    %372 = arith.divf %370, %371 : vector<8x192xf32>
    %373 = vector.extract_strided_slice %366 {offsets = [0, 192], sizes = [8, 64], strides = [1, 1]} : vector<8x256xf32> to vector<8x64xf32>
    %374 = math.tanh %373 : vector<8x64xf32>
    %375 = vector.extract_strided_slice %372 {offsets = [0, 64], sizes = [8, 64], strides = [1, 1]} : vector<8x192xf32> to vector<8x64xf32>
    %376 = arith.mulf %375, %355 : vector<8x64xf32>
    %377 = vector.extract_strided_slice %372 {offsets = [0, 0], sizes = [8, 64], strides = [1, 1]} : vector<8x192xf32> to vector<8x64xf32>
    %378 = arith.mulf %377, %374 : vector<8x64xf32>
    %379 = arith.addf %376, %378 : vector<8x64xf32>
    %380 = vector.extract_strided_slice %372 {offsets = [0, 128], sizes = [8, 64], strides = [1, 1]} : vector<8x192xf32> to vector<8x64xf32>
    %381 = math.tanh %379 : vector<8x64xf32>
    %382 = arith.mulf %380, %381 : vector<8x64xf32>
    %383 = arith.index_cast %362 : i32 to index
    %c0_109 = arith.constant 0 : index
    %384 = vector.load %arg28[%383, %c0_109] : memref<64x64xf32, #tpu.memory_space<vmem>>, vector<8x64xf32>
    tpu.vector_store %arg28[%383, %c0_109], %382 {strides = array<i32>} : memref<64x64xf32, #tpu.memory_space<vmem>>, vector<8x64xf32>,
    %c7_i32_110 = arith.constant 7 : i32
    %c8_i32_111 = arith.constant 8 : i32
    %385 = arith.muli %c7_i32_110, %c8_i32_111 : i32
    %386 = tpu.assume_multiple %385, 8 : i32
    %387 = arith.index_cast %386 : i32 to index
    %c0_112 = arith.constant 0 : index
    %388 = vector.load %arg26[%387, %c0_112] : memref<64x256xf32, #tpu.memory_space<vmem>>, vector<8x256xf32>
    %cst_113 = arith.constant dense<0.000000e+00> : vector<8x256xf32>
    %389 = tpu.matmul %382, %215, %cst_113 {dimension_numbers = #tpu.dot_dimension_numbers<[1], [0], [0], [1], [0, 0, 1, 1], [], []>} : vector<8x64xf32>, vector<64x256xf32>, vector<8x256xf32> -> vector<8x256xf32>
    %390 = arith.addf %388, %389 : vector<8x256xf32>
    %391 = vector.extract_strided_slice %390 {offsets = [0, 0], sizes = [8, 192], strides = [1, 1]} : vector<8x256xf32> to vector<8x192xf32>
    %392 = arith.negf %391 : vector<8x192xf32>
    %393 = math.exp %392 : vector<8x192xf32>
    %cst_114 = arith.constant 1.000000e+00 : f32
    %394 = vector.broadcast %cst_114 : f32 to vector<8x192xf32>
    %395 = arith.addf %394, %393 : vector<8x192xf32>
    %396 = arith.divf %394, %395 : vector<8x192xf32>
    %397 = vector.extract_strided_slice %390 {offsets = [0, 192], sizes = [8, 64], strides = [1, 1]} : vector<8x256xf32> to vector<8x64xf32>
    %398 = math.tanh %397 : vector<8x64xf32>
    %399 = vector.extract_strided_slice %396 {offsets = [0, 64], sizes = [8, 64], strides = [1, 1]} : vector<8x192xf32> to vector<8x64xf32>
    %400 = arith.mulf %399, %379 : vector<8x64xf32>
    %401 = vector.extract_strided_slice %396 {offsets = [0, 0], sizes = [8, 64], strides = [1, 1]} : vector<8x192xf32> to vector<8x64xf32>
    %402 = arith.mulf %401, %398 : vector<8x64xf32>
    %403 = arith.addf %400, %402 : vector<8x64xf32>
    %404 = vector.extract_strided_slice %396 {offsets = [0, 128], sizes = [8, 64], strides = [1, 1]} : vector<8x192xf32> to vector<8x64xf32>
    %405 = math.tanh %403 : vector<8x64xf32>
    %406 = arith.mulf %404, %405 : vector<8x64xf32>
    %407 = arith.index_cast %386 : i32 to index
    %c0_115 = arith.constant 0 : index
    %408 = vector.load %arg28[%407, %c0_115] : memref<64x64xf32, #tpu.memory_space<vmem>>, vector<8x64xf32>
    tpu.vector_store %arg28[%407, %c0_115], %406 {strides = array<i32>} : memref<64x64xf32, #tpu.memory_space<vmem>>, vector<8x64xf32>,
    %c8_i32_116 = arith.constant 8 : i32
    %c0_117 = arith.constant 0 : index
    %c0_118 = arith.constant 0 : index
    %409 = vector.load %arg28[%c0_117, %c0_118] : memref<64x64xf32, #tpu.memory_space<vmem>>, vector<64x64xf32>
    %c0_119 = arith.constant 0 : index
    %c0_120 = arith.constant 0 : index
    %410 = vector.load %arg11[%c0_119, %c0_120] : memref<64x64xf32, #tpu.memory_space<vmem>>, vector<64x64xf32>
    %cst_121 = arith.constant dense<0.000000e+00> : vector<64x64xf32>
    %411 = tpu.matmul %409, %410, %cst_121 {dimension_numbers = #tpu.dot_dimension_numbers<[1], [0], [0], [1], [0, 0, 1, 1], [], []>} : vector<64x64xf32>, vector<64x64xf32>, vector<64x64xf32> -> vector<64x64xf32>
    %c0_122 = arith.constant 0 : index
    %c0_123 = arith.constant 0 : index
    %412 = vector.load %arg12[%c0_122, %c0_123] : memref<1x64xf32, #tpu.memory_space<vmem>>, vector<1x64xf32>
    %413 = vector.broadcast %412 : vector<1x64xf32> to vector<64x64xf32>
    %414 = arith.addf %411, %413 : vector<64x64xf32>
    %c0_124 = arith.constant 0 : index
    %c0_125 = arith.constant 0 : index
    %415 = vector.load %arg13[%c0_124, %c0_125] : memref<64x64xf32, #tpu.memory_space<vmem>>, vector<64x64xf32>
    %cst_126 = arith.constant dense<0.000000e+00> : vector<64x64xf32>
    %416 = tpu.matmul %409, %415, %cst_126 {dimension_numbers = #tpu.dot_dimension_numbers<[1], [0], [0], [1], [0, 0, 1, 1], [], []>} : vector<64x64xf32>, vector<64x64xf32>, vector<64x64xf32> -> vector<64x64xf32>
    %c0_127 = arith.constant 0 : index
    %c0_128 = arith.constant 0 : index
    %417 = vector.load %arg14[%c0_127, %c0_128] : memref<1x64xf32, #tpu.memory_space<vmem>>, vector<1x64xf32>
    %418 = vector.broadcast %417 : vector<1x64xf32> to vector<64x64xf32>
    %419 = arith.addf %416, %418 : vector<64x64xf32>
    %420 = vector.extract_strided_slice %409 {offsets = [56, 0], sizes = [8, 64], strides = [1, 1]} : vector<64x64xf32> to vector<8x64xf32>
    %c0_129 = arith.constant 0 : index
    %c0_130 = arith.constant 0 : index
    %421 = vector.load %arg9[%c0_129, %c0_130] : memref<64x64xf32, #tpu.memory_space<vmem>>, vector<64x64xf32>
    %cst_131 = arith.constant dense<0.000000e+00> : vector<8x64xf32>
    %422 = tpu.matmul %420, %421, %cst_131 {dimension_numbers = #tpu.dot_dimension_numbers<[1], [0], [0], [1], [0, 0, 1, 1], [], []>} : vector<8x64xf32>, vector<64x64xf32>, vector<8x64xf32> -> vector<8x64xf32>
    %c0_132 = arith.constant 0 : index
    %c0_133 = arith.constant 0 : index
    %423 = vector.load %arg10[%c0_132, %c0_133] : memref<1x64xf32, #tpu.memory_space<vmem>>, vector<1x64xf32>
    %424 = vector.broadcast %423 : vector<1x64xf32> to vector<8x64xf32>
    %425 = arith.addf %422, %424 : vector<8x64xf32>
    %426 = tpu.concatenate %425, %425, %425, %425, %425, %425, %425, %425 in 0 : vector<8x64xf32>, vector<8x64xf32>, vector<8x64xf32>, vector<8x64xf32>, vector<8x64xf32>, vector<8x64xf32>, vector<8x64xf32>, vector<8x64xf32> -> vector<64x64xf32>
    %427 = arith.mulf %414, %426 : vector<64x64xf32>
    %c0_134 = arith.constant 0 : index
    %c0_135 = arith.constant 0 : index
    %428 = vector.load %arg17[%c0_134, %c0_135] : memref<64x64xf32, #tpu.memory_space<vmem>>, vector<64x64xf32>
    %cst_136 = arith.constant dense<0.000000e+00> : vector<64x64xf32>
    %429 = tpu.matmul %427, %428, %cst_136 {dimension_numbers = #tpu.dot_dimension_numbers<[1], [0], [0], [1], [0, 0, 1, 1], [], []>} : vector<64x64xf32>, vector<64x64xf32>, vector<64x64xf32> -> vector<64x64xf32>
    %430 = vector.extract_strided_slice %429 {offsets = [0, 0], sizes = [8, 64], strides = [1, 1]} : vector<64x64xf32> to vector<8x64xf32>
    %431 = vector.extract_strided_slice %429 {offsets = [8, 0], sizes = [8, 64], strides = [1, 1]} : vector<64x64xf32> to vector<8x64xf32>
    %432 = arith.maximumf %430, %431 : vector<8x64xf32>
    %433 = vector.extract_strided_slice %429 {offsets = [16, 0], sizes = [8, 64], strides = [1, 1]} : vector<64x64xf32> to vector<8x64xf32>
    %434 = arith.maximumf %432, %433 : vector<8x64xf32>
    %435 = vector.extract_strided_slice %429 {offsets = [24, 0], sizes = [8, 64], strides = [1, 1]} : vector<64x64xf32> to vector<8x64xf32>
    %436 = arith.maximumf %434, %435 : vector<8x64xf32>
    %437 = vector.extract_strided_slice %429 {offsets = [32, 0], sizes = [8, 64], strides = [1, 1]} : vector<64x64xf32> to vector<8x64xf32>
    %438 = arith.maximumf %436, %437 : vector<8x64xf32>
    %439 = vector.extract_strided_slice %429 {offsets = [40, 0], sizes = [8, 64], strides = [1, 1]} : vector<64x64xf32> to vector<8x64xf32>
    %440 = arith.maximumf %438, %439 : vector<8x64xf32>
    %441 = vector.extract_strided_slice %429 {offsets = [48, 0], sizes = [8, 64], strides = [1, 1]} : vector<64x64xf32> to vector<8x64xf32>
    %442 = arith.maximumf %440, %441 : vector<8x64xf32>
    %443 = vector.extract_strided_slice %429 {offsets = [56, 0], sizes = [8, 64], strides = [1, 1]} : vector<64x64xf32> to vector<8x64xf32>
    %444 = arith.maximumf %442, %443 : vector<8x64xf32>
    %cst_137 = arith.constant 0.000000e+00 : f32
    %445 = vector.broadcast %cst_137 : f32 to vector<8x64xf32>
    %cst_138 = arith.constant 0.000000e+00 : f32
    %446 = vector.broadcast %cst_138 : f32 to vector<8x64xf32>
    %447 = vector.extract_strided_slice %429 {offsets = [0, 0], sizes = [8, 64], strides = [1, 1]} : vector<64x64xf32> to vector<8x64xf32>
    %448 = arith.subf %447, %444 : vector<8x64xf32>
    %449 = math.exp %448 : vector<8x64xf32>
    %450 = arith.addf %445, %449 : vector<8x64xf32>
    %451 = vector.extract_strided_slice %419 {offsets = [0, 0], sizes = [8, 64], strides = [1, 1]} : vector<64x64xf32> to vector<8x64xf32>
    %452 = arith.mulf %449, %451 : vector<8x64xf32>
    %453 = arith.addf %446, %452 : vector<8x64xf32>
    %454 = vector.extract_strided_slice %429 {offsets = [8, 0], sizes = [8, 64], strides = [1, 1]} : vector<64x64xf32> to vector<8x64xf32>
    %455 = arith.subf %454, %444 : vector<8x64xf32>
    %456 = math.exp %455 : vector<8x64xf32>
    %457 = arith.addf %450, %456 : vector<8x64xf32>
    %458 = vector.extract_strided_slice %419 {offsets = [8, 0], sizes = [8, 64], strides = [1, 1]} : vector<64x64xf32> to vector<8x64xf32>
    %459 = arith.mulf %456, %458 : vector<8x64xf32>
    %460 = arith.addf %453, %459 : vector<8x64xf32>
    %461 = vector.extract_strided_slice %429 {offsets = [16, 0], sizes = [8, 64], strides = [1, 1]} : vector<64x64xf32> to vector<8x64xf32>
    %462 = arith.subf %461, %444 : vector<8x64xf32>
    %463 = math.exp %462 : vector<8x64xf32>
    %464 = arith.addf %457, %463 : vector<8x64xf32>
    %465 = vector.extract_strided_slice %419 {offsets = [16, 0], sizes = [8, 64], strides = [1, 1]} : vector<64x64xf32> to vector<8x64xf32>
    %466 = arith.mulf %463, %465 : vector<8x64xf32>
    %467 = arith.addf %460, %466 : vector<8x64xf32>
    %468 = vector.extract_strided_slice %429 {offsets = [24, 0], sizes = [8, 64], strides = [1, 1]} : vector<64x64xf32> to vector<8x64xf32>
    %469 = arith.subf %468, %444 : vector<8x64xf32>
    %470 = math.exp %469 : vector<8x64xf32>
    %471 = arith.addf %464, %470 : vector<8x64xf32>
    %472 = vector.extract_strided_slice %419 {offsets = [24, 0], sizes = [8, 64], strides = [1, 1]} : vector<64x64xf32> to vector<8x64xf32>
    %473 = arith.mulf %470, %472 : vector<8x64xf32>
    %474 = arith.addf %467, %473 : vector<8x64xf32>
    %475 = vector.extract_strided_slice %429 {offsets = [32, 0], sizes = [8, 64], strides = [1, 1]} : vector<64x64xf32> to vector<8x64xf32>
    %476 = arith.subf %475, %444 : vector<8x64xf32>
    %477 = math.exp %476 : vector<8x64xf32>
    %478 = arith.addf %471, %477 : vector<8x64xf32>
    %479 = vector.extract_strided_slice %419 {offsets = [32, 0], sizes = [8, 64], strides = [1, 1]} : vector<64x64xf32> to vector<8x64xf32>
    %480 = arith.mulf %477, %479 : vector<8x64xf32>
    %481 = arith.addf %474, %480 : vector<8x64xf32>
    %482 = vector.extract_strided_slice %429 {offsets = [40, 0], sizes = [8, 64], strides = [1, 1]} : vector<64x64xf32> to vector<8x64xf32>
    %483 = arith.subf %482, %444 : vector<8x64xf32>
    %484 = math.exp %483 : vector<8x64xf32>
    %485 = arith.addf %478, %484 : vector<8x64xf32>
    %486 = vector.extract_strided_slice %419 {offsets = [40, 0], sizes = [8, 64], strides = [1, 1]} : vector<64x64xf32> to vector<8x64xf32>
    %487 = arith.mulf %484, %486 : vector<8x64xf32>
    %488 = arith.addf %481, %487 : vector<8x64xf32>
    %489 = vector.extract_strided_slice %429 {offsets = [48, 0], sizes = [8, 64], strides = [1, 1]} : vector<64x64xf32> to vector<8x64xf32>
    %490 = arith.subf %489, %444 : vector<8x64xf32>
    %491 = math.exp %490 : vector<8x64xf32>
    %492 = arith.addf %485, %491 : vector<8x64xf32>
    %493 = vector.extract_strided_slice %419 {offsets = [48, 0], sizes = [8, 64], strides = [1, 1]} : vector<64x64xf32> to vector<8x64xf32>
    %494 = arith.mulf %491, %493 : vector<8x64xf32>
    %495 = arith.addf %488, %494 : vector<8x64xf32>
    %496 = vector.extract_strided_slice %429 {offsets = [56, 0], sizes = [8, 64], strides = [1, 1]} : vector<64x64xf32> to vector<8x64xf32>
    %497 = arith.subf %496, %444 : vector<8x64xf32>
    %498 = math.exp %497 : vector<8x64xf32>
    %499 = arith.addf %492, %498 : vector<8x64xf32>
    %500 = vector.extract_strided_slice %419 {offsets = [56, 0], sizes = [8, 64], strides = [1, 1]} : vector<64x64xf32> to vector<8x64xf32>
    %501 = arith.mulf %498, %500 : vector<8x64xf32>
    %502 = arith.addf %495, %501 : vector<8x64xf32>
    %503 = tpu.reciprocal %499 {approx = true} : vector<8x64xf32> -> vector<8x64xf32>
    %504 = arith.mulf %502, %503 : vector<8x64xf32>
    %c0_139 = arith.constant 0 : index
    %c0_140 = arith.constant 0 : index
    %505 = vector.load %arg15[%c0_139, %c0_140] : memref<64x64xf32, #tpu.memory_space<vmem>>, vector<64x64xf32>
    %cst_141 = arith.constant dense<0.000000e+00> : vector<8x64xf32>
    %506 = tpu.matmul %504, %505, %cst_141 {dimension_numbers = #tpu.dot_dimension_numbers<[1], [0], [0], [1], [0, 0, 1, 1], [], []>} : vector<8x64xf32>, vector<64x64xf32>, vector<8x64xf32> -> vector<8x64xf32>
    %c0_142 = arith.constant 0 : index
    %c0_143 = arith.constant 0 : index
    %507 = vector.load %arg16[%c0_142, %c0_143] : memref<1x64xf32, #tpu.memory_space<vmem>>, vector<1x64xf32>
    %508 = vector.broadcast %507 : vector<1x64xf32> to vector<8x64xf32>
    %509 = arith.addf %506, %508 : vector<8x64xf32>
    %c0_144 = arith.constant 0 : index
    %c0_145 = arith.constant 0 : index
    %510 = vector.load %arg18[%c0_144, %c0_145] : memref<64x512xf32, #tpu.memory_space<vmem>>, vector<64x512xf32>
    %cst_146 = arith.constant dense<0.000000e+00> : vector<8x512xf32>
    %511 = tpu.matmul %509, %510, %cst_146 {dimension_numbers = #tpu.dot_dimension_numbers<[1], [0], [0], [1], [0, 0, 1, 1], [], []>} : vector<8x64xf32>, vector<64x512xf32>, vector<8x512xf32> -> vector<8x512xf32>
    %c0_147 = arith.constant 0 : index
    %c0_148 = arith.constant 0 : index
    %512 = vector.load %arg19[%c0_147, %c0_148] : memref<1x512xf32, #tpu.memory_space<vmem>>, vector<1x512xf32>
    %513 = vector.broadcast %512 : vector<1x512xf32> to vector<8x512xf32>
    %514 = arith.addf %511, %513 : vector<8x512xf32>
    %cst_149 = arith.constant 0.000000e+00 : f32
    %515 = vector.broadcast %cst_149 : f32 to vector<8x512xf32>
    %516 = arith.maximumf %514, %515 : vector<8x512xf32>
    %c0_150 = arith.constant 0 : index
    %c0_151 = arith.constant 0 : index
    %517 = vector.load %arg20[%c0_150, %c0_151] : memref<512x128xf32, #tpu.memory_space<vmem>>, vector<512x128xf32>
    %cst_152 = arith.constant dense<0.000000e+00> : vector<8x128xf32>
    %518 = tpu.matmul %516, %517, %cst_152 {dimension_numbers = #tpu.dot_dimension_numbers<[1], [0], [0], [1], [0, 0, 1, 1], [], []>} : vector<8x512xf32>, vector<512x128xf32>, vector<8x128xf32> -> vector<8x128xf32>
    %c0_153 = arith.constant 0 : index
    %c0_154 = arith.constant 0 : index
    %519 = vector.load %arg21[%c0_153, %c0_154] : memref<1x128xf32, #tpu.memory_space<vmem>>, vector<1x128xf32>
    %520 = vector.broadcast %519 : vector<1x128xf32> to vector<8x128xf32>
    %521 = arith.addf %518, %520 : vector<8x128xf32>
    %cst_155 = arith.constant 0.000000e+00 : f32
    %522 = vector.broadcast %cst_155 : f32 to vector<8x128xf32>
    %523 = arith.maximumf %521, %522 : vector<8x128xf32>
    %c0_156 = arith.constant 0 : index
    %c0_157 = arith.constant 0 : index
    %524 = vector.load %arg22[%c0_156, %c0_157] : memref<128x1xf32, #tpu.memory_space<vmem>>, vector<128x1xf32>
    %cst_158 = arith.constant dense<0.000000e+00> : vector<8x1xf32>
    %525 = tpu.matmul %523, %524, %cst_158 {dimension_numbers = #tpu.dot_dimension_numbers<[1], [0], [0], [1], [0, 0, 1, 1], [], []>} : vector<8x128xf32>, vector<128x1xf32>, vector<8x1xf32> -> vector<8x1xf32>
    %c0_159 = arith.constant 0 : index
    %c0_160 = arith.constant 0 : index
    %526 = vector.load %arg23[%c0_159, %c0_160] : memref<1x1xf32, #tpu.memory_space<vmem>>, vector<1x1xf32>
    %527 = vector.broadcast %526 : vector<1x1xf32> to vector<8x1xf32>
    %528 = arith.addf %525, %527 : vector<8x1xf32>
    %c0_161 = arith.constant 0 : index
    %c0_162 = arith.constant 0 : index
    %529 = vector.load %arg24[%c0_161, %c0_162] : memref<8x1xf32, #tpu.memory_space<vmem>>, vector<8x1xf32>
    tpu.vector_store %arg24[%c0_161, %c0_162], %528 {strides = array<i32>} : memref<8x1xf32, #tpu.memory_space<vmem>>, vector<8x1xf32>,
    return
  }
}

</mosaic_0001>

<llo_original>
// kernel: tpu_custom_call.1
$region0: #{tpu_custom_call.1}
  #allocation0 [shape = 'u32[]', space=smem, size = 0x4, offset = 0x4, fixed_abs, tag = 'smem constant byte address 0x4 - core index']
  #allocation1 [shape = 'u32[72,128]{1,0:T(1,128)}', space=vmem, size = 0x9000, scoped, tag = 'internal scratch']
  #allocation2 [shape = 'f32[64,256]{1,0:T(8,128)}', space=vmem, size = 0x10000, scoped, tag = 'scratch operand']
  #allocation3 [shape = 'f32[64,256]{1,0:T(8,128)}', space=vmem, size = 0x10000, scoped, tag = 'scratch operand']
  #allocation4 [shape = 'f32[64,64]{1,0:T(8,128)}', space=vmem, size = 0x8000, scoped, tag = 'scratch operand']
  #allocation5 [shape = 'f32[64,64]{1,0:T(8,128)}', space=vmem, size = 0x8000, scoped, tag = 'scratch operand']
  #allocation6 [shape = 'f32[1,1]{1,0:T(1,128)S(1)}', space=vmem, size = 0x200, scoped, tag = 'scoped memory for tpu_custom_call.1']
  %s0 = inlined_call_operand.vmem [shape: f32[64,12], index: 0, kind: input, shape index: {}]
  %s1 = inlined_call_operand.vmem [shape: f32[12,32], index: 1, kind: input, shape index: {}]
  %s2 = inlined_call_operand.vmem [shape: f32[1,32], index: 2, kind: input, shape index: {}]
  %s3 = inlined_call_operand.vmem [shape: f32[32,256], index: 3, kind: input, shape index: {}]
  %s4 = inlined_call_operand.hbm [shape: f32[1,256], index: 4, kind: input, shape index: {}]
  %s5 = inlined_call_operand.vmem [shape: f32[64,256], index: 5, kind: input, shape index: {}]
  %s6 = inlined_call_operand.hbm [shape: f32[64,256], index: 6, kind: input, shape index: {}]
  %s7 = inlined_call_operand.vmem [shape: f32[1,256], index: 7, kind: input, shape index: {}]
  %s8 = inlined_call_operand.hbm [shape: f32[64,256], index: 8, kind: input, shape index: {}]
  %s9 = inlined_call_operand.hbm [shape: f32[64,64], index: 9, kind: input, shape index: {}]
  %s10 = inlined_call_operand.vmem [shape: f32[1,64], index: 10, kind: input, shape index: {}]
  %s11 = inlined_call_operand.hbm [shape: f32[64,64], index: 11, kind: input, shape index: {}]
  %s12 = inlined_call_operand.vmem [shape: f32[1,64], index: 12, kind: input, shape index: {}]
  %s13 = inlined_call_operand.hbm [shape: f32[64,64], index: 13, kind: input, shape index: {}]
  %s14 = inlined_call_operand.vmem [shape: f32[1,64], index: 14, kind: input, shape index: {}]
  %s15 = inlined_call_operand.hbm [shape: f32[64,64], index: 15, kind: input, shape index: {}]
  %s16 = inlined_call_operand.vmem [shape: f32[1,64], index: 16, kind: input, shape index: {}]
  %s17 = inlined_call_operand.hbm [shape: f32[64,64], index: 17, kind: input, shape index: {}]
  %s18 = inlined_call_operand.hbm [shape: f32[64,512], index: 18, kind: input, shape index: {}]
  %s19 = inlined_call_operand.vmem [shape: f32[1,512], index: 19, kind: input, shape index: {}]
  %s20 = inlined_call_operand.hbm [shape: f32[512,128], index: 20, kind: input, shape index: {}]
  %s21 = inlined_call_operand.vmem [shape: f32[1,128], index: 21, kind: input, shape index: {}]
  %s22 = inlined_call_operand.vmem [shape: f32[128,1], index: 22, kind: input, shape index: {}]
  %s23 = inlined_call_operand.<no memory space> [shape: f32[1,1], index: 23, kind: input, shape index: {}]
  %s24 = inlined_call_operand.vmem [shape: f32[8,1], index: 24, kind: output, shape index: {}]
  %s25 = sld [smem:[#allocation0]]
  $region146: #{tpu_custom_call.1} parent=0
    _
  %s27 = ssub.s32 1, %s25
  %s28 = scalar_select 0, %s27, %s25
  %v29 = vstv %s23
  %30 = vst [vmem:[#allocation6] sm:$0x1] %v29
  $region1: #{tpu_custom_call.1} parent=0
    #allocation7 [shape = 'u8[1024]{0}', space=vmem, size = 0x400, scoped, tag = 'input window, operand 4, single buffered']
    #allocation8 [shape = 's32[1]{0}', space=sflag, size = 0x4, scoped, tag = 'scoped memory for tpu_custom_call.1']
    #allocation9 [shape = 'u8[65536]{0}', space=vmem, size = 0x10000, scoped, tag = 'input window, operand 6, single buffered']
    #allocation10 [shape = 's32[1]{0}', space=sflag, size = 0x4, scoped, tag = 'scoped memory for tpu_custom_call.1']
    #allocation11 [shape = 'u8[65536]{0}', space=vmem, size = 0x10000, scoped, tag = 'input window, operand 8, single buffered']
    #allocation12 [shape = 'u8[32768]{0}', space=vmem, size = 0x8000, scoped, tag = 'input window, operand 9, single buffered']
    #allocation13 [shape = 's32[1]{0}', space=sflag, size = 0x4, scoped, tag = 'scoped memory for tpu_custom_call.1']
    #allocation14 [shape = 'u8[32768]{0}', space=vmem, size = 0x8000, scoped, tag = 'input window, operand 11, single buffered']
    #allocation15 [shape = 'u8[32768]{0}', space=vmem, size = 0x8000, scoped, tag = 'input window, operand 13, single buffered']
    #allocation16 [shape = 's32[1]{0}', space=sflag, size = 0x4, scoped, tag = 'scoped memory for tpu_custom_call.1']
    #allocation17 [shape = 'u8[32768]{0}', space=vmem, size = 0x8000, scoped, tag = 'input window, operand 15, single buffered']
    #allocation18 [shape = 'u8[32768]{0}', space=vmem, size = 0x8000, scoped, tag = 'input window, operand 17, single buffered']
    #allocation19 [shape = 's32[1]{0}', space=sflag, size = 0x4, scoped, tag = 'scoped memory for tpu_custom_call.1']
    #allocation20 [shape = 'u8[131072]{0}', space=vmem, size = 0x20000, scoped, tag = 'input window, operand 18, single buffered']
    #allocation21 [shape = 'u8[262144]{0}', space=vmem, size = 0x40000, scoped, tag = 'input window, operand 20, single buffered']
    #allocation22 [shape = 's32[1]{0}', space=sflag, size = 0x4, scoped, tag = 'scoped memory for tpu_custom_call.1']
    %31 = vsyncpa [#allocation8], 0
    %32 = vsyncpa [#allocation10], 0
    %33 = vsyncpa [#allocation13], 0
    %34 = vsyncpa [#allocation16], 0
    %35 = vsyncpa [#allocation19], 0
    %36 = vsyncpa [#allocation22], 0
    // Predicated region
    $region2: #{tpu_custom_call.1} parent=1 // pred_check
      _
    $region3: #{tpu_custom_call.1} parent=1 // pred_check_branch
      %38 = sbr.rel (0) target = $region5
    $region4: #{tpu_custom_call.1} parent=1 // pred_region
      _
    $region5: #{tpu_custom_call.1} parent=1 // pred_fallthru
      _
    // Predicated region
    $region6: #{tpu_custom_call.1} parent=1 // pred_check
      _
    $region7: #{tpu_custom_call.1} parent=1 // pred_check_branch
      %40 = sbr.rel (0) target = $region9
    $region8: #{tpu_custom_call.1} parent=1 // pred_region
      _
    $region9: #{tpu_custom_call.1} parent=1 // pred_fallthru
      _
    // Predicated region
    $region10: #{tpu_custom_call.1} parent=1 // pred_check
      _
    $region11: #{tpu_custom_call.1} parent=1 // pred_check_branch
      %42 = sbr.rel (0) target = $region13
    $region12: #{tpu_custom_call.1} parent=1 // pred_region
      _
    $region13: #{tpu_custom_call.1} parent=1 // pred_fallthru
      _
    // Predicated region
    $region14: #{tpu_custom_call.1} parent=1 // pred_check
      _
    $region15: #{tpu_custom_call.1} parent=1 // pred_check_branch
      %44 = sbr.rel (0) target = $region17
    $region16: #{tpu_custom_call.1} parent=1 // pred_region
      _
    $region17: #{tpu_custom_call.1} parent=1 // pred_fallthru
      _
    // Predicated region
    $region18: #{tpu_custom_call.1} parent=1 // pred_check
      _
    $region19: #{tpu_custom_call.1} parent=1 // pred_check_branch
      %46 = sbr.rel (0) target = $region21
    $region20: #{tpu_custom_call.1} parent=1 // pred_region
      %48 = vsyncadd [#allocation8], 0
      %s50 = sshll.u32 %s4, 4
      %s51 = int_to_ptr.hbm [resolvable:$true] %s50
      %s52 = sshll.u32 [#allocation7], 4
      %s53 = int_to_ptr.vmem [resolvable:$true] %s52
      %55 = dma.hbm_to_vmem [thread:$0]  %s51, 32, %s53, [#allocation8]
    $region21: #{tpu_custom_call.1} parent=1 // pred_fallthru
      _
    // Predicated region
    $region22: #{tpu_custom_call.1} parent=1 // pred_check
      _
    $region23: #{tpu_custom_call.1} parent=1 // pred_check_branch
      %57 = sbr.rel (0) target = $region25
    $region24: #{tpu_custom_call.1} parent=1 // pred_region
      _
    $region25: #{tpu_custom_call.1} parent=1 // pred_fallthru
      _
    // Predicated region
    $region26: #{tpu_custom_call.1} parent=1 // pred_check
      _
    $region27: #{tpu_custom_call.1} parent=1 // pred_check_branch
      %59 = sbr.rel (0) target = $region29
    $region28: #{tpu_custom_call.1} parent=1 // pred_region
      %61 = vsyncadd [#allocation10], 0
      %s62 = sshll.u32 %s6, 4
      %s63 = int_to_ptr.hbm [resolvable:$true] %s62
      %s64 = sshll.u32 [#allocation9], 4
      %s65 = int_to_ptr.vmem [resolvable:$true] %s64
      %70 = dma.hbm_to_vmem [thread:$0]  %s63, 2048, %s65, [#allocation10], 256, 256, 16
    $region29: #{tpu_custom_call.1} parent=1 // pred_fallthru
      _
    // Predicated region
    $region30: #{tpu_custom_call.1} parent=1 // pred_check
      _
    $region31: #{tpu_custom_call.1} parent=1 // pred_check_branch
      %72 = sbr.rel (0) target = $region33
    $region32: #{tpu_custom_call.1} parent=1 // pred_region
      _
    $region33: #{tpu_custom_call.1} parent=1 // pred_fallthru
      _
    // Predicated region
    $region34: #{tpu_custom_call.1} parent=1 // pred_check
      _
    $region35: #{tpu_custom_call.1} parent=1 // pred_check_branch
      %74 = sbr.rel (0) target = $region37
    $region36: #{tpu_custom_call.1} parent=1 // pred_region
      %76 = vsyncadd [#allocation10], 0
      %s77 = sshll.u32 %s8, 4
      %s78 = int_to_ptr.hbm [resolvable:$true] %s77
      %s79 = sshll.u32 [#allocation11], 4
      %s80 = int_to_ptr.vmem [resolvable:$true] %s79
      %85 = dma.hbm_to_vmem [thread:$0]  %s78, 2048, %s80, [#allocation10], 256, 256, 16
    $region37: #{tpu_custom_call.1} parent=1 // pred_fallthru
      _
    // Predicated region
    $region38: #{tpu_custom_call.1} parent=1 // pred_check
      _
    $region39: #{tpu_custom_call.1} parent=1 // pred_check_branch
      %87 = sbr.rel (0) target = $region41
    $region40: #{tpu_custom_call.1} parent=1 // pred_region
      %89 = vsyncadd [#allocation13], 0
      %s90 = sshll.u32 %s9, 4
      %s91 = int_to_ptr.hbm [resolvable:$true] %s90
      %s92 = sshll.u32 [#allocation12], 4
      %s93 = int_to_ptr.vmem [resolvable:$true] %s92
      %98 = dma.hbm_to_vmem [thread:$0]  %s91, 1024, %s93, [#allocation13], 128, 128, 8
    $region41: #{tpu_custom_call.1} parent=1 // pred_fallthru
      _
    // Predicated region
    $region42: #{tpu_custom_call.1} parent=1 // pred_check
      _
    $region43: #{tpu_custom_call.1} parent=1 // pred_check_branch
      %100 = sbr.rel (0) target = $region45
    $region44: #{tpu_custom_call.1} parent=1 // pred_region
      _
    $region45: #{tpu_custom_call.1} parent=1 // pred_fallthru
      _
    // Predicated region
    $region46: #{tpu_custom_call.1} parent=1 // pred_check
      _
    $region47: #{tpu_custom_call.1} parent=1 // pred_check_branch
      %102 = sbr.rel (0) target = $region49
    $region48: #{tpu_custom_call.1} parent=1 // pred_region
      %104 = vsyncadd [#allocation13], 0
      %s105 = sshll.u32 %s11, 4
      %s106 = int_to_ptr.hbm [resolvable:$true] %s105
      %s107 = sshll.u32 [#allocation14], 4
      %s108 = int_to_ptr.vmem [resolvable:$true] %s107
      %113 = dma.hbm_to_vmem [thread:$0]  %s106, 1024, %s108, [#allocation13], 128, 128, 8
    $region49: #{tpu_custom_call.1} parent=1 // pred_fallthru
      _
    // Predicated region
    $region50: #{tpu_custom_call.1} parent=1 // pred_check
      _
    $region51: #{tpu_custom_call.1} parent=1 // pred_check_branch
      %115 = sbr.rel (0) target = $region53
    $region52: #{tpu_custom_call.1} parent=1 // pred_region
      _
    $region53: #{tpu_custom_call.1} parent=1 // pred_fallthru
      _
    // Predicated region
    $region54: #{tpu_custom_call.1} parent=1 // pred_check
      _
    $region55: #{tpu_custom_call.1} parent=1 // pred_check_branch
      %117 = sbr.rel (0) target = $region57
    $region56: #{tpu_custom_call.1} parent=1 // pred_region
      %119 = vsyncadd [#allocation16], 0
      %s120 = sshll.u32 %s13, 4
      %s121 = int_to_ptr.hbm [resolvable:$true] %s120
      %s122 = sshll.u32 [#allocation15], 4
      %s123 = int_to_ptr.vmem [resolvable:$true] %s122
      %128 = dma.hbm_to_vmem [thread:$0]  %s121, 1024, %s123, [#allocation16], 128, 128, 8
    $region57: #{tpu_custom_call.1} parent=1 // pred_fallthru
      _
    // Predicated region
    $region58: #{tpu_custom_call.1} parent=1 // pred_check
      _
    $region59: #{tpu_custom_call.1} parent=1 // pred_check_branch
      %130 = sbr.rel (0) target = $region61
    $region60: #{tpu_custom_call.1} parent=1 // pred_region
      _
    $region61: #{tpu_custom_call.1} parent=1 // pred_fallthru
      _
    // Predicated region
    $region62: #{tpu_custom_call.1} parent=1 // pred_check
      _
    $region63: #{tpu_custom_call.1} parent=1 // pred_check_branch
      %132 = sbr.rel (0) target = $region65
    $region64: #{tpu_custom_call.1} parent=1 // pred_region
      %134 = vsyncadd [#allocation16], 0
      %s135 = sshll.u32 %s15, 4
      %s136 = int_to_ptr.hbm [resolvable:$true] %s135
      %s137 = sshll.u32 [#allocation17], 4
      %s138 = int_to_ptr.vmem [resolvable:$true] %s137
      %143 = dma.hbm_to_vmem [thread:$0]  %s136, 1024, %s138, [#allocation16], 128, 128, 8
    $region65: #{tpu_custom_call.1} parent=1 // pred_fallthru
      _
    // Predicated region
    $region66: #{tpu_custom_call.1} parent=1 // pred_check
      _
    $region67: #{tpu_custom_call.1} parent=1 // pred_check_branch
      %145 = sbr.rel (0) target = $region69
    $region68: #{tpu_custom_call.1} parent=1 // pred_region
      _
    $region69: #{tpu_custom_call.1} parent=1 // pred_fallthru
      _
    // Predicated region
    $region70: #{tpu_custom_call.1} parent=1 // pred_check
      _
    $region71: #{tpu_custom_call.1} parent=1 // pred_check_branch
      %147 = sbr.rel (0) target = $region73
    $region72: #{tpu_custom_call.1} parent=1 // pred_region
      %149 = vsyncadd [#allocation19], 0
      %s150 = sshll.u32 %s17, 4
      %s151 = int_to_ptr.hbm [resolvable:$true] %s150
      %s152 = sshll.u32 [#allocation18], 4
      %s153 = int_to_ptr.vmem [resolvable:$true] %s152
      %158 = dma.hbm_to_vmem [thread:$0]  %s151, 1024, %s153, [#allocation19], 128, 128, 8
    $region73: #{tpu_custom_call.1} parent=1 // pred_fallthru
      _
    // Predicated region
    $region74: #{tpu_custom_call.1} parent=1 // pred_check
      _
    $region75: #{tpu_custom_call.1} parent=1 // pred_check_branch
      %160 = sbr.rel (0) target = $region77
    $region76: #{tpu_custom_call.1} parent=1 // pred_region
      %162 = vsyncadd [#allocation19], 0
      %s163 = sshll.u32 %s18, 4
      %s164 = int_to_ptr.hbm [resolvable:$true] %s163
      %s165 = sshll.u32 [#allocation20], 4
      %s166 = int_to_ptr.vmem [resolvable:$true] %s165
      %171 = dma.hbm_to_vmem [thread:$0]  %s164, 4096, %s166, [#allocation19], 512, 512, 32
    $region77: #{tpu_custom_call.1} parent=1 // pred_fallthru
      _
    // Predicated region
    $region78: #{tpu_custom_call.1} parent=1 // pred_check
      _
    $region79: #{tpu_custom_call.1} parent=1 // pred_check_branch
      %173 = sbr.rel (0) target = $region81
    $region80: #{tpu_custom_call.1} parent=1 // pred_region
      _
    $region81: #{tpu_custom_call.1} parent=1 // pred_fallthru
      _
    // Predicated region
    $region82: #{tpu_custom_call.1} parent=1 // pred_check
      _
    $region83: #{tpu_custom_call.1} parent=1 // pred_check_branch
      %175 = sbr.rel (0) target = $region85
    $region84: #{tpu_custom_call.1} parent=1 // pred_region
      %177 = vsyncadd [#allocation22], 0
      %s178 = sshll.u32 %s20, 4
      %s179 = int_to_ptr.hbm [resolvable:$true] %s178
      %s180 = sshll.u32 [#allocation21], 4
      %s181 = int_to_ptr.vmem [resolvable:$true] %s180
      %186 = dma.hbm_to_vmem [thread:$0]  %s179, 8192, %s181, [#allocation22], 128, 128, 8
    $region85: #{tpu_custom_call.1} parent=1 // pred_fallthru
      _
    // Predicated region
    $region86: #{tpu_custom_call.1} parent=1 // pred_check
      _
    $region87: #{tpu_custom_call.1} parent=1 // pred_check_branch
      %188 = sbr.rel (0) target = $region89
    $region88: #{tpu_custom_call.1} parent=1 // pred_region
      _
    $region89: #{tpu_custom_call.1} parent=1 // pred_fallthru
      _
    // Predicated region
    $region90: #{tpu_custom_call.1} parent=1 // pred_check
      _
    $region91: #{tpu_custom_call.1} parent=1 // pred_check_branch
      %190 = sbr.rel (0) target = $region93
    $region92: #{tpu_custom_call.1} parent=1 // pred_region
      _
    $region93: #{tpu_custom_call.1} parent=1 // pred_fallthru
      _
    // Predicated region
    $region94: #{tpu_custom_call.1} parent=1 // pred_check
      _
    $region95: #{tpu_custom_call.1} parent=1 // pred_check_branch
      %192 = sbr.rel (0) target = $region97
    $region96: #{tpu_custom_call.1} parent=1 // pred_region
      _
    $region97: #{tpu_custom_call.1} parent=1 // pred_fallthru
      _
    // Predicated region
    $region98: #{tpu_custom_call.1} parent=1 // pred_check
      _
    $region99: #{tpu_custom_call.1} parent=1 // pred_check_branch
      %194 = sbr.rel (0) target = $region101
    $region100: #{tpu_custom_call.1} parent=1 // pred_region
      %196 = dma.done [#allocation8], 32
    $region101: #{tpu_custom_call.1} parent=1 // pred_fallthru
      _
    // Predicated region
    $region102: #{tpu_custom_call.1} parent=1 // pred_check
      _
    $region103: #{tpu_custom_call.1} parent=1 // pred_check_branch
      %198 = sbr.rel (0) target = $region105
    $region104: #{tpu_custom_call.1} parent=1 // pred_region
      %200 = dma.done [#allocation10], 2048
    $region105: #{tpu_custom_call.1} parent=1 // pred_fallthru
      _
    // Predicated region
    $region106: #{tpu_custom_call.1} parent=1 // pred_check
      _
    $region107: #{tpu_custom_call.1} parent=1 // pred_check_branch
      %202 = sbr.rel (0) target = $region109
    $region108: #{tpu_custom_call.1} parent=1 // pred_region
      %204 = dma.done [#allocation10], 2048
    $region109: #{tpu_custom_call.1} parent=1 // pred_fallthru
      _
    // Predicated region
    $region110: #{tpu_custom_call.1} parent=1 // pred_check
      _
    $region111: #{tpu_custom_call.1} parent=1 // pred_check_branch
      %206 = sbr.rel (0) target = $region113
    $region112: #{tpu_custom_call.1} parent=1 // pred_region
      %208 = dma.done [#allocation13], 1024
    $region113: #{tpu_custom_call.1} parent=1 // pred_fallthru
      _
    // Predicated region
    $region114: #{tpu_custom_call.1} parent=1 // pred_check
      _
    $region115: #{tpu_custom_call.1} parent=1 // pred_check_branch
      %210 = sbr.rel (0) target = $region117
    $region116: #{tpu_custom_call.1} parent=1 // pred_region
      %212 = dma.done [#allocation13], 1024
    $region117: #{tpu_custom_call.1} parent=1 // pred_fallthru
      _
    // Predicated region
    $region118: #{tpu_custom_call.1} parent=1 // pred_check
      _
    $region119: #{tpu_custom_call.1} parent=1 // pred_check_branch
      %214 = sbr.rel (0) target = $region121
    $region120: #{tpu_custom_call.1} parent=1 // pred_region
      %216 = dma.done [#allocation16], 1024
    $region121: #{tpu_custom_call.1} parent=1 // pred_fallthru
      _
    // Predicated region
    $region122: #{tpu_custom_call.1} parent=1 // pred_check
      _
    $region123: #{tpu_custom_call.1} parent=1 // pred_check_branch
      %218 = sbr.rel (0) target = $region125
    $region124: #{tpu_custom_call.1} parent=1 // pred_region
      %220 = dma.done [#allocation16], 1024
    $region125: #{tpu_custom_call.1} parent=1 // pred_fallthru
      _
    // Predicated region
    $region126: #{tpu_custom_call.1} parent=1 // pred_check
      _
    $region127: #{tpu_custom_call.1} parent=1 // pred_check_branch
      %222 = sbr.rel (0) target = $region129
    $region128: #{tpu_custom_call.1} parent=1 // pred_region
      %224 = dma.done [#allocation19], 1024
    $region129: #{tpu_custom_call.1} parent=1 // pred_fallthru
      _
    // Predicated region
    $region130: #{tpu_custom_call.1} parent=1 // pred_check
      _
    $region131: #{tpu_custom_call.1} parent=1 // pred_check_branch
      %226 = sbr.rel (0) target = $region133
    $region132: #{tpu_custom_call.1} parent=1 // pred_region
      %228 = dma.done [#allocation19], 4096
    $region133: #{tpu_custom_call.1} parent=1 // pred_fallthru
      _
    // Predicated region
    $region134: #{tpu_custom_call.1} parent=1 // pred_check
      _
    $region135: #{tpu_custom_call.1} parent=1 // pred_check_branch
      %230 = sbr.rel (0) target = $region137
    $region136: #{tpu_custom_call.1} parent=1 // pred_region
      %232 = dma.done [#allocation22], 8192
    $region137: #{tpu_custom_call.1} parent=1 // pred_fallthru
      _
    %v233 = vld [vmem:[%s0] sm:$0xff]
    %v234 = vld [vmem:[%s0 + $0x8] sm:$0xff]
    %v235 = vld [vmem:[%s0 + $0x10] sm:$0xff]
    %v236 = vld [vmem:[%s0 + $0x18] sm:$0xff]
    %v237 = vld [vmem:[%s0 + $0x20] sm:$0xff]
    %v238 = vld [vmem:[%s0 + $0x28] sm:$0xff]
    %v239 = vld [vmem:[%s0 + $0x30] sm:$0xff]
    %v240 = vld [vmem:[%s0 + $0x38] sm:$0xff]
    %v241 = vld [vmem:[%s1] sm:$0xff]
    %v242 = vld [vmem:[%s1 + $0x8] sm:$0xf]
    %v243 = vld [vmem:[%s2] sm:$0x1]
    %v245 = vperm.slane %v243, 0
    %vm247 = vcmask 97280
    %v249 = vsel %vm247, %v233, 0
    %v252 = vsel %vm247, %v234, 0
    %v255 = vsel %vm247, %v235, 0
    %v258 = vsel %vm247, %v236, 0
    %v261 = vsel %vm247, %v237, 0
    %v264 = vsel %vm247, %v238, 0
    %v267 = vsel %vm247, %v239, 0
    %v270 = vsel %vm247, %v240, 0
    %vm272 = vcmask 1043456
    %v274 = vsel %vm272, %v242, 0
    %276 = vmatpush.msra.mxu0 0.0
    %277 = vmatpush.msra.mxu0 0.0
    %278 = vmatpush.msra.mxu0 0.0
    %279 = vmatpush.msra.mxu0 0.0
    %280 = vmatpush.msra.mxu0 0.0
    %281 = vmatpush.msra.mxu0 0.0
    %282 = vmatpush.msra.mxu0 0.0
    %283 = vmatpush.msra.mxu0 0.0
    %284 = vmatpush.msra.mxu0 0.0
    %285 = vmatpush.msra.mxu0 0.0
    %286 = vmatpush.msra.mxu0 0.0
    %287 = vmatpush.msra.mxu0 0.0
    %288 = vmatpush.msra.mxu0 0.0
    %289 = vmatpush.msra.mxu0 0.0
    %290 = vmatpush.msra.mxu0 %v274
    %291 = vmatpush.msra.mxu0 %v241
    %292 = vmatmul.f32.gmra.mxu0 %v249
    %v293 = vpop.f32.mrf.mxu0
    %v294 = vadd.f32 %v245, %v293
    %295 = vmatmul.f32.gmra.mxu0 %v252
    %v296 = vpop.f32.mrf.mxu0
    %v297 = vadd.f32 %v245, %v296
    %298 = vmatmul.f32.gmra.mxu0 %v255
    %v299 = vpop.f32.mrf.mxu0
    %v300 = vadd.f32 %v245, %v299
    %301 = vmatmul.f32.gmra.mxu0 %v258
    %v302 = vpop.f32.mrf.mxu0
    %v303 = vadd.f32 %v245, %v302
    %304 = vmatmul.f32.gmra.mxu0 %v261
    %v305 = vpop.f32.mrf.mxu0
    %v306 = vadd.f32 %v245, %v305
    %307 = vmatmul.f32.gmra.mxu0 %v264
    %v308 = vpop.f32.mrf.mxu0
    %v309 = vadd.f32 %v245, %v308
    %310 = vmatmul.f32.gmra.mxu0 %v267
    %v311 = vpop.f32.mrf.mxu0
    %v312 = vadd.f32 %v245, %v311
    %313 = vmatmul.f32.gmra.mxu0 %v270
    %v314 = vpop.f32.mrf.mxu0
    %v315 = vadd.f32 %v245, %v314
    %316 = vdwg.mxu0
    %v317 = vmax.f32 %v294, 0.0
    %v318 = vmax.f32 %v297, 0.0
    %v319 = vmax.f32 %v300, 0.0
    %v320 = vmax.f32 %v303, 0.0
    %v321 = vmax.f32 %v306, 0.0
    %v322 = vmax.f32 %v309, 0.0
    %v323 = vmax.f32 %v312, 0.0
    %v324 = vmax.f32 %v315, 0.0
    %v325 = vld [vmem:[%s3] sm:$0xff]
    %v326 = vld [vmem:[%s3 + $0x8] sm:$0xff]
    %v327 = vld [vmem:[%s3 + $0x10] sm:$0xff]
    %v328 = vld [vmem:[%s3 + $0x18] sm:$0xff]
    %v329 = vld [vmem:[%s3 + $0x20] sm:$0xff]
    %v330 = vld [vmem:[%s3 + $0x28] sm:$0xff]
    %v331 = vld [vmem:[%s3 + $0x30] sm:$0xff]
    %v332 = vld [vmem:[%s3 + $0x38] sm:$0xff]
    %v333 = vld [vmem:[#allocation7] sm:$0x3]
    %v335 = vperm.slane %v333, 0
    %v336 = vperm.slane %v333, 1
    %vm339 = vcmask 261120
    %v341 = vsel %vm339, %v317, 0
    %v344 = vsel %vm339, %v318, 0
    %v347 = vsel %vm339, %v319, 0
    %v350 = vsel %vm339, %v320, 0
    %v353 = vsel %vm339, %v321, 0
    %v356 = vsel %vm339, %v322, 0
    %v359 = vsel %vm339, %v323, 0
    %v362 = vsel %vm339, %v324, 0
    %364 = vmatpush.msra.mxu0 0.0
    %365 = vmatpush.msra.mxu0 0.0
    %366 = vmatpush.msra.mxu0 0.0
    %367 = vmatpush.msra.mxu0 0.0
    %368 = vmatpush.msra.mxu0 0.0
    %369 = vmatpush.msra.mxu0 0.0
    %370 = vmatpush.msra.mxu0 0.0
    %371 = vmatpush.msra.mxu0 0.0
    %372 = vmatpush.msra.mxu0 0.0
    %373 = vmatpush.msra.mxu0 0.0
    %374 = vmatpush.msra.mxu0 0.0
    %375 = vmatpush.msra.mxu0 0.0
    %376 = vmatpush.msra.mxu0 %v331
    %377 = vmatpush.msra.mxu0 %v329
    %378 = vmatpush.msra.mxu0 %v327
    %379 = vmatpush.msra.mxu0 %v325
    %380 = vmatmul.f32.gmra.mxu0 %v341
    %v381 = vpop.f32.mrf.mxu0
    %v382 = vadd.f32 %v335, %v381
    %383 = vmatmul.f32.gmra.mxu0 %v344
    %v384 = vpop.f32.mrf.mxu0
    %v385 = vadd.f32 %v335, %v384
    %386 = vmatmul.f32.gmra.mxu0 %v347
    %v387 = vpop.f32.mrf.mxu0
    %v388 = vadd.f32 %v335, %v387
    %389 = vmatmul.f32.gmra.mxu0 %v350
    %v390 = vpop.f32.mrf.mxu0
    %v391 = vadd.f32 %v335, %v390
    %392 = vmatmul.f32.gmra.mxu0 %v353
    %v393 = vpop.f32.mrf.mxu0
    %v394 = vadd.f32 %v335, %v393
    %395 = vmatmul.f32.gmra.mxu0 %v356
    %v396 = vpop.f32.mrf.mxu0
    %v397 = vadd.f32 %v335, %v396
    %398 = vmatmul.f32.gmra.mxu0 %v359
    %v399 = vpop.f32.mrf.mxu0
    %v400 = vadd.f32 %v335, %v399
    %401 = vmatmul.f32.gmra.mxu0 %v362
    %v402 = vpop.f32.mrf.mxu0
    %v403 = vadd.f32 %v335, %v402
    %404 = vdwg.mxu0
    %405 = vmatpush.msra.mxu0 0.0
    %406 = vmatpush.msra.mxu0 0.0
    %407 = vmatpush.msra.mxu0 0.0
    %408 = vmatpush.msra.mxu0 0.0
    %409 = vmatpush.msra.mxu0 0.0
    %410 = vmatpush.msra.mxu0 0.0
    %411 = vmatpush.msra.mxu0 0.0
    %412 = vmatpush.msra.mxu0 0.0
    %413 = vmatpush.msra.mxu0 0.0
    %414 = vmatpush.msra.mxu0 0.0
    %415 = vmatpush.msra.mxu0 0.0
    %416 = vmatpush.msra.mxu0 0.0
    %417 = vmatpush.msra.mxu0 %v332
    %418 = vmatpush.msra.mxu0 %v330
    %419 = vmatpush.msra.mxu0 %v328
    %420 = vmatpush.msra.mxu0 %v326
    %421 = vmatmul.f32.gmra.mxu0 %v341
    %v422 = vpop.f32.mrf.mxu0
    %v423 = vadd.f32 %v336, %v422
    %424 = vmatmul.f32.gmra.mxu0 %v344
    %v425 = vpop.f32.mrf.mxu0
    %v426 = vadd.f32 %v336, %v425
    %427 = vmatmul.f32.gmra.mxu0 %v347
    %v428 = vpop.f32.mrf.mxu0
    %v429 = vadd.f32 %v336, %v428
    %430 = vmatmul.f32.gmra.mxu0 %v350
    %v431 = vpop.f32.mrf.mxu0
    %v432 = vadd.f32 %v336, %v431
    %433 = vmatmul.f32.gmra.mxu0 %v353
    %v434 = vpop.f32.mrf.mxu0
    %v435 = vadd.f32 %v336, %v434
    %436 = vmatmul.f32.gmra.mxu0 %v356
    %v437 = vpop.f32.mrf.mxu0
    %v438 = vadd.f32 %v336, %v437
    %439 = vmatmul.f32.gmra.mxu0 %v359
    %v440 = vpop.f32.mrf.mxu0
    %v441 = vadd.f32 %v336, %v440
    %442 = vmatmul.f32.gmra.mxu0 %v362
    %v443 = vpop.f32.mrf.mxu0
    %v444 = vadd.f32 %v336, %v443
    %445 = vdwg.mxu0
    %446 = vst [vmem:[#allocation2] sm:$0xff] %v382
    %447 = vst [vmem:[#allocation2 + $0x8] sm:$0xff] %v423
    %448 = vst [vmem:[#allocation2 + $0x10] sm:$0xff] %v385
    %449 = vst [vmem:[#allocation2 + $0x18] sm:$0xff] %v426
    %450 = vst [vmem:[#allocation2 + $0x20] sm:$0xff] %v388
    %451 = vst [vmem:[#allocation2 + $0x28] sm:$0xff] %v429
    %452 = vst [vmem:[#allocation2 + $0x30] sm:$0xff] %v391
    %453 = vst [vmem:[#allocation2 + $0x38] sm:$0xff] %v432
    %454 = vst [vmem:[#allocation2 + $0x40] sm:$0xff] %v394
    %455 = vst [vmem:[#allocation2 + $0x48] sm:$0xff] %v435
    %456 = vst [vmem:[#allocation2 + $0x50] sm:$0xff] %v397
    %457 = vst [vmem:[#allocation2 + $0x58] sm:$0xff] %v438
    %458 = vst [vmem:[#allocation2 + $0x60] sm:$0xff] %v400
    %459 = vst [vmem:[#allocation2 + $0x68] sm:$0xff] %v441
    %460 = vst [vmem:[#allocation2 + $0x70] sm:$0xff] %v403
    %461 = vst [vmem:[#allocation2 + $0x78] sm:$0xff] %v444
    %v462 = vld [vmem:[%s5] sm:$0xff]
    %v463 = vld [vmem:[%s5 + $0x8] sm:$0xff]
    %v464 = vld [vmem:[%s5 + $0x10] sm:$0xff]
    %v465 = vld [vmem:[%s5 + $0x18] sm:$0xff]
    %v466 = vld [vmem:[%s5 + $0x20] sm:$0xff]
    %v467 = vld [vmem:[%s5 + $0x28] sm:$0xff]
    %v468 = vld [vmem:[%s5 + $0x30] sm:$0xff]
    %v469 = vld [vmem:[%s5 + $0x38] sm:$0xff]
    %v470 = vld [vmem:[%s5 + $0x40] sm:$0xff]
    %v471 = vld [vmem:[%s5 + $0x48] sm:$0xff]
    %v472 = vld [vmem:[%s5 + $0x50] sm:$0xff]
    %v473 = vld [vmem:[%s5 + $0x58] sm:$0xff]
    %v474 = vld [vmem:[%s5 + $0x60] sm:$0xff]
    %v475 = vld [vmem:[%s5 + $0x68] sm:$0xff]
    %v476 = vld [vmem:[%s5 + $0x70] sm:$0xff]
    %v477 = vld [vmem:[%s5 + $0x78] sm:$0xff]
    %s478 = smul.u32 0, 2
    %s479 = smul.addr %s478, 8
    %s480 = scalar_lea.vmem [#allocation2], %s479
    %v481 = vld [vmem:[%s480] sm:$0xff]
    %v482 = vld [vmem:[%s480 + $0x8] sm:$0xff]
    %vm483 = vcmask 523264
    %v485 = vsel %vm483, 0.0, 0
    %487 = vmatpush.msra.mxu0 0.0
    %488 = vmatpush.msra.mxu0 0.0
    %489 = vmatpush.msra.mxu0 0.0
    %490 = vmatpush.msra.mxu0 0.0
    %491 = vmatpush.msra.mxu0 0.0
    %492 = vmatpush.msra.mxu0 0.0
    %493 = vmatpush.msra.mxu0 0.0
    %494 = vmatpush.msra.mxu0 0.0
    %495 = vmatpush.msra.mxu0 %v476
    %496 = vmatpush.msra.mxu0 %v474
    %497 = vmatpush.msra.mxu0 %v472
    %498 = vmatpush.msra.mxu0 %v470
    %499 = vmatpush.msra.mxu0 %v468
    %500 = vmatpush.msra.mxu0 %v466
    %501 = vmatpush.msra.mxu0 %v464
    %502 = vmatpush.msra.mxu0 %v462
    %503 = vmatmul.f32.gmra.mxu0 %v485
    %v504 = vpop.f32.mrf.mxu0
    %v505 = vadd.f32 0.0, %v504
    %506 = vdwg.mxu0
    %507 = vmatpush.msra.mxu0 0.0
    %508 = vmatpush.msra.mxu0 0.0
    %509 = vmatpush.msra.mxu0 0.0
    %510 = vmatpush.msra.mxu0 0.0
    %511 = vmatpush.msra.mxu0 0.0
    %512 = vmatpush.msra.mxu0 0.0
    %513 = vmatpush.msra.mxu0 0.0
    %514 = vmatpush.msra.mxu0 0.0
    %515 = vmatpush.msra.mxu0 %v477
    %516 = vmatpush.msra.mxu0 %v475
    %517 = vmatpush.msra.mxu0 %v473
    %518 = vmatpush.msra.mxu0 %v471
    %519 = vmatpush.msra.mxu0 %v469
    %520 = vmatpush.msra.mxu0 %v467
    %521 = vmatpush.msra.mxu0 %v465
    %522 = vmatpush.msra.mxu0 %v463
    %523 = vmatmul.f32.gmra.mxu0 %v485
    %v524 = vpop.f32.mrf.mxu0
    %v525 = vadd.f32 0.0, %v524
    %526 = vdwg.mxu0
    %v527 = vadd.f32 %v481, %v505
    %v528 = vadd.f32 %v482, %v525
    %v529 = vxor.u32 %v527, 2147483648
    %v530 = vxor.u32 %v528, 2147483648
    %v531 = vmul.f32 %v529, 1.442695
    %v532 = vpow.pop %v531
    %v533 = vmul.f32 %v530, 1.442695
    %v534 = vpow.pop %v533
    %v535 = vadd.f32 %v532, 1.0
    %v536 = vadd.f32 %v534, 1.0
    %v537 = vrcp.pop %v535
    %v538 = vmul.f32 %v535, %v537
    %v539 = vsub.f32 1.0, %v538
    %v540 = vmul.f32 %v537, %v539
    %v541 = vadd.f32 %v537, %v540
    %vm542 = vweird.f32 %v535
    %vm543 = vweird.f32 %v537
    %vm544 = vmor %vm542, %vm543
    %v545 = vsel %vm544, %v537, %v541
    %v546 = vand.u32 2147483647, %v535
    %vm547 = vcmp.eq.f32.partialorder %v546, 8.507059e+37
    %v548 = vand.u32 %v535, 2147483648
    %v549 = vor.u32 1.1754944e-38, %v548
    %v550 = vsel %vm547, %v549, %v545
    %v551 = vmul.f32 1.0, %v550
    %v552 = vrcp.pop %v536
    %v553 = vmul.f32 %v536, %v552
    %v554 = vsub.f32 1.0, %v553
    %v555 = vmul.f32 %v552, %v554
    %v556 = vadd.f32 %v552, %v555
    %vm557 = vweird.f32 %v536
    %vm558 = vweird.f32 %v552
    %vm559 = vmor %vm557, %vm558
    %v560 = vsel %vm559, %v552, %v556
    %v561 = vand.u32 2147483647, %v536
    %vm562 = vcmp.eq.f32.partialorder %v561, 8.507059e+37
    %v563 = vand.u32 %v536, 2147483648
    %v564 = vor.u32 1.1754944e-38, %v563
    %v565 = vsel %vm562, %v564, %v560
    %v566 = vmul.f32 1.0, %v565
    %v567 = vtanh.pop %v528
    %v568 = vmul.f32 %v551, 0.0
    %570 = vrot.lane.b32.xlu0 %v567, 64
    %v571 = vpop.permute.xlu0 %570
    %v573 = vmul.f32 %v551, %v571
    %575 = vrot.lane.b32.xlu0 %v573, 64
    %v576 = vpop.permute.xlu0 %575
    %v578 = vadd.f32 %v568, %v576
    %v579 = vtanh.pop %v578
    %581 = vrot.lane.b32.xlu0 %v579, 64
    %v582 = vpop.permute.xlu0 %581
    %v584 = vmul.f32 %v566, %v582
    %585 = vst.msk [vmem:[#allocation4] sm:$0xff] %vm483, %v584
    %s586 = smul.u32 1, 2
    %s587 = smul.addr %s586, 8
    %s588 = scalar_lea.vmem [#allocation2], %s587
    %v589 = vld [vmem:[%s588] sm:$0xff]
    %v590 = vld [vmem:[%s588 + $0x8] sm:$0xff]
    %v592 = vsel %vm483, %v584, 0
    %594 = vmatpush.msra.mxu0 0.0
    %595 = vmatpush.msra.mxu0 0.0
    %596 = vmatpush.msra.mxu0 0.0
    %597 = vmatpush.msra.mxu0 0.0
    %598 = vmatpush.msra.mxu0 0.0
    %599 = vmatpush.msra.mxu0 0.0
    %600 = vmatpush.msra.mxu0 0.0
    %601 = vmatpush.msra.mxu0 0.0
    %602 = vmatpush.msra.mxu0 %v476
    %603 = vmatpush.msra.mxu0 %v474
    %604 = vmatpush.msra.mxu0 %v472
    %605 = vmatpush.msra.mxu0 %v470
    %606 = vmatpush.msra.mxu0 %v468
    %607 = vmatpush.msra.mxu0 %v466
    %608 = vmatpush.msra.mxu0 %v464
    %609 = vmatpush.msra.mxu0 %v462
    %610 = vmatmul.f32.gmra.mxu0 %v592
    %v611 = vpop.f32.mrf.mxu0
    %v612 = vadd.f32 0.0, %v611
    %613 = vdwg.mxu0
    %614 = vmatpush.msra.mxu0 0.0
    %615 = vmatpush.msra.mxu0 0.0
    %616 = vmatpush.msra.mxu0 0.0
    %617 = vmatpush.msra.mxu0 0.0
    %618 = vmatpush.msra.mxu0 0.0
    %619 = vmatpush.msra.mxu0 0.0
    %620 = vmatpush.msra.mxu0 0.0
    %621 = vmatpush.msra.mxu0 0.0
    %622 = vmatpush.msra.mxu0 %v477
    %623 = vmatpush.msra.mxu0 %v475
    %624 = vmatpush.msra.mxu0 %v473
    %625 = vmatpush.msra.mxu0 %v471
    %626 = vmatpush.msra.mxu0 %v469
    %627 = vmatpush.msra.mxu0 %v467
    %628 = vmatpush.msra.mxu0 %v465
    %629 = vmatpush.msra.mxu0 %v463
    %630 = vmatmul.f32.gmra.mxu0 %v592
    %v631 = vpop.f32.mrf.mxu0
    %v632 = vadd.f32 0.0, %v631
    %633 = vdwg.mxu0
    %v634 = vadd.f32 %v589, %v612
    %v635 = vadd.f32 %v590, %v632
    %v636 = vxor.u32 %v634, 2147483648
    %v637 = vxor.u32 %v635, 2147483648
    %v638 = vmul.f32 %v636, 1.442695
    %v639 = vpow.pop %v638
    %v640 = vmul.f32 %v637, 1.442695
    %v641 = vpow.pop %v640
    %v642 = vadd.f32 %v639, 1.0
    %v643 = vadd.f32 %v641, 1.0
    %v644 = vrcp.pop %v642
    %v645 = vmul.f32 %v642, %v644
    %v646 = vsub.f32 1.0, %v645
    %v647 = vmul.f32 %v644, %v646
    %v648 = vadd.f32 %v644, %v647
    %vm649 = vweird.f32 %v642
    %vm650 = vweird.f32 %v644
    %vm651 = vmor %vm649, %vm650
    %v652 = vsel %vm651, %v644, %v648
    %v653 = vand.u32 2147483647, %v642
    %vm654 = vcmp.eq.f32.partialorder %v653, 8.507059e+37
    %v655 = vand.u32 %v642, 2147483648
    %v656 = vor.u32 1.1754944e-38, %v655
    %v657 = vsel %vm654, %v656, %v652
    %v658 = vmul.f32 1.0, %v657
    %v659 = vrcp.pop %v643
    %v660 = vmul.f32 %v643, %v659
    %v661 = vsub.f32 1.0, %v660
    %v662 = vmul.f32 %v659, %v661
    %v663 = vadd.f32 %v659, %v662
    %vm664 = vweird.f32 %v643
    %vm665 = vweird.f32 %v659
    %vm666 = vmor %vm664, %vm665
    %v667 = vsel %vm666, %v659, %v663
    %v668 = vand.u32 2147483647, %v643
    %vm669 = vcmp.eq.f32.partialorder %v668, 8.507059e+37
    %v670 = vand.u32 %v643, 2147483648
    %v671 = vor.u32 1.1754944e-38, %v670
    %v672 = vsel %vm669, %v671, %v667
    %v673 = vmul.f32 1.0, %v672
    %v674 = vtanh.pop %v635
    %v675 = vmul.f32 %v658, %v578
    %677 = vrot.lane.b32.xlu0 %v674, 64
    %v678 = vpop.permute.xlu0 %677
    %v680 = vmul.f32 %v658, %v678
    %682 = vrot.lane.b32.xlu0 %v680, 64
    %v683 = vpop.permute.xlu0 %682
    %v685 = vadd.f32 %v675, %v683
    %v686 = vtanh.pop %v685
    %688 = vrot.lane.b32.xlu0 %v686, 64
    %v689 = vpop.permute.xlu0 %688
    %v691 = vmul.f32 %v673, %v689
    %s692 = scalar_lea.vmem [#allocation4], 8
    %693 = vst.msk [vmem:[%s692] sm:$0xff] %vm483, %v691
    %s694 = smul.u32 2, 2
    %s695 = smul.addr %s694, 8
    %s696 = scalar_lea.vmem [#allocation2], %s695
    %v697 = vld [vmem:[%s696] sm:$0xff]
    %v698 = vld [vmem:[%s696 + $0x8] sm:$0xff]
    %v700 = vsel %vm483, %v691, 0
    %702 = vmatpush.msra.mxu0 0.0
    %703 = vmatpush.msra.mxu0 0.0
    %704 = vmatpush.msra.mxu0 0.0
    %705 = vmatpush.msra.mxu0 0.0
    %706 = vmatpush.msra.mxu0 0.0
    %707 = vmatpush.msra.mxu0 0.0
    %708 = vmatpush.msra.mxu0 0.0
    %709 = vmatpush.msra.mxu0 0.0
    %710 = vmatpush.msra.mxu0 %v476
    %711 = vmatpush.msra.mxu0 %v474
    %712 = vmatpush.msra.mxu0 %v472
    %713 = vmatpush.msra.mxu0 %v470
    %714 = vmatpush.msra.mxu0 %v468
    %715 = vmatpush.msra.mxu0 %v466
    %716 = vmatpush.msra.mxu0 %v464
    %717 = vmatpush.msra.mxu0 %v462
    %718 = vmatmul.f32.gmra.mxu0 %v700
    %v719 = vpop.f32.mrf.mxu0
    %v720 = vadd.f32 0.0, %v719
    %721 = vdwg.mxu0
    %722 = vmatpush.msra.mxu0 0.0
    %723 = vmatpush.msra.mxu0 0.0
    %724 = vmatpush.msra.mxu0 0.0
    %725 = vmatpush.msra.mxu0 0.0
    %726 = vmatpush.msra.mxu0 0.0
    %727 = vmatpush.msra.mxu0 0.0
    %728 = vmatpush.msra.mxu0 0.0
    %729 = vmatpush.msra.mxu0 0.0
    %730 = vmatpush.msra.mxu0 %v477
    %731 = vmatpush.msra.mxu0 %v475
    %732 = vmatpush.msra.mxu0 %v473
    %733 = vmatpush.msra.mxu0 %v471
    %734 = vmatpush.msra.mxu0 %v469
    %735 = vmatpush.msra.mxu0 %v467
    %736 = vmatpush.msra.mxu0 %v465
    %737 = vmatpush.msra.mxu0 %v463
    %738 = vmatmul.f32.gmra.mxu0 %v700
    %v739 = vpop.f32.mrf.mxu0
    %v740 = vadd.f32 0.0, %v739
    %741 = vdwg.mxu0
    %v742 = vadd.f32 %v697, %v720
    %v743 = vadd.f32 %v698, %v740
    %v744 = vxor.u32 %v742, 2147483648
    %v745 = vxor.u32 %v743, 2147483648
    %v746 = vmul.f32 %v744, 1.442695
    %v747 = vpow.pop %v746
    %v748 = vmul.f32 %v745, 1.442695
    %v749 = vpow.pop %v748
    %v750 = vadd.f32 %v747, 1.0
    %v751 = vadd.f32 %v749, 1.0
    %v752 = vrcp.pop %v750
    %v753 = vmul.f32 %v750, %v752
    %v754 = vsub.f32 1.0, %v753
    %v755 = vmul.f32 %v752, %v754
    %v756 = vadd.f32 %v752, %v755
    %vm757 = vweird.f32 %v750
    %vm758 = vweird.f32 %v752
    %vm759 = vmor %vm757, %vm758
    %v760 = vsel %vm759, %v752, %v756
    %v761 = vand.u32 2147483647, %v750
    %vm762 = vcmp.eq.f32.partialorder %v761, 8.507059e+37
    %v763 = vand.u32 %v750, 2147483648
    %v764 = vor.u32 1.1754944e-38, %v763
    %v765 = vsel %vm762, %v764, %v760
    %v766 = vmul.f32 1.0, %v765
    %v767 = vrcp.pop %v751
    %v768 = vmul.f32 %v751, %v767
    %v769 = vsub.f32 1.0, %v768
    %v770 = vmul.f32 %v767, %v769
    %v771 = vadd.f32 %v767, %v770
    %vm772 = vweird.f32 %v751
    %vm773 = vweird.f32 %v767
    %vm774 = vmor %vm772, %vm773
    %v775 = vsel %vm774, %v767, %v771
    %v776 = vand.u32 2147483647, %v751
    %vm777 = vcmp.eq.f32.partialorder %v776, 8.507059e+37
    %v778 = vand.u32 %v751, 2147483648
    %v779 = vor.u32 1.1754944e-38, %v778
    %v780 = vsel %vm777, %v779, %v775
    %v781 = vmul.f32 1.0, %v780
    %v782 = vtanh.pop %v743
    %v783 = vmul.f32 %v766, %v685
    %785 = vrot.lane.b32.xlu0 %v782, 64
    %v786 = vpop.permute.xlu0 %785
    %v788 = vmul.f32 %v766, %v786
    %790 = vrot.lane.b32.xlu0 %v788, 64
    %v791 = vpop.permute.xlu0 %790
    %v793 = vadd.f32 %v783, %v791
    %v794 = vtanh.pop %v793
    %796 = vrot.lane.b32.xlu0 %v794, 64
    %v797 = vpop.permute.xlu0 %796
    %v799 = vmul.f32 %v781, %v797
    %s800 = scalar_lea.vmem [#allocation4], 16
    %801 = vst.msk [vmem:[%s800] sm:$0xff] %vm483, %v799
    %s802 = smul.u32 3, 2
    %s803 = smul.addr %s802, 8
    %s804 = scalar_lea.vmem [#allocation2], %s803
    %v805 = vld [vmem:[%s804] sm:$0xff]
    %v806 = vld [vmem:[%s804 + $0x8] sm:$0xff]
    %v808 = vsel %vm483, %v799, 0
    %810 = vmatpush.msra.mxu0 0.0
    %811 = vmatpush.msra.mxu0 0.0
    %812 = vmatpush.msra.mxu0 0.0
    %813 = vmatpush.msra.mxu0 0.0
    %814 = vmatpush.msra.mxu0 0.0
    %815 = vmatpush.msra.mxu0 0.0
    %816 = vmatpush.msra.mxu0 0.0
    %817 = vmatpush.msra.mxu0 0.0
    %818 = vmatpush.msra.mxu0 %v476
    %819 = vmatpush.msra.mxu0 %v474
    %820 = vmatpush.msra.mxu0 %v472
    %821 = vmatpush.msra.mxu0 %v470
    %822 = vmatpush.msra.mxu0 %v468
    %823 = vmatpush.msra.mxu0 %v466
    %824 = vmatpush.msra.mxu0 %v464
    %825 = vmatpush.msra.mxu0 %v462
    %826 = vmatmul.f32.gmra.mxu0 %v808
    %v827 = vpop.f32.mrf.mxu0
    %v828 = vadd.f32 0.0, %v827
    %829 = vdwg.mxu0
    %830 = vmatpush.msra.mxu0 0.0
    %831 = vmatpush.msra.mxu0 0.0
    %832 = vmatpush.msra.mxu0 0.0
    %833 = vmatpush.msra.mxu0 0.0
    %834 = vmatpush.msra.mxu0 0.0
    %835 = vmatpush.msra.mxu0 0.0
    %836 = vmatpush.msra.mxu0 0.0
    %837 = vmatpush.msra.mxu0 0.0
    %838 = vmatpush.msra.mxu0 %v477
    %839 = vmatpush.msra.mxu0 %v475
    %840 = vmatpush.msra.mxu0 %v473
    %841 = vmatpush.msra.mxu0 %v471
    %842 = vmatpush.msra.mxu0 %v469
    %843 = vmatpush.msra.mxu0 %v467
    %844 = vmatpush.msra.mxu0 %v465
    %845 = vmatpush.msra.mxu0 %v463
    %846 = vmatmul.f32.gmra.mxu0 %v808
    %v847 = vpop.f32.mrf.mxu0
    %v848 = vadd.f32 0.0, %v847
    %849 = vdwg.mxu0
    %v850 = vadd.f32 %v805, %v828
    %v851 = vadd.f32 %v806, %v848
    %v852 = vxor.u32 %v850, 2147483648
    %v853 = vxor.u32 %v851, 2147483648
    %v854 = vmul.f32 %v852, 1.442695
    %v855 = vpow.pop %v854
    %v856 = vmul.f32 %v853, 1.442695
    %v857 = vpow.pop %v856
    %v858 = vadd.f32 %v855, 1.0
    %v859 = vadd.f32 %v857, 1.0
    %v860 = vrcp.pop %v858
    %v861 = vmul.f32 %v858, %v860
    %v862 = vsub.f32 1.0, %v861
    %v863 = vmul.f32 %v860, %v862
    %v864 = vadd.f32 %v860, %v863
    %vm865 = vweird.f32 %v858
    %vm866 = vweird.f32 %v860
    %vm867 = vmor %vm865, %vm866
    %v868 = vsel %vm867, %v860, %v864
    %v869 = vand.u32 2147483647, %v858
    %vm870 = vcmp.eq.f32.partialorder %v869, 8.507059e+37
    %v871 = vand.u32 %v858, 2147483648
    %v872 = vor.u32 1.1754944e-38, %v871
    %v873 = vsel %vm870, %v872, %v868
    %v874 = vmul.f32 1.0, %v873
    %v875 = vrcp.pop %v859
    %v876 = vmul.f32 %v859, %v875
    %v877 = vsub.f32 1.0, %v876
    %v878 = vmul.f32 %v875, %v877
    %v879 = vadd.f32 %v875, %v878
    %vm880 = vweird.f32 %v859
    %vm881 = vweird.f32 %v875
    %vm882 = vmor %vm880, %vm881
    %v883 = vsel %vm882, %v875, %v879
    %v884 = vand.u32 2147483647, %v859
    %vm885 = vcmp.eq.f32.partialorder %v884, 8.507059e+37
    %v886 = vand.u32 %v859, 2147483648
    %v887 = vor.u32 1.1754944e-38, %v886
    %v888 = vsel %vm885, %v887, %v883
    %v889 = vmul.f32 1.0, %v888
    %v890 = vtanh.pop %v851
    %v891 = vmul.f32 %v874, %v793
    %893 = vrot.lane.b32.xlu0 %v890, 64
    %v894 = vpop.permute.xlu0 %893
    %v896 = vmul.f32 %v874, %v894
    %898 = vrot.lane.b32.xlu0 %v896, 64
    %v899 = vpop.permute.xlu0 %898
    %v901 = vadd.f32 %v891, %v899
    %v902 = vtanh.pop %v901
    %904 = vrot.lane.b32.xlu0 %v902, 64
    %v905 = vpop.permute.xlu0 %904
    %v907 = vmul.f32 %v889, %v905
    %s908 = scalar_lea.vmem [#allocation4], 24
    %909 = vst.msk [vmem:[%s908] sm:$0xff] %vm483, %v907
    %s910 = smul.u32 4, 2
    %s911 = smul.addr %s910, 8
    %s912 = scalar_lea.vmem [#allocation2], %s911
    %v913 = vld [vmem:[%s912] sm:$0xff]
    %v914 = vld [vmem:[%s912 + $0x8] sm:$0xff]
    %v916 = vsel %vm483, %v907, 0
    %918 = vmatpush.msra.mxu0 0.0
    %919 = vmatpush.msra.mxu0 0.0
    %920 = vmatpush.msra.mxu0 0.0
    %921 = vmatpush.msra.mxu0 0.0
    %922 = vmatpush.msra.mxu0 0.0
    %923 = vmatpush.msra.mxu0 0.0
    %924 = vmatpush.msra.mxu0 0.0
    %925 = vmatpush.msra.mxu0 0.0
    %926 = vmatpush.msra.mxu0 %v476
    %927 = vmatpush.msra.mxu0 %v474
    %928 = vmatpush.msra.mxu0 %v472
    %929 = vmatpush.msra.mxu0 %v470
    %930 = vmatpush.msra.mxu0 %v468
    %931 = vmatpush.msra.mxu0 %v466
    %932 = vmatpush.msra.mxu0 %v464
    %933 = vmatpush.msra.mxu0 %v462
    %934 = vmatmul.f32.gmra.mxu0 %v916
    %v935 = vpop.f32.mrf.mxu0
    %v936 = vadd.f32 0.0, %v935
    %937 = vdwg.mxu0
    %938 = vmatpush.msra.mxu0 0.0
    %939 = vmatpush.msra.mxu0 0.0
    %940 = vmatpush.msra.mxu0 0.0
    %941 = vmatpush.msra.mxu0 0.0
    %942 = vmatpush.msra.mxu0 0.0
    %943 = vmatpush.msra.mxu0 0.0
    %944 = vmatpush.msra.mxu0 0.0
    %945 = vmatpush.msra.mxu0 0.0
    %946 = vmatpush.msra.mxu0 %v477
    %947 = vmatpush.msra.mxu0 %v475
    %948 = vmatpush.msra.mxu0 %v473
    %949 = vmatpush.msra.mxu0 %v471
    %950 = vmatpush.msra.mxu0 %v469
    %951 = vmatpush.msra.mxu0 %v467
    %952 = vmatpush.msra.mxu0 %v465
    %953 = vmatpush.msra.mxu0 %v463
    %954 = vmatmul.f32.gmra.mxu0 %v916
    %v955 = vpop.f32.mrf.mxu0
    %v956 = vadd.f32 0.0, %v955
    %957 = vdwg.mxu0
    %v958 = vadd.f32 %v913, %v936
    %v959 = vadd.f32 %v914, %v956
    %v960 = vxor.u32 %v958, 2147483648
    %v961 = vxor.u32 %v959, 2147483648
    %v962 = vmul.f32 %v960, 1.442695
    %v963 = vpow.pop %v962
    %v964 = vmul.f32 %v961, 1.442695
    %v965 = vpow.pop %v964
    %v966 = vadd.f32 %v963, 1.0
    %v967 = vadd.f32 %v965, 1.0
    %v968 = vrcp.pop %v966
    %v969 = vmul.f32 %v966, %v968
    %v970 = vsub.f32 1.0, %v969
    %v971 = vmul.f32 %v968, %v970
    %v972 = vadd.f32 %v968, %v971
    %vm973 = vweird.f32 %v966
    %vm974 = vweird.f32 %v968
    %vm975 = vmor %vm973, %vm974
    %v976 = vsel %vm975, %v968, %v972
    %v977 = vand.u32 2147483647, %v966
    %vm978 = vcmp.eq.f32.partialorder %v977, 8.507059e+37
    %v979 = vand.u32 %v966, 2147483648
    %v980 = vor.u32 1.1754944e-38, %v979
    %v981 = vsel %vm978, %v980, %v976
    %v982 = vmul.f32 1.0, %v981
    %v983 = vrcp.pop %v967
    %v984 = vmul.f32 %v967, %v983
    %v985 = vsub.f32 1.0, %v984
    %v986 = vmul.f32 %v983, %v985
    %v987 = vadd.f32 %v983, %v986
    %vm988 = vweird.f32 %v967
    %vm989 = vweird.f32 %v983
    %vm990 = vmor %vm988, %vm989
    %v991 = vsel %vm990, %v983, %v987
    %v992 = vand.u32 2147483647, %v967
    %vm993 = vcmp.eq.f32.partialorder %v992, 8.507059e+37
    %v994 = vand.u32 %v967, 2147483648
    %v995 = vor.u32 1.1754944e-38, %v994
    %v996 = vsel %vm993, %v995, %v991
    %v997 = vmul.f32 1.0, %v996
    %v998 = vtanh.pop %v959
    %v999 = vmul.f32 %v982, %v901
    %1001 = vrot.lane.b32.xlu0 %v998, 64
    %v1002 = vpop.permute.xlu0 %1001
    %v1004 = vmul.f32 %v982, %v1002
    %1006 = vrot.lane.b32.xlu0 %v1004, 64
    %v1007 = vpop.permute.xlu0 %1006
    %v1009 = vadd.f32 %v999, %v1007
    %v1010 = vtanh.pop %v1009
    %1012 = vrot.lane.b32.xlu0 %v1010, 64
    %v1013 = vpop.permute.xlu0 %1012
    %v1015 = vmul.f32 %v997, %v1013
    %s1016 = scalar_lea.vmem [#allocation4], 32
    %1017 = vst.msk [vmem:[%s1016] sm:$0xff] %vm483, %v1015
    %s1018 = smul.u32 5, 2
    %s1019 = smul.addr %s1018, 8
    %s1020 = scalar_lea.vmem [#allocation2], %s1019
    %v1021 = vld [vmem:[%s1020] sm:$0xff]
    %v1022 = vld [vmem:[%s1020 + $0x8] sm:$0xff]
    %v1024 = vsel %vm483, %v1015, 0
    %1026 = vmatpush.msra.mxu0 0.0
    %1027 = vmatpush.msra.mxu0 0.0
    %1028 = vmatpush.msra.mxu0 0.0
    %1029 = vmatpush.msra.mxu0 0.0
    %1030 = vmatpush.msra.mxu0 0.0
    %1031 = vmatpush.msra.mxu0 0.0
    %1032 = vmatpush.msra.mxu0 0.0
    %1033 = vmatpush.msra.mxu0 0.0
    %1034 = vmatpush.msra.mxu0 %v476
    %1035 = vmatpush.msra.mxu0 %v474
    %1036 = vmatpush.msra.mxu0 %v472
    %1037 = vmatpush.msra.mxu0 %v470
    %1038 = vmatpush.msra.mxu0 %v468
    %1039 = vmatpush.msra.mxu0 %v466
    %1040 = vmatpush.msra.mxu0 %v464
    %1041 = vmatpush.msra.mxu0 %v462
    %1042 = vmatmul.f32.gmra.mxu0 %v1024
    %v1043 = vpop.f32.mrf.mxu0
    %v1044 = vadd.f32 0.0, %v1043
    %1045 = vdwg.mxu0
    %1046 = vmatpush.msra.mxu0 0.0
    %1047 = vmatpush.msra.mxu0 0.0
    %1048 = vmatpush.msra.mxu0 0.0
    %1049 = vmatpush.msra.mxu0 0.0
    %1050 = vmatpush.msra.mxu0 0.0
    %1051 = vmatpush.msra.mxu0 0.0
    %1052 = vmatpush.msra.mxu0 0.0
    %1053 = vmatpush.msra.mxu0 0.0
    %1054 = vmatpush.msra.mxu0 %v477
    %1055 = vmatpush.msra.mxu0 %v475
    %1056 = vmatpush.msra.mxu0 %v473
    %1057 = vmatpush.msra.mxu0 %v471
    %1058 = vmatpush.msra.mxu0 %v469
    %1059 = vmatpush.msra.mxu0 %v467
    %1060 = vmatpush.msra.mxu0 %v465
    %1061 = vmatpush.msra.mxu0 %v463
    %1062 = vmatmul.f32.gmra.mxu0 %v1024
    %v1063 = vpop.f32.mrf.mxu0
    %v1064 = vadd.f32 0.0, %v1063
    %1065 = vdwg.mxu0
    %v1066 = vadd.f32 %v1021, %v1044
    %v1067 = vadd.f32 %v1022, %v1064
    %v1068 = vxor.u32 %v1066, 2147483648
    %v1069 = vxor.u32 %v1067, 2147483648
    %v1070 = vmul.f32 %v1068, 1.442695
    %v1071 = vpow.pop %v1070
    %v1072 = vmul.f32 %v1069, 1.442695
    %v1073 = vpow.pop %v1072
    %v1074 = vadd.f32 %v1071, 1.0
    %v1075 = vadd.f32 %v1073, 1.0
    %v1076 = vrcp.pop %v1074
    %v1077 = vmul.f32 %v1074, %v1076
    %v1078 = vsub.f32 1.0, %v1077
    %v1079 = vmul.f32 %v1076, %v1078
    %v1080 = vadd.f32 %v1076, %v1079
    %vm1081 = vweird.f32 %v1074
    %vm1082 = vweird.f32 %v1076
    %vm1083 = vmor %vm1081, %vm1082
    %v1084 = vsel %vm1083, %v1076, %v1080
    %v1085 = vand.u32 2147483647, %v1074
    %vm1086 = vcmp.eq.f32.partialorder %v1085, 8.507059e+37
    %v1087 = vand.u32 %v1074, 2147483648
    %v1088 = vor.u32 1.1754944e-38, %v1087
    %v1089 = vsel %vm1086, %v1088, %v1084
    %v1090 = vmul.f32 1.0, %v1089
    %v1091 = vrcp.pop %v1075
    %v1092 = vmul.f32 %v1075, %v1091
    %v1093 = vsub.f32 1.0, %v1092
    %v1094 = vmul.f32 %v1091, %v1093
    %v1095 = vadd.f32 %v1091, %v1094
    %vm1096 = vweird.f32 %v1075
    %vm1097 = vweird.f32 %v1091
    %vm1098 = vmor %vm1096, %vm1097
    %v1099 = vsel %vm1098, %v1091, %v1095
    %v1100 = vand.u32 2147483647, %v1075
    %vm1101 = vcmp.eq.f32.partialorder %v1100, 8.507059e+37
    %v1102 = vand.u32 %v1075, 2147483648
    %v1103 = vor.u32 1.1754944e-38, %v1102
    %v1104 = vsel %vm1101, %v1103, %v1099
    %v1105 = vmul.f32 1.0, %v1104
    %v1106 = vtanh.pop %v1067
    %v1107 = vmul.f32 %v1090, %v1009
    %1109 = vrot.lane.b32.xlu0 %v1106, 64
    %v1110 = vpop.permute.xlu0 %1109
    %v1112 = vmul.f32 %v1090, %v1110
    %1114 = vrot.lane.b32.xlu0 %v1112, 64
    %v1115 = vpop.permute.xlu0 %1114
    %v1117 = vadd.f32 %v1107, %v1115
    %v1118 = vtanh.pop %v1117
    %1120 = vrot.lane.b32.xlu0 %v1118, 64
    %v1121 = vpop.permute.xlu0 %1120
    %v1123 = vmul.f32 %v1105, %v1121
    %s1124 = scalar_lea.vmem [#allocation4], 40
    %1125 = vst.msk [vmem:[%s1124] sm:$0xff] %vm483, %v1123
    %s1126 = smul.u32 6, 2
    %s1127 = smul.addr %s1126, 8
    %s1128 = scalar_lea.vmem [#allocation2], %s1127
    %v1129 = vld [vmem:[%s1128] sm:$0xff]
    %v1130 = vld [vmem:[%s1128 + $0x8] sm:$0xff]
    %v1132 = vsel %vm483, %v1123, 0
    %1134 = vmatpush.msra.mxu0 0.0
    %1135 = vmatpush.msra.mxu0 0.0
    %1136 = vmatpush.msra.mxu0 0.0
    %1137 = vmatpush.msra.mxu0 0.0
    %1138 = vmatpush.msra.mxu0 0.0
    %1139 = vmatpush.msra.mxu0 0.0
    %1140 = vmatpush.msra.mxu0 0.0
    %1141 = vmatpush.msra.mxu0 0.0
    %1142 = vmatpush.msra.mxu0 %v476
    %1143 = vmatpush.msra.mxu0 %v474
    %1144 = vmatpush.msra.mxu0 %v472
    %1145 = vmatpush.msra.mxu0 %v470
    %1146 = vmatpush.msra.mxu0 %v468
    %1147 = vmatpush.msra.mxu0 %v466
    %1148 = vmatpush.msra.mxu0 %v464
    %1149 = vmatpush.msra.mxu0 %v462
    %1150 = vmatmul.f32.gmra.mxu0 %v1132
    %v1151 = vpop.f32.mrf.mxu0
    %v1152 = vadd.f32 0.0, %v1151
    %1153 = vdwg.mxu0
    %1154 = vmatpush.msra.mxu0 0.0
    %1155 = vmatpush.msra.mxu0 0.0
    %1156 = vmatpush.msra.mxu0 0.0
    %1157 = vmatpush.msra.mxu0 0.0
    %1158 = vmatpush.msra.mxu0 0.0
    %1159 = vmatpush.msra.mxu0 0.0
    %1160 = vmatpush.msra.mxu0 0.0
    %1161 = vmatpush.msra.mxu0 0.0
    %1162 = vmatpush.msra.mxu0 %v477
    %1163 = vmatpush.msra.mxu0 %v475
    %1164 = vmatpush.msra.mxu0 %v473
    %1165 = vmatpush.msra.mxu0 %v471
    %1166 = vmatpush.msra.mxu0 %v469
    %1167 = vmatpush.msra.mxu0 %v467
    %1168 = vmatpush.msra.mxu0 %v465
    %1169 = vmatpush.msra.mxu0 %v463
    %1170 = vmatmul.f32.gmra.mxu0 %v1132
    %v1171 = vpop.f32.mrf.mxu0
    %v1172 = vadd.f32 0.0, %v1171
    %1173 = vdwg.mxu0
    %v1174 = vadd.f32 %v1129, %v1152
    %v1175 = vadd.f32 %v1130, %v1172
    %v1176 = vxor.u32 %v1174, 2147483648
    %v1177 = vxor.u32 %v1175, 2147483648
    %v1178 = vmul.f32 %v1176, 1.442695
    %v1179 = vpow.pop %v1178
    %v1180 = vmul.f32 %v1177, 1.442695
    %v1181 = vpow.pop %v1180
    %v1182 = vadd.f32 %v1179, 1.0
    %v1183 = vadd.f32 %v1181, 1.0
    %v1184 = vrcp.pop %v1182
    %v1185 = vmul.f32 %v1182, %v1184
    %v1186 = vsub.f32 1.0, %v1185
    %v1187 = vmul.f32 %v1184, %v1186
    %v1188 = vadd.f32 %v1184, %v1187
    %vm1189 = vweird.f32 %v1182
    %vm1190 = vweird.f32 %v1184
    %vm1191 = vmor %vm1189, %vm1190
    %v1192 = vsel %vm1191, %v1184, %v1188
    %v1193 = vand.u32 2147483647, %v1182
    %vm1194 = vcmp.eq.f32.partialorder %v1193, 8.507059e+37
    %v1195 = vand.u32 %v1182, 2147483648
    %v1196 = vor.u32 1.1754944e-38, %v1195
    %v1197 = vsel %vm1194, %v1196, %v1192
    %v1198 = vmul.f32 1.0, %v1197
    %v1199 = vrcp.pop %v1183
    %v1200 = vmul.f32 %v1183, %v1199
    %v1201 = vsub.f32 1.0, %v1200
    %v1202 = vmul.f32 %v1199, %v1201
    %v1203 = vadd.f32 %v1199, %v1202
    %vm1204 = vweird.f32 %v1183
    %vm1205 = vweird.f32 %v1199
    %vm1206 = vmor %vm1204, %vm1205
    %v1207 = vsel %vm1206, %v1199, %v1203
    %v1208 = vand.u32 2147483647, %v1183
    %vm1209 = vcmp.eq.f32.partialorder %v1208, 8.507059e+37
    %v1210 = vand.u32 %v1183, 2147483648
    %v1211 = vor.u32 1.1754944e-38, %v1210
    %v1212 = vsel %vm1209, %v1211, %v1207
    %v1213 = vmul.f32 1.0, %v1212
    %v1214 = vtanh.pop %v1175
    %v1215 = vmul.f32 %v1198, %v1117
    %1217 = vrot.lane.b32.xlu0 %v1214, 64
    %v1218 = vpop.permute.xlu0 %1217
    %v1220 = vmul.f32 %v1198, %v1218
    %1222 = vrot.lane.b32.xlu0 %v1220, 64
    %v1223 = vpop.permute.xlu0 %1222
    %v1225 = vadd.f32 %v1215, %v1223
    %v1226 = vtanh.pop %v1225
    %1228 = vrot.lane.b32.xlu0 %v1226, 64
    %v1229 = vpop.permute.xlu0 %1228
    %v1231 = vmul.f32 %v1213, %v1229
    %s1232 = scalar_lea.vmem [#allocation4], 48
    %1233 = vst.msk [vmem:[%s1232] sm:$0xff] %vm483, %v1231
    %s1234 = smul.u32 7, 2
    %s1235 = smul.addr %s1234, 8
    %s1236 = scalar_lea.vmem [#allocation2], %s1235
    %v1237 = vld [vmem:[%s1236] sm:$0xff]
    %v1238 = vld [vmem:[%s1236 + $0x8] sm:$0xff]
    %v1240 = vsel %vm483, %v1231, 0
    %1242 = vmatpush.msra.mxu0 0.0
    %1243 = vmatpush.msra.mxu0 0.0
    %1244 = vmatpush.msra.mxu0 0.0
    %1245 = vmatpush.msra.mxu0 0.0
    %1246 = vmatpush.msra.mxu0 0.0
    %1247 = vmatpush.msra.mxu0 0.0
    %1248 = vmatpush.msra.mxu0 0.0
    %1249 = vmatpush.msra.mxu0 0.0
    %1250 = vmatpush.msra.mxu0 %v476
    %1251 = vmatpush.msra.mxu0 %v474
    %1252 = vmatpush.msra.mxu0 %v472
    %1253 = vmatpush.msra.mxu0 %v470
    %1254 = vmatpush.msra.mxu0 %v468
    %1255 = vmatpush.msra.mxu0 %v466
    %1256 = vmatpush.msra.mxu0 %v464
    %1257 = vmatpush.msra.mxu0 %v462
    %1258 = vmatmul.f32.gmra.mxu0 %v1240
    %v1259 = vpop.f32.mrf.mxu0
    %v1260 = vadd.f32 0.0, %v1259
    %1261 = vdwg.mxu0
    %1262 = vmatpush.msra.mxu0 0.0
    %1263 = vmatpush.msra.mxu0 0.0
    %1264 = vmatpush.msra.mxu0 0.0
    %1265 = vmatpush.msra.mxu0 0.0
    %1266 = vmatpush.msra.mxu0 0.0
    %1267 = vmatpush.msra.mxu0 0.0
    %1268 = vmatpush.msra.mxu0 0.0
    %1269 = vmatpush.msra.mxu0 0.0
    %1270 = vmatpush.msra.mxu0 %v477
    %1271 = vmatpush.msra.mxu0 %v475
    %1272 = vmatpush.msra.mxu0 %v473
    %1273 = vmatpush.msra.mxu0 %v471
    %1274 = vmatpush.msra.mxu0 %v469
    %1275 = vmatpush.msra.mxu0 %v467
    %1276 = vmatpush.msra.mxu0 %v465
    %1277 = vmatpush.msra.mxu0 %v463
    %1278 = vmatmul.f32.gmra.mxu0 %v1240
    %v1279 = vpop.f32.mrf.mxu0
    %v1280 = vadd.f32 0.0, %v1279
    %1281 = vdwg.mxu0
    %v1282 = vadd.f32 %v1237, %v1260
    %v1283 = vadd.f32 %v1238, %v1280
    %v1284 = vxor.u32 %v1282, 2147483648
    %v1285 = vxor.u32 %v1283, 2147483648
    %v1286 = vmul.f32 %v1284, 1.442695
    %v1287 = vpow.pop %v1286
    %v1288 = vmul.f32 %v1285, 1.442695
    %v1289 = vpow.pop %v1288
    %v1290 = vadd.f32 %v1287, 1.0
    %v1291 = vadd.f32 %v1289, 1.0
    %v1292 = vrcp.pop %v1290
    %v1293 = vmul.f32 %v1290, %v1292
    %v1294 = vsub.f32 1.0, %v1293
    %v1295 = vmul.f32 %v1292, %v1294
    %v1296 = vadd.f32 %v1292, %v1295
    %vm1297 = vweird.f32 %v1290
    %vm1298 = vweird.f32 %v1292
    %vm1299 = vmor %vm1297, %vm1298
    %v1300 = vsel %vm1299, %v1292, %v1296
    %v1301 = vand.u32 2147483647, %v1290
    %vm1302 = vcmp.eq.f32.partialorder %v1301, 8.507059e+37
    %v1303 = vand.u32 %v1290, 2147483648
    %v1304 = vor.u32 1.1754944e-38, %v1303
    %v1305 = vsel %vm1302, %v1304, %v1300
    %v1306 = vmul.f32 1.0, %v1305
    %v1307 = vrcp.pop %v1291
    %v1308 = vmul.f32 %v1291, %v1307
    %v1309 = vsub.f32 1.0, %v1308
    %v1310 = vmul.f32 %v1307, %v1309
    %v1311 = vadd.f32 %v1307, %v1310
    %vm1312 = vweird.f32 %v1291
    %vm1313 = vweird.f32 %v1307
    %vm1314 = vmor %vm1312, %vm1313
    %v1315 = vsel %vm1314, %v1307, %v1311
    %v1316 = vand.u32 2147483647, %v1291
    %vm1317 = vcmp.eq.f32.partialorder %v1316, 8.507059e+37
    %v1318 = vand.u32 %v1291, 2147483648
    %v1319 = vor.u32 1.1754944e-38, %v1318
    %v1320 = vsel %vm1317, %v1319, %v1315
    %v1321 = vmul.f32 1.0, %v1320
    %v1322 = vtanh.pop %v1283
    %v1323 = vmul.f32 %v1306, %v1225
    %1325 = vrot.lane.b32.xlu0 %v1322, 64
    %v1326 = vpop.permute.xlu0 %1325
    %v1328 = vmul.f32 %v1306, %v1326
    %1330 = vrot.lane.b32.xlu0 %v1328, 64
    %v1331 = vpop.permute.xlu0 %1330
    %v1333 = vadd.f32 %v1323, %v1331
    %v1334 = vtanh.pop %v1333
    %1336 = vrot.lane.b32.xlu0 %v1334, 64
    %v1337 = vpop.permute.xlu0 %1336
    %v1339 = vmul.f32 %v1321, %v1337
    %s1340 = scalar_lea.vmem [#allocation4], 56
    %1341 = vst.msk [vmem:[%s1340] sm:$0xff] %vm483, %v1339
    %v1342 = vld [vmem:[#allocation4] sm:$0xff]
    %v1343 = vld [vmem:[#allocation4 + $0x8] sm:$0xff]
    %v1344 = vld [vmem:[#allocation4 + $0x10] sm:$0xff]
    %v1345 = vld [vmem:[#allocation4 + $0x18] sm:$0xff]
    %v1346 = vld [vmem:[#allocation4 + $0x20] sm:$0xff]
    %v1347 = vld [vmem:[#allocation4 + $0x28] sm:$0xff]
    %v1348 = vld [vmem:[#allocation4 + $0x30] sm:$0xff]
    %v1349 = vld [vmem:[#allocation4 + $0x38] sm:$0xff]
    %v1350 = vld [vmem:[#allocation9] sm:$0xff]
    %v1351 = vld [vmem:[#allocation9 + $0x8] sm:$0xff]
    %v1352 = vld [vmem:[#allocation9 + $0x10] sm:$0xff]
    %v1353 = vld [vmem:[#allocation9 + $0x18] sm:$0xff]
    %v1354 = vld [vmem:[#allocation9 + $0x20] sm:$0xff]
    %v1355 = vld [vmem:[#allocation9 + $0x28] sm:$0xff]
    %v1356 = vld [vmem:[#allocation9 + $0x30] sm:$0xff]
    %v1357 = vld [vmem:[#allocation9 + $0x38] sm:$0xff]
    %v1358 = vld [vmem:[#allocation9 + $0x40] sm:$0xff]
    %v1359 = vld [vmem:[#allocation9 + $0x48] sm:$0xff]
    %v1360 = vld [vmem:[#allocation9 + $0x50] sm:$0xff]
    %v1361 = vld [vmem:[#allocation9 + $0x58] sm:$0xff]
    %v1362 = vld [vmem:[#allocation9 + $0x60] sm:$0xff]
    %v1363 = vld [vmem:[#allocation9 + $0x68] sm:$0xff]
    %v1364 = vld [vmem:[#allocation9 + $0x70] sm:$0xff]
    %v1365 = vld [vmem:[#allocation9 + $0x78] sm:$0xff]
    %v1366 = vld [vmem:[%s7] sm:$0x3]
    %v1368 = vperm.slane %v1366, 0
    %v1369 = vperm.slane %v1366, 1
    %v1373 = vsel %vm483, %v1342, 0
    %v1376 = vsel %vm483, %v1343, 0
    %v1379 = vsel %vm483, %v1344, 0
    %v1382 = vsel %vm483, %v1345, 0
    %v1385 = vsel %vm483, %v1346, 0
    %v1388 = vsel %vm483, %v1347, 0
    %v1391 = vsel %vm483, %v1348, 0
    %v1394 = vsel %vm483, %v1349, 0
    %1396 = vmatpush.msra.mxu0 0.0
    %1397 = vmatpush.msra.mxu0 0.0
    %1398 = vmatpush.msra.mxu0 0.0
    %1399 = vmatpush.msra.mxu0 0.0
    %1400 = vmatpush.msra.mxu0 0.0
    %1401 = vmatpush.msra.mxu0 0.0
    %1402 = vmatpush.msra.mxu0 0.0
    %1403 = vmatpush.msra.mxu0 0.0
    %1404 = vmatpush.msra.mxu0 %v1364
    %1405 = vmatpush.msra.mxu0 %v1362
    %1406 = vmatpush.msra.mxu0 %v1360
    %1407 = vmatpush.msra.mxu0 %v1358
    %1408 = vmatpush.msra.mxu0 %v1356
    %1409 = vmatpush.msra.mxu0 %v1354
    %1410 = vmatpush.msra.mxu0 %v1352
    %1411 = vmatpush.msra.mxu0 %v1350
    %1412 = vmatmul.f32.gmra.mxu0 %v1373
    %v1413 = vpop.f32.mrf.mxu0
    %v1414 = vadd.f32 %v1368, %v1413
    %1415 = vmatmul.f32.gmra.mxu0 %v1376
    %v1416 = vpop.f32.mrf.mxu0
    %v1417 = vadd.f32 %v1368, %v1416
    %1418 = vmatmul.f32.gmra.mxu0 %v1379
    %v1419 = vpop.f32.mrf.mxu0
    %v1420 = vadd.f32 %v1368, %v1419
    %1421 = vmatmul.f32.gmra.mxu0 %v1382
    %v1422 = vpop.f32.mrf.mxu0
    %v1423 = vadd.f32 %v1368, %v1422
    %1424 = vmatmul.f32.gmra.mxu0 %v1385
    %v1425 = vpop.f32.mrf.mxu0
    %v1426 = vadd.f32 %v1368, %v1425
    %1427 = vmatmul.f32.gmra.mxu0 %v1388
    %v1428 = vpop.f32.mrf.mxu0
    %v1429 = vadd.f32 %v1368, %v1428
    %1430 = vmatmul.f32.gmra.mxu0 %v1391
    %v1431 = vpop.f32.mrf.mxu0
    %v1432 = vadd.f32 %v1368, %v1431
    %1433 = vmatmul.f32.gmra.mxu0 %v1394
    %v1434 = vpop.f32.mrf.mxu0
    %v1435 = vadd.f32 %v1368, %v1434
    %1436 = vdwg.mxu0
    %1437 = vmatpush.msra.mxu0 0.0
    %1438 = vmatpush.msra.mxu0 0.0
    %1439 = vmatpush.msra.mxu0 0.0
    %1440 = vmatpush.msra.mxu0 0.0
    %1441 = vmatpush.msra.mxu0 0.0
    %1442 = vmatpush.msra.mxu0 0.0
    %1443 = vmatpush.msra.mxu0 0.0
    %1444 = vmatpush.msra.mxu0 0.0
    %1445 = vmatpush.msra.mxu0 %v1365
    %1446 = vmatpush.msra.mxu0 %v1363
    %1447 = vmatpush.msra.mxu0 %v1361
    %1448 = vmatpush.msra.mxu0 %v1359
    %1449 = vmatpush.msra.mxu0 %v1357
    %1450 = vmatpush.msra.mxu0 %v1355
    %1451 = vmatpush.msra.mxu0 %v1353
    %1452 = vmatpush.msra.mxu0 %v1351
    %1453 = vmatmul.f32.gmra.mxu0 %v1373
    %v1454 = vpop.f32.mrf.mxu0
    %v1455 = vadd.f32 %v1369, %v1454
    %1456 = vmatmul.f32.gmra.mxu0 %v1376
    %v1457 = vpop.f32.mrf.mxu0
    %v1458 = vadd.f32 %v1369, %v1457
    %1459 = vmatmul.f32.gmra.mxu0 %v1379
    %v1460 = vpop.f32.mrf.mxu0
    %v1461 = vadd.f32 %v1369, %v1460
    %1462 = vmatmul.f32.gmra.mxu0 %v1382
    %v1463 = vpop.f32.mrf.mxu0
    %v1464 = vadd.f32 %v1369, %v1463
    %1465 = vmatmul.f32.gmra.mxu0 %v1385
    %v1466 = vpop.f32.mrf.mxu0
    %v1467 = vadd.f32 %v1369, %v1466
    %1468 = vmatmul.f32.gmra.mxu0 %v1388
    %v1469 = vpop.f32.mrf.mxu0
    %v1470 = vadd.f32 %v1369, %v1469
    %1471 = vmatmul.f32.gmra.mxu0 %v1391
    %v1472 = vpop.f32.mrf.mxu0
    %v1473 = vadd.f32 %v1369, %v1472
    %1474 = vmatmul.f32.gmra.mxu0 %v1394
    %v1475 = vpop.f32.mrf.mxu0
    %v1476 = vadd.f32 %v1369, %v1475
    %1477 = vdwg.mxu0
    %1478 = vst [vmem:[#allocation3] sm:$0xff] %v1414
    %1479 = vst [vmem:[#allocation3 + $0x8] sm:$0xff] %v1455
    %1480 = vst [vmem:[#allocation3 + $0x10] sm:$0xff] %v1417
    %1481 = vst [vmem:[#allocation3 + $0x18] sm:$0xff] %v1458
    %1482 = vst [vmem:[#allocation3 + $0x20] sm:$0xff] %v1420
    %1483 = vst [vmem:[#allocation3 + $0x28] sm:$0xff] %v1461
    %1484 = vst [vmem:[#allocation3 + $0x30] sm:$0xff] %v1423
    %1485 = vst [vmem:[#allocation3 + $0x38] sm:$0xff] %v1464
    %1486 = vst [vmem:[#allocation3 + $0x40] sm:$0xff] %v1426
    %1487 = vst [vmem:[#allocation3 + $0x48] sm:$0xff] %v1467
    %1488 = vst [vmem:[#allocation3 + $0x50] sm:$0xff] %v1429
    %1489 = vst [vmem:[#allocation3 + $0x58] sm:$0xff] %v1470
    %1490 = vst [vmem:[#allocation3 + $0x60] sm:$0xff] %v1432
    %1491 = vst [vmem:[#allocation3 + $0x68] sm:$0xff] %v1473
    %1492 = vst [vmem:[#allocation3 + $0x70] sm:$0xff] %v1435
    %1493 = vst [vmem:[#allocation3 + $0x78] sm:$0xff] %v1476
    %v1494 = vld [vmem:[#allocation11] sm:$0xff]
    %v1495 = vld [vmem:[#allocation11 + $0x8] sm:$0xff]
    %v1496 = vld [vmem:[#allocation11 + $0x10] sm:$0xff]
    %v1497 = vld [vmem:[#allocation11 + $0x18] sm:$0xff]
    %v1498 = vld [vmem:[#allocation11 + $0x20] sm:$0xff]
    %v1499 = vld [vmem:[#allocation11 + $0x28] sm:$0xff]
    %v1500 = vld [vmem:[#allocation11 + $0x30] sm:$0xff]
    %v1501 = vld [vmem:[#allocation11 + $0x38] sm:$0xff]
    %v1502 = vld [vmem:[#allocation11 + $0x40] sm:$0xff]
    %v1503 = vld [vmem:[#allocation11 + $0x48] sm:$0xff]
    %v1504 = vld [vmem:[#allocation11 + $0x50] sm:$0xff]
    %v1505 = vld [vmem:[#allocation11 + $0x58] sm:$0xff]
    %v1506 = vld [vmem:[#allocation11 + $0x60] sm:$0xff]
    %v1507 = vld [vmem:[#allocation11 + $0x68] sm:$0xff]
    %v1508 = vld [vmem:[#allocation11 + $0x70] sm:$0xff]
    %v1509 = vld [vmem:[#allocation11 + $0x78] sm:$0xff]
    %s1510 = smul.addr %s478, 8
    %s1511 = scalar_lea.vmem [#allocation3], %s1510
    %v1512 = vld [vmem:[%s1511] sm:$0xff]
    %v1513 = vld [vmem:[%s1511 + $0x8] sm:$0xff]
    %1514 = vmatpush.msra.mxu0 0.0
    %1515 = vmatpush.msra.mxu0 0.0
    %1516 = vmatpush.msra.mxu0 0.0
    %1517 = vmatpush.msra.mxu0 0.0
    %1518 = vmatpush.msra.mxu0 0.0
    %1519 = vmatpush.msra.mxu0 0.0
    %1520 = vmatpush.msra.mxu0 0.0
    %1521 = vmatpush.msra.mxu0 0.0
    %1522 = vmatpush.msra.mxu0 %v1508
    %1523 = vmatpush.msra.mxu0 %v1506
    %1524 = vmatpush.msra.mxu0 %v1504
    %1525 = vmatpush.msra.mxu0 %v1502
    %1526 = vmatpush.msra.mxu0 %v1500
    %1527 = vmatpush.msra.mxu0 %v1498
    %1528 = vmatpush.msra.mxu0 %v1496
    %1529 = vmatpush.msra.mxu0 %v1494
    %1530 = vmatmul.f32.gmra.mxu0 %v485
    %v1531 = vpop.f32.mrf.mxu0
    %v1532 = vadd.f32 0.0, %v1531
    %1533 = vdwg.mxu0
    %1534 = vmatpush.msra.mxu0 0.0
    %1535 = vmatpush.msra.mxu0 0.0
    %1536 = vmatpush.msra.mxu0 0.0
    %1537 = vmatpush.msra.mxu0 0.0
    %1538 = vmatpush.msra.mxu0 0.0
    %1539 = vmatpush.msra.mxu0 0.0
    %1540 = vmatpush.msra.mxu0 0.0
    %1541 = vmatpush.msra.mxu0 0.0
    %1542 = vmatpush.msra.mxu0 %v1509
    %1543 = vmatpush.msra.mxu0 %v1507
    %1544 = vmatpush.msra.mxu0 %v1505
    %1545 = vmatpush.msra.mxu0 %v1503
    %1546 = vmatpush.msra.mxu0 %v1501
    %1547 = vmatpush.msra.mxu0 %v1499
    %1548 = vmatpush.msra.mxu0 %v1497
    %1549 = vmatpush.msra.mxu0 %v1495
    %1550 = vmatmul.f32.gmra.mxu0 %v485
    %v1551 = vpop.f32.mrf.mxu0
    %v1552 = vadd.f32 0.0, %v1551
    %1553 = vdwg.mxu0
    %v1554 = vadd.f32 %v1512, %v1532
    %v1555 = vadd.f32 %v1513, %v1552
    %v1556 = vxor.u32 %v1554, 2147483648
    %v1557 = vxor.u32 %v1555, 2147483648
    %v1558 = vmul.f32 %v1556, 1.442695
    %v1559 = vpow.pop %v1558
    %v1560 = vmul.f32 %v1557, 1.442695
    %v1561 = vpow.pop %v1560
    %v1562 = vadd.f32 %v1559, 1.0
    %v1563 = vadd.f32 %v1561, 1.0
    %v1564 = vrcp.pop %v1562
    %v1565 = vmul.f32 %v1562, %v1564
    %v1566 = vsub.f32 1.0, %v1565
    %v1567 = vmul.f32 %v1564, %v1566
    %v1568 = vadd.f32 %v1564, %v1567
    %vm1569 = vweird.f32 %v1562
    %vm1570 = vweird.f32 %v1564
    %vm1571 = vmor %vm1569, %vm1570
    %v1572 = vsel %vm1571, %v1564, %v1568
    %v1573 = vand.u32 2147483647, %v1562
    %vm1574 = vcmp.eq.f32.partialorder %v1573, 8.507059e+37
    %v1575 = vand.u32 %v1562, 2147483648
    %v1576 = vor.u32 1.1754944e-38, %v1575
    %v1577 = vsel %vm1574, %v1576, %v1572
    %v1578 = vmul.f32 1.0, %v1577
    %v1579 = vrcp.pop %v1563
    %v1580 = vmul.f32 %v1563, %v1579
    %v1581 = vsub.f32 1.0, %v1580
    %v1582 = vmul.f32 %v1579, %v1581
    %v1583 = vadd.f32 %v1579, %v1582
    %vm1584 = vweird.f32 %v1563
    %vm1585 = vweird.f32 %v1579
    %vm1586 = vmor %vm1584, %vm1585
    %v1587 = vsel %vm1586, %v1579, %v1583
    %v1588 = vand.u32 2147483647, %v1563
    %vm1589 = vcmp.eq.f32.partialorder %v1588, 8.507059e+37
    %v1590 = vand.u32 %v1563, 2147483648
    %v1591 = vor.u32 1.1754944e-38, %v1590
    %v1592 = vsel %vm1589, %v1591, %v1587
    %v1593 = vmul.f32 1.0, %v1592
    %v1594 = vtanh.pop %v1555
    %v1595 = vmul.f32 %v1578, 0.0
    %1597 = vrot.lane.b32.xlu0 %v1594, 64
    %v1598 = vpop.permute.xlu0 %1597
    %v1600 = vmul.f32 %v1578, %v1598
    %1602 = vrot.lane.b32.xlu0 %v1600, 64
    %v1603 = vpop.permute.xlu0 %1602
    %v1605 = vadd.f32 %v1595, %v1603
    %v1606 = vtanh.pop %v1605
    %1608 = vrot.lane.b32.xlu0 %v1606, 64
    %v1609 = vpop.permute.xlu0 %1608
    %v1611 = vmul.f32 %v1593, %v1609
    %1612 = vst.msk [vmem:[#allocation5] sm:$0xff] %vm483, %v1611
    %s1613 = smul.addr %s586, 8
    %s1614 = scalar_lea.vmem [#allocation3], %s1613
    %v1615 = vld [vmem:[%s1614] sm:$0xff]
    %v1616 = vld [vmem:[%s1614 + $0x8] sm:$0xff]
    %v1618 = vsel %vm483, %v1611, 0
    %1620 = vmatpush.msra.mxu0 0.0
    %1621 = vmatpush.msra.mxu0 0.0
    %1622 = vmatpush.msra.mxu0 0.0
    %1623 = vmatpush.msra.mxu0 0.0
    %1624 = vmatpush.msra.mxu0 0.0
    %1625 = vmatpush.msra.mxu0 0.0
    %1626 = vmatpush.msra.mxu0 0.0
    %1627 = vmatpush.msra.mxu0 0.0
    %1628 = vmatpush.msra.mxu0 %v1508
    %1629 = vmatpush.msra.mxu0 %v1506
    %1630 = vmatpush.msra.mxu0 %v1504
    %1631 = vmatpush.msra.mxu0 %v1502
    %1632 = vmatpush.msra.mxu0 %v1500
    %1633 = vmatpush.msra.mxu0 %v1498
    %1634 = vmatpush.msra.mxu0 %v1496
    %1635 = vmatpush.msra.mxu0 %v1494
    %1636 = vmatmul.f32.gmra.mxu0 %v1618
    %v1637 = vpop.f32.mrf.mxu0
    %v1638 = vadd.f32 0.0, %v1637
    %1639 = vdwg.mxu0
    %1640 = vmatpush.msra.mxu0 0.0
    %1641 = vmatpush.msra.mxu0 0.0
    %1642 = vmatpush.msra.mxu0 0.0
    %1643 = vmatpush.msra.mxu0 0.0
    %1644 = vmatpush.msra.mxu0 0.0
    %1645 = vmatpush.msra.mxu0 0.0
    %1646 = vmatpush.msra.mxu0 0.0
    %1647 = vmatpush.msra.mxu0 0.0
    %1648 = vmatpush.msra.mxu0 %v1509
    %1649 = vmatpush.msra.mxu0 %v1507
    %1650 = vmatpush.msra.mxu0 %v1505
    %1651 = vmatpush.msra.mxu0 %v1503
    %1652 = vmatpush.msra.mxu0 %v1501
    %1653 = vmatpush.msra.mxu0 %v1499
    %1654 = vmatpush.msra.mxu0 %v1497
    %1655 = vmatpush.msra.mxu0 %v1495
    %1656 = vmatmul.f32.gmra.mxu0 %v1618
    %v1657 = vpop.f32.mrf.mxu0
    %v1658 = vadd.f32 0.0, %v1657
    %1659 = vdwg.mxu0
    %v1660 = vadd.f32 %v1615, %v1638
    %v1661 = vadd.f32 %v1616, %v1658
    %v1662 = vxor.u32 %v1660, 2147483648
    %v1663 = vxor.u32 %v1661, 2147483648
    %v1664 = vmul.f32 %v1662, 1.442695
    %v1665 = vpow.pop %v1664
    %v1666 = vmul.f32 %v1663, 1.442695
    %v1667 = vpow.pop %v1666
    %v1668 = vadd.f32 %v1665, 1.0
    %v1669 = vadd.f32 %v1667, 1.0
    %v1670 = vrcp.pop %v1668
    %v1671 = vmul.f32 %v1668, %v1670
    %v1672 = vsub.f32 1.0, %v1671
    %v1673 = vmul.f32 %v1670, %v1672
    %v1674 = vadd.f32 %v1670, %v1673
    %vm1675 = vweird.f32 %v1668
    %vm1676 = vweird.f32 %v1670
    %vm1677 = vmor %vm1675, %vm1676
    %v1678 = vsel %vm1677, %v1670, %v1674
    %v1679 = vand.u32 2147483647, %v1668
    %vm1680 = vcmp.eq.f32.partialorder %v1679, 8.507059e+37
    %v1681 = vand.u32 %v1668, 2147483648
    %v1682 = vor.u32 1.1754944e-38, %v1681
    %v1683 = vsel %vm1680, %v1682, %v1678
    %v1684 = vmul.f32 1.0, %v1683
    %v1685 = vrcp.pop %v1669
    %v1686 = vmul.f32 %v1669, %v1685
    %v1687 = vsub.f32 1.0, %v1686
    %v1688 = vmul.f32 %v1685, %v1687
    %v1689 = vadd.f32 %v1685, %v1688
    %vm1690 = vweird.f32 %v1669
    %vm1691 = vweird.f32 %v1685
    %vm1692 = vmor %vm1690, %vm1691
    %v1693 = vsel %vm1692, %v1685, %v1689
    %v1694 = vand.u32 2147483647, %v1669
    %vm1695 = vcmp.eq.f32.partialorder %v1694, 8.507059e+37
    %v1696 = vand.u32 %v1669, 2147483648
    %v1697 = vor.u32 1.1754944e-38, %v1696
    %v1698 = vsel %vm1695, %v1697, %v1693
    %v1699 = vmul.f32 1.0, %v1698
    %v1700 = vtanh.pop %v1661
    %v1701 = vmul.f32 %v1684, %v1605
    %1703 = vrot.lane.b32.xlu0 %v1700, 64
    %v1704 = vpop.permute.xlu0 %1703
    %v1706 = vmul.f32 %v1684, %v1704
    %1708 = vrot.lane.b32.xlu0 %v1706, 64
    %v1709 = vpop.permute.xlu0 %1708
    %v1711 = vadd.f32 %v1701, %v1709
    %v1712 = vtanh.pop %v1711
    %1714 = vrot.lane.b32.xlu0 %v1712, 64
    %v1715 = vpop.permute.xlu0 %1714
    %v1717 = vmul.f32 %v1699, %v1715
    %s1718 = scalar_lea.vmem [#allocation5], 8
    %1719 = vst.msk [vmem:[%s1718] sm:$0xff] %vm483, %v1717
    %s1720 = smul.addr %s694, 8
    %s1721 = scalar_lea.vmem [#allocation3], %s1720
    %v1722 = vld [vmem:[%s1721] sm:$0xff]
    %v1723 = vld [vmem:[%s1721 + $0x8] sm:$0xff]
    %v1725 = vsel %vm483, %v1717, 0
    %1727 = vmatpush.msra.mxu0 0.0
    %1728 = vmatpush.msra.mxu0 0.0
    %1729 = vmatpush.msra.mxu0 0.0
    %1730 = vmatpush.msra.mxu0 0.0
    %1731 = vmatpush.msra.mxu0 0.0
    %1732 = vmatpush.msra.mxu0 0.0
    %1733 = vmatpush.msra.mxu0 0.0
    %1734 = vmatpush.msra.mxu0 0.0
    %1735 = vmatpush.msra.mxu0 %v1508
    %1736 = vmatpush.msra.mxu0 %v1506
    %1737 = vmatpush.msra.mxu0 %v1504
    %1738 = vmatpush.msra.mxu0 %v1502
    %1739 = vmatpush.msra.mxu0 %v1500
    %1740 = vmatpush.msra.mxu0 %v1498
    %1741 = vmatpush.msra.mxu0 %v1496
    %1742 = vmatpush.msra.mxu0 %v1494
    %1743 = vmatmul.f32.gmra.mxu0 %v1725
    %v1744 = vpop.f32.mrf.mxu0
    %v1745 = vadd.f32 0.0, %v1744
    %1746 = vdwg.mxu0
    %1747 = vmatpush.msra.mxu0 0.0
    %1748 = vmatpush.msra.mxu0 0.0
    %1749 = vmatpush.msra.mxu0 0.0
    %1750 = vmatpush.msra.mxu0 0.0
    %1751 = vmatpush.msra.mxu0 0.0
    %1752 = vmatpush.msra.mxu0 0.0
    %1753 = vmatpush.msra.mxu0 0.0
    %1754 = vmatpush.msra.mxu0 0.0
    %1755 = vmatpush.msra.mxu0 %v1509
    %1756 = vmatpush.msra.mxu0 %v1507
    %1757 = vmatpush.msra.mxu0 %v1505
    %1758 = vmatpush.msra.mxu0 %v1503
    %1759 = vmatpush.msra.mxu0 %v1501
    %1760 = vmatpush.msra.mxu0 %v1499
    %1761 = vmatpush.msra.mxu0 %v1497
    %1762 = vmatpush.msra.mxu0 %v1495
    %1763 = vmatmul.f32.gmra.mxu0 %v1725
    %v1764 = vpop.f32.mrf.mxu0
    %v1765 = vadd.f32 0.0, %v1764
    %1766 = vdwg.mxu0
    %v1767 = vadd.f32 %v1722, %v1745
    %v1768 = vadd.f32 %v1723, %v1765
    %v1769 = vxor.u32 %v1767, 2147483648
    %v1770 = vxor.u32 %v1768, 2147483648
    %v1771 = vmul.f32 %v1769, 1.442695
    %v1772 = vpow.pop %v1771
    %v1773 = vmul.f32 %v1770, 1.442695
    %v1774 = vpow.pop %v1773
    %v1775 = vadd.f32 %v1772, 1.0
    %v1776 = vadd.f32 %v1774, 1.0
    %v1777 = vrcp.pop %v1775
    %v1778 = vmul.f32 %v1775, %v1777
    %v1779 = vsub.f32 1.0, %v1778
    %v1780 = vmul.f32 %v1777, %v1779
    %v1781 = vadd.f32 %v1777, %v1780
    %vm1782 = vweird.f32 %v1775
    %vm1783 = vweird.f32 %v1777
    %vm1784 = vmor %vm1782, %vm1783
    %v1785 = vsel %vm1784, %v1777, %v1781
    %v1786 = vand.u32 2147483647, %v1775
    %vm1787 = vcmp.eq.f32.partialorder %v1786, 8.507059e+37
    %v1788 = vand.u32 %v1775, 2147483648
    %v1789 = vor.u32 1.1754944e-38, %v1788
    %v1790 = vsel %vm1787, %v1789, %v1785
    %v1791 = vmul.f32 1.0, %v1790
    %v1792 = vrcp.pop %v1776
    %v1793 = vmul.f32 %v1776, %v1792
    %v1794 = vsub.f32 1.0, %v1793
    %v1795 = vmul.f32 %v1792, %v1794
    %v1796 = vadd.f32 %v1792, %v1795
    %vm1797 = vweird.f32 %v1776
    %vm1798 = vweird.f32 %v1792
    %vm1799 = vmor %vm1797, %vm1798
    %v1800 = vsel %vm1799, %v1792, %v1796
    %v1801 = vand.u32 2147483647, %v1776
    %vm1802 = vcmp.eq.f32.partialorder %v1801, 8.507059e+37
    %v1803 = vand.u32 %v1776, 2147483648
    %v1804 = vor.u32 1.1754944e-38, %v1803
    %v1805 = vsel %vm1802, %v1804, %v1800
    %v1806 = vmul.f32 1.0, %v1805
    %v1807 = vtanh.pop %v1768
    %v1808 = vmul.f32 %v1791, %v1711
    %1810 = vrot.lane.b32.xlu0 %v1807, 64
    %v1811 = vpop.permute.xlu0 %1810
    %v1813 = vmul.f32 %v1791, %v1811
    %1815 = vrot.lane.b32.xlu0 %v1813, 64
    %v1816 = vpop.permute.xlu0 %1815
    %v1818 = vadd.f32 %v1808, %v1816
    %v1819 = vtanh.pop %v1818
    %1821 = vrot.lane.b32.xlu0 %v1819, 64
    %v1822 = vpop.permute.xlu0 %1821
    %v1824 = vmul.f32 %v1806, %v1822
    %s1825 = scalar_lea.vmem [#allocation5], 16
    %1826 = vst.msk [vmem:[%s1825] sm:$0xff] %vm483, %v1824
    %s1827 = smul.addr %s802, 8
    %s1828 = scalar_lea.vmem [#allocation3], %s1827
    %v1829 = vld [vmem:[%s1828] sm:$0xff]
    %v1830 = vld [vmem:[%s1828 + $0x8] sm:$0xff]
    %v1832 = vsel %vm483, %v1824, 0
    %1834 = vmatpush.msra.mxu0 0.0
    %1835 = vmatpush.msra.mxu0 0.0
    %1836 = vmatpush.msra.mxu0 0.0
    %1837 = vmatpush.msra.mxu0 0.0
    %1838 = vmatpush.msra.mxu0 0.0
    %1839 = vmatpush.msra.mxu0 0.0
    %1840 = vmatpush.msra.mxu0 0.0
    %1841 = vmatpush.msra.mxu0 0.0
    %1842 = vmatpush.msra.mxu0 %v1508
    %1843 = vmatpush.msra.mxu0 %v1506
    %1844 = vmatpush.msra.mxu0 %v1504
    %1845 = vmatpush.msra.mxu0 %v1502
    %1846 = vmatpush.msra.mxu0 %v1500
    %1847 = vmatpush.msra.mxu0 %v1498
    %1848 = vmatpush.msra.mxu0 %v1496
    %1849 = vmatpush.msra.mxu0 %v1494
    %1850 = vmatmul.f32.gmra.mxu0 %v1832
    %v1851 = vpop.f32.mrf.mxu0
    %v1852 = vadd.f32 0.0, %v1851
    %1853 = vdwg.mxu0
    %1854 = vmatpush.msra.mxu0 0.0
    %1855 = vmatpush.msra.mxu0 0.0
    %1856 = vmatpush.msra.mxu0 0.0
    %1857 = vmatpush.msra.mxu0 0.0
    %1858 = vmatpush.msra.mxu0 0.0
    %1859 = vmatpush.msra.mxu0 0.0
    %1860 = vmatpush.msra.mxu0 0.0
    %1861 = vmatpush.msra.mxu0 0.0
    %1862 = vmatpush.msra.mxu0 %v1509
    %1863 = vmatpush.msra.mxu0 %v1507
    %1864 = vmatpush.msra.mxu0 %v1505
    %1865 = vmatpush.msra.mxu0 %v1503
    %1866 = vmatpush.msra.mxu0 %v1501
    %1867 = vmatpush.msra.mxu0 %v1499
    %1868 = vmatpush.msra.mxu0 %v1497
    %1869 = vmatpush.msra.mxu0 %v1495
    %1870 = vmatmul.f32.gmra.mxu0 %v1832
    %v1871 = vpop.f32.mrf.mxu0
    %v1872 = vadd.f32 0.0, %v1871
    %1873 = vdwg.mxu0
    %v1874 = vadd.f32 %v1829, %v1852
    %v1875 = vadd.f32 %v1830, %v1872
    %v1876 = vxor.u32 %v1874, 2147483648
    %v1877 = vxor.u32 %v1875, 2147483648
    %v1878 = vmul.f32 %v1876, 1.442695
    %v1879 = vpow.pop %v1878
    %v1880 = vmul.f32 %v1877, 1.442695
    %v1881 = vpow.pop %v1880
    %v1882 = vadd.f32 %v1879, 1.0
    %v1883 = vadd.f32 %v1881, 1.0
    %v1884 = vrcp.pop %v1882
    %v1885 = vmul.f32 %v1882, %v1884
    %v1886 = vsub.f32 1.0, %v1885
    %v1887 = vmul.f32 %v1884, %v1886
    %v1888 = vadd.f32 %v1884, %v1887
    %vm1889 = vweird.f32 %v1882
    %vm1890 = vweird.f32 %v1884
    %vm1891 = vmor %vm1889, %vm1890
    %v1892 = vsel %vm1891, %v1884, %v1888
    %v1893 = vand.u32 2147483647, %v1882
    %vm1894 = vcmp.eq.f32.partialorder %v1893, 8.507059e+37
    %v1895 = vand.u32 %v1882, 2147483648
    %v1896 = vor.u32 1.1754944e-38, %v1895
    %v1897 = vsel %vm1894, %v1896, %v1892
    %v1898 = vmul.f32 1.0, %v1897
    %v1899 = vrcp.pop %v1883
    %v1900 = vmul.f32 %v1883, %v1899
    %v1901 = vsub.f32 1.0, %v1900
    %v1902 = vmul.f32 %v1899, %v1901
    %v1903 = vadd.f32 %v1899, %v1902
    %vm1904 = vweird.f32 %v1883
    %vm1905 = vweird.f32 %v1899
    %vm1906 = vmor %vm1904, %vm1905
    %v1907 = vsel %vm1906, %v1899, %v1903
    %v1908 = vand.u32 2147483647, %v1883
    %vm1909 = vcmp.eq.f32.partialorder %v1908, 8.507059e+37
    %v1910 = vand.u32 %v1883, 2147483648
    %v1911 = vor.u32 1.1754944e-38, %v1910
    %v1912 = vsel %vm1909, %v1911, %v1907
    %v1913 = vmul.f32 1.0, %v1912
    %v1914 = vtanh.pop %v1875
    %v1915 = vmul.f32 %v1898, %v1818
    %1917 = vrot.lane.b32.xlu0 %v1914, 64
    %v1918 = vpop.permute.xlu0 %1917
    %v1920 = vmul.f32 %v1898, %v1918
    %1922 = vrot.lane.b32.xlu0 %v1920, 64
    %v1923 = vpop.permute.xlu0 %1922
    %v1925 = vadd.f32 %v1915, %v1923
    %v1926 = vtanh.pop %v1925
    %1928 = vrot.lane.b32.xlu0 %v1926, 64
    %v1929 = vpop.permute.xlu0 %1928
    %v1931 = vmul.f32 %v1913, %v1929
    %s1932 = scalar_lea.vmem [#allocation5], 24
    %1933 = vst.msk [vmem:[%s1932] sm:$0xff] %vm483, %v1931
    %s1934 = smul.addr %s910, 8
    %s1935 = scalar_lea.vmem [#allocation3], %s1934
    %v1936 = vld [vmem:[%s1935] sm:$0xff]
    %v1937 = vld [vmem:[%s1935 + $0x8] sm:$0xff]
    %v1939 = vsel %vm483, %v1931, 0
    %1941 = vmatpush.msra.mxu0 0.0
    %1942 = vmatpush.msra.mxu0 0.0
    %1943 = vmatpush.msra.mxu0 0.0
    %1944 = vmatpush.msra.mxu0 0.0
    %1945 = vmatpush.msra.mxu0 0.0
    %1946 = vmatpush.msra.mxu0 0.0
    %1947 = vmatpush.msra.mxu0 0.0
    %1948 = vmatpush.msra.mxu0 0.0
    %1949 = vmatpush.msra.mxu0 %v1508
    %1950 = vmatpush.msra.mxu0 %v1506
    %1951 = vmatpush.msra.mxu0 %v1504
    %1952 = vmatpush.msra.mxu0 %v1502
    %1953 = vmatpush.msra.mxu0 %v1500
    %1954 = vmatpush.msra.mxu0 %v1498
    %1955 = vmatpush.msra.mxu0 %v1496
    %1956 = vmatpush.msra.mxu0 %v1494
    %1957 = vmatmul.f32.gmra.mxu0 %v1939
    %v1958 = vpop.f32.mrf.mxu0
    %v1959 = vadd.f32 0.0, %v1958
    %1960 = vdwg.mxu0
    %1961 = vmatpush.msra.mxu0 0.0
    %1962 = vmatpush.msra.mxu0 0.0
    %1963 = vmatpush.msra.mxu0 0.0
    %1964 = vmatpush.msra.mxu0 0.0
    %1965 = vmatpush.msra.mxu0 0.0
    %1966 = vmatpush.msra.mxu0 0.0
    %1967 = vmatpush.msra.mxu0 0.0
    %1968 = vmatpush.msra.mxu0 0.0
    %1969 = vmatpush.msra.mxu0 %v1509
    %1970 = vmatpush.msra.mxu0 %v1507
    %1971 = vmatpush.msra.mxu0 %v1505
    %1972 = vmatpush.msra.mxu0 %v1503
    %1973 = vmatpush.msra.mxu0 %v1501
    %1974 = vmatpush.msra.mxu0 %v1499
    %1975 = vmatpush.msra.mxu0 %v1497
    %1976 = vmatpush.msra.mxu0 %v1495
    %1977 = vmatmul.f32.gmra.mxu0 %v1939
    %v1978 = vpop.f32.mrf.mxu0
    %v1979 = vadd.f32 0.0, %v1978
    %1980 = vdwg.mxu0
    %v1981 = vadd.f32 %v1936, %v1959
    %v1982 = vadd.f32 %v1937, %v1979
    %v1983 = vxor.u32 %v1981, 2147483648
    %v1984 = vxor.u32 %v1982, 2147483648
    %v1985 = vmul.f32 %v1983, 1.442695
    %v1986 = vpow.pop %v1985
    %v1987 = vmul.f32 %v1984, 1.442695
    %v1988 = vpow.pop %v1987
    %v1989 = vadd.f32 %v1986, 1.0
    %v1990 = vadd.f32 %v1988, 1.0
    %v1991 = vrcp.pop %v1989
    %v1992 = vmul.f32 %v1989, %v1991
    %v1993 = vsub.f32 1.0, %v1992
    %v1994 = vmul.f32 %v1991, %v1993
    %v1995 = vadd.f32 %v1991, %v1994
    %vm1996 = vweird.f32 %v1989
    %vm1997 = vweird.f32 %v1991
    %vm1998 = vmor %vm1996, %vm1997
    %v1999 = vsel %vm1998, %v1991, %v1995
    %v2000 = vand.u32 2147483647, %v1989
    %vm2001 = vcmp.eq.f32.partialorder %v2000, 8.507059e+37
    %v2002 = vand.u32 %v1989, 2147483648
    %v2003 = vor.u32 1.1754944e-38, %v2002
    %v2004 = vsel %vm2001, %v2003, %v1999
    %v2005 = vmul.f32 1.0, %v2004
    %v2006 = vrcp.pop %v1990
    %v2007 = vmul.f32 %v1990, %v2006
    %v2008 = vsub.f32 1.0, %v2007
    %v2009 = vmul.f32 %v2006, %v2008
    %v2010 = vadd.f32 %v2006, %v2009
    %vm2011 = vweird.f32 %v1990
    %vm2012 = vweird.f32 %v2006
    %vm2013 = vmor %vm2011, %vm2012
    %v2014 = vsel %vm2013, %v2006, %v2010
    %v2015 = vand.u32 2147483647, %v1990
    %vm2016 = vcmp.eq.f32.partialorder %v2015, 8.507059e+37
    %v2017 = vand.u32 %v1990, 2147483648
    %v2018 = vor.u32 1.1754944e-38, %v2017
    %v2019 = vsel %vm2016, %v2018, %v2014
    %v2020 = vmul.f32 1.0, %v2019
    %v2021 = vtanh.pop %v1982
    %v2022 = vmul.f32 %v2005, %v1925
    %2024 = vrot.lane.b32.xlu0 %v2021, 64
    %v2025 = vpop.permute.xlu0 %2024
    %v2027 = vmul.f32 %v2005, %v2025
    %2029 = vrot.lane.b32.xlu0 %v2027, 64
    %v2030 = vpop.permute.xlu0 %2029
    %v2032 = vadd.f32 %v2022, %v2030
    %v2033 = vtanh.pop %v2032
    %2035 = vrot.lane.b32.xlu0 %v2033, 64
    %v2036 = vpop.permute.xlu0 %2035
    %v2038 = vmul.f32 %v2020, %v2036
    %s2039 = scalar_lea.vmem [#allocation5], 32
    %2040 = vst.msk [vmem:[%s2039] sm:$0xff] %vm483, %v2038
    %s2041 = smul.addr %s1018, 8
    %s2042 = scalar_lea.vmem [#allocation3], %s2041
    %v2043 = vld [vmem:[%s2042] sm:$0xff]
    %v2044 = vld [vmem:[%s2042 + $0x8] sm:$0xff]
    %v2046 = vsel %vm483, %v2038, 0
    %2048 = vmatpush.msra.mxu0 0.0
    %2049 = vmatpush.msra.mxu0 0.0
    %2050 = vmatpush.msra.mxu0 0.0
    %2051 = vmatpush.msra.mxu0 0.0
    %2052 = vmatpush.msra.mxu0 0.0
    %2053 = vmatpush.msra.mxu0 0.0
    %2054 = vmatpush.msra.mxu0 0.0
    %2055 = vmatpush.msra.mxu0 0.0
    %2056 = vmatpush.msra.mxu0 %v1508
    %2057 = vmatpush.msra.mxu0 %v1506
    %2058 = vmatpush.msra.mxu0 %v1504
    %2059 = vmatpush.msra.mxu0 %v1502
    %2060 = vmatpush.msra.mxu0 %v1500
    %2061 = vmatpush.msra.mxu0 %v1498
    %2062 = vmatpush.msra.mxu0 %v1496
    %2063 = vmatpush.msra.mxu0 %v1494
    %2064 = vmatmul.f32.gmra.mxu0 %v2046
    %v2065 = vpop.f32.mrf.mxu0
    %v2066 = vadd.f32 0.0, %v2065
    %2067 = vdwg.mxu0
    %2068 = vmatpush.msra.mxu0 0.0
    %2069 = vmatpush.msra.mxu0 0.0
    %2070 = vmatpush.msra.mxu0 0.0
    %2071 = vmatpush.msra.mxu0 0.0
    %2072 = vmatpush.msra.mxu0 0.0
    %2073 = vmatpush.msra.mxu0 0.0
    %2074 = vmatpush.msra.mxu0 0.0
    %2075 = vmatpush.msra.mxu0 0.0
    %2076 = vmatpush.msra.mxu0 %v1509
    %2077 = vmatpush.msra.mxu0 %v1507
    %2078 = vmatpush.msra.mxu0 %v1505
    %2079 = vmatpush.msra.mxu0 %v1503
    %2080 = vmatpush.msra.mxu0 %v1501
    %2081 = vmatpush.msra.mxu0 %v1499
    %2082 = vmatpush.msra.mxu0 %v1497
    %2083 = vmatpush.msra.mxu0 %v1495
    %2084 = vmatmul.f32.gmra.mxu0 %v2046
    %v2085 = vpop.f32.mrf.mxu0
    %v2086 = vadd.f32 0.0, %v2085
    %2087 = vdwg.mxu0
    %v2088 = vadd.f32 %v2043, %v2066
    %v2089 = vadd.f32 %v2044, %v2086
    %v2090 = vxor.u32 %v2088, 2147483648
    %v2091 = vxor.u32 %v2089, 2147483648
    %v2092 = vmul.f32 %v2090, 1.442695
    %v2093 = vpow.pop %v2092
    %v2094 = vmul.f32 %v2091, 1.442695
    %v2095 = vpow.pop %v2094
    %v2096 = vadd.f32 %v2093, 1.0
    %v2097 = vadd.f32 %v2095, 1.0
    %v2098 = vrcp.pop %v2096
    %v2099 = vmul.f32 %v2096, %v2098
    %v2100 = vsub.f32 1.0, %v2099
    %v2101 = vmul.f32 %v2098, %v2100
    %v2102 = vadd.f32 %v2098, %v2101
    %vm2103 = vweird.f32 %v2096
    %vm2104 = vweird.f32 %v2098
    %vm2105 = vmor %vm2103, %vm2104
    %v2106 = vsel %vm2105, %v2098, %v2102
    %v2107 = vand.u32 2147483647, %v2096
    %vm2108 = vcmp.eq.f32.partialorder %v2107, 8.507059e+37
    %v2109 = vand.u32 %v2096, 2147483648
    %v2110 = vor.u32 1.1754944e-38, %v2109
    %v2111 = vsel %vm2108, %v2110, %v2106
    %v2112 = vmul.f32 1.0, %v2111
    %v2113 = vrcp.pop %v2097
    %v2114 = vmul.f32 %v2097, %v2113
    %v2115 = vsub.f32 1.0, %v2114
    %v2116 = vmul.f32 %v2113, %v2115
    %v2117 = vadd.f32 %v2113, %v2116
    %vm2118 = vweird.f32 %v2097
    %vm2119 = vweird.f32 %v2113
    %vm2120 = vmor %vm2118, %vm2119
    %v2121 = vsel %vm2120, %v2113, %v2117
    %v2122 = vand.u32 2147483647, %v2097
    %vm2123 = vcmp.eq.f32.partialorder %v2122, 8.507059e+37
    %v2124 = vand.u32 %v2097, 2147483648
    %v2125 = vor.u32 1.1754944e-38, %v2124
    %v2126 = vsel %vm2123, %v2125, %v2121
    %v2127 = vmul.f32 1.0, %v2126
    %v2128 = vtanh.pop %v2089
    %v2129 = vmul.f32 %v2112, %v2032
    %2131 = vrot.lane.b32.xlu0 %v2128, 64
    %v2132 = vpop.permute.xlu0 %2131
    %v2134 = vmul.f32 %v2112, %v2132
    %2136 = vrot.lane.b32.xlu0 %v2134, 64
    %v2137 = vpop.permute.xlu0 %2136
    %v2139 = vadd.f32 %v2129, %v2137
    %v2140 = vtanh.pop %v2139
    %2142 = vrot.lane.b32.xlu0 %v2140, 64
    %v2143 = vpop.permute.xlu0 %2142
    %v2145 = vmul.f32 %v2127, %v2143
    %s2146 = scalar_lea.vmem [#allocation5], 40
    %2147 = vst.msk [vmem:[%s2146] sm:$0xff] %vm483, %v2145
    %s2148 = smul.addr %s1126, 8
    %s2149 = scalar_lea.vmem [#allocation3], %s2148
    %v2150 = vld [vmem:[%s2149] sm:$0xff]
    %v2151 = vld [vmem:[%s2149 + $0x8] sm:$0xff]
    %v2153 = vsel %vm483, %v2145, 0
    %2155 = vmatpush.msra.mxu0 0.0
    %2156 = vmatpush.msra.mxu0 0.0
    %2157 = vmatpush.msra.mxu0 0.0
    %2158 = vmatpush.msra.mxu0 0.0
    %2159 = vmatpush.msra.mxu0 0.0
    %2160 = vmatpush.msra.mxu0 0.0
    %2161 = vmatpush.msra.mxu0 0.0
    %2162 = vmatpush.msra.mxu0 0.0
    %2163 = vmatpush.msra.mxu0 %v1508
    %2164 = vmatpush.msra.mxu0 %v1506
    %2165 = vmatpush.msra.mxu0 %v1504
    %2166 = vmatpush.msra.mxu0 %v1502
    %2167 = vmatpush.msra.mxu0 %v1500
    %2168 = vmatpush.msra.mxu0 %v1498
    %2169 = vmatpush.msra.mxu0 %v1496
    %2170 = vmatpush.msra.mxu0 %v1494
    %2171 = vmatmul.f32.gmra.mxu0 %v2153
    %v2172 = vpop.f32.mrf.mxu0
    %v2173 = vadd.f32 0.0, %v2172
    %2174 = vdwg.mxu0
    %2175 = vmatpush.msra.mxu0 0.0
    %2176 = vmatpush.msra.mxu0 0.0
    %2177 = vmatpush.msra.mxu0 0.0
    %2178 = vmatpush.msra.mxu0 0.0
    %2179 = vmatpush.msra.mxu0 0.0
    %2180 = vmatpush.msra.mxu0 0.0
    %2181 = vmatpush.msra.mxu0 0.0
    %2182 = vmatpush.msra.mxu0 0.0
    %2183 = vmatpush.msra.mxu0 %v1509
    %2184 = vmatpush.msra.mxu0 %v1507
    %2185 = vmatpush.msra.mxu0 %v1505
    %2186 = vmatpush.msra.mxu0 %v1503
    %2187 = vmatpush.msra.mxu0 %v1501
    %2188 = vmatpush.msra.mxu0 %v1499
    %2189 = vmatpush.msra.mxu0 %v1497
    %2190 = vmatpush.msra.mxu0 %v1495
    %2191 = vmatmul.f32.gmra.mxu0 %v2153
    %v2192 = vpop.f32.mrf.mxu0
    %v2193 = vadd.f32 0.0, %v2192
    %2194 = vdwg.mxu0
    %v2195 = vadd.f32 %v2150, %v2173
    %v2196 = vadd.f32 %v2151, %v2193
    %v2197 = vxor.u32 %v2195, 2147483648
    %v2198 = vxor.u32 %v2196, 2147483648
    %v2199 = vmul.f32 %v2197, 1.442695
    %v2200 = vpow.pop %v2199
    %v2201 = vmul.f32 %v2198, 1.442695
    %v2202 = vpow.pop %v2201
    %v2203 = vadd.f32 %v2200, 1.0
    %v2204 = vadd.f32 %v2202, 1.0
    %v2205 = vrcp.pop %v2203
    %v2206 = vmul.f32 %v2203, %v2205
    %v2207 = vsub.f32 1.0, %v2206
    %v2208 = vmul.f32 %v2205, %v2207
    %v2209 = vadd.f32 %v2205, %v2208
    %vm2210 = vweird.f32 %v2203
    %vm2211 = vweird.f32 %v2205
    %vm2212 = vmor %vm2210, %vm2211
    %v2213 = vsel %vm2212, %v2205, %v2209
    %v2214 = vand.u32 2147483647, %v2203
    %vm2215 = vcmp.eq.f32.partialorder %v2214, 8.507059e+37
    %v2216 = vand.u32 %v2203, 2147483648
    %v2217 = vor.u32 1.1754944e-38, %v2216
    %v2218 = vsel %vm2215, %v2217, %v2213
    %v2219 = vmul.f32 1.0, %v2218
    %v2220 = vrcp.pop %v2204
    %v2221 = vmul.f32 %v2204, %v2220
    %v2222 = vsub.f32 1.0, %v2221
    %v2223 = vmul.f32 %v2220, %v2222
    %v2224 = vadd.f32 %v2220, %v2223
    %vm2225 = vweird.f32 %v2204
    %vm2226 = vweird.f32 %v2220
    %vm2227 = vmor %vm2225, %vm2226
    %v2228 = vsel %vm2227, %v2220, %v2224
    %v2229 = vand.u32 2147483647, %v2204
    %vm2230 = vcmp.eq.f32.partialorder %v2229, 8.507059e+37
    %v2231 = vand.u32 %v2204, 2147483648
    %v2232 = vor.u32 1.1754944e-38, %v2231
    %v2233 = vsel %vm2230, %v2232, %v2228
    %v2234 = vmul.f32 1.0, %v2233
    %v2235 = vtanh.pop %v2196
    %v2236 = vmul.f32 %v2219, %v2139
    %2238 = vrot.lane.b32.xlu0 %v2235, 64
    %v2239 = vpop.permute.xlu0 %2238
    %v2241 = vmul.f32 %v2219, %v2239
    %2243 = vrot.lane.b32.xlu0 %v2241, 64
    %v2244 = vpop.permute.xlu0 %2243
    %v2246 = vadd.f32 %v2236, %v2244
    %v2247 = vtanh.pop %v2246
    %2249 = vrot.lane.b32.xlu0 %v2247, 64
    %v2250 = vpop.permute.xlu0 %2249
    %v2252 = vmul.f32 %v2234, %v2250
    %s2253 = scalar_lea.vmem [#allocation5], 48
    %2254 = vst.msk [vmem:[%s2253] sm:$0xff] %vm483, %v2252
    %s2255 = smul.addr %s1234, 8
    %s2256 = scalar_lea.vmem [#allocation3], %s2255
    %v2257 = vld [vmem:[%s2256] sm:$0xff]
    %v2258 = vld [vmem:[%s2256 + $0x8] sm:$0xff]
    %v2260 = vsel %vm483, %v2252, 0
    %2262 = vmatpush.msra.mxu0 0.0
    %2263 = vmatpush.msra.mxu0 0.0
    %2264 = vmatpush.msra.mxu0 0.0
    %2265 = vmatpush.msra.mxu0 0.0
    %2266 = vmatpush.msra.mxu0 0.0
    %2267 = vmatpush.msra.mxu0 0.0
    %2268 = vmatpush.msra.mxu0 0.0
    %2269 = vmatpush.msra.mxu0 0.0
    %2270 = vmatpush.msra.mxu0 %v1508
    %2271 = vmatpush.msra.mxu0 %v1506
    %2272 = vmatpush.msra.mxu0 %v1504
    %2273 = vmatpush.msra.mxu0 %v1502
    %2274 = vmatpush.msra.mxu0 %v1500
    %2275 = vmatpush.msra.mxu0 %v1498
    %2276 = vmatpush.msra.mxu0 %v1496
    %2277 = vmatpush.msra.mxu0 %v1494
    %2278 = vmatmul.f32.gmra.mxu0 %v2260
    %v2279 = vpop.f32.mrf.mxu0
    %v2280 = vadd.f32 0.0, %v2279
    %2281 = vdwg.mxu0
    %2282 = vmatpush.msra.mxu0 0.0
    %2283 = vmatpush.msra.mxu0 0.0
    %2284 = vmatpush.msra.mxu0 0.0
    %2285 = vmatpush.msra.mxu0 0.0
    %2286 = vmatpush.msra.mxu0 0.0
    %2287 = vmatpush.msra.mxu0 0.0
    %2288 = vmatpush.msra.mxu0 0.0
    %2289 = vmatpush.msra.mxu0 0.0
    %2290 = vmatpush.msra.mxu0 %v1509
    %2291 = vmatpush.msra.mxu0 %v1507
    %2292 = vmatpush.msra.mxu0 %v1505
    %2293 = vmatpush.msra.mxu0 %v1503
    %2294 = vmatpush.msra.mxu0 %v1501
    %2295 = vmatpush.msra.mxu0 %v1499
    %2296 = vmatpush.msra.mxu0 %v1497
    %2297 = vmatpush.msra.mxu0 %v1495
    %2298 = vmatmul.f32.gmra.mxu0 %v2260
    %v2299 = vpop.f32.mrf.mxu0
    %v2300 = vadd.f32 0.0, %v2299
    %2301 = vdwg.mxu0
    %v2302 = vadd.f32 %v2257, %v2280
    %v2303 = vadd.f32 %v2258, %v2300
    %v2304 = vxor.u32 %v2302, 2147483648
    %v2305 = vxor.u32 %v2303, 2147483648
    %v2306 = vmul.f32 %v2304, 1.442695
    %v2307 = vpow.pop %v2306
    %v2308 = vmul.f32 %v2305, 1.442695
    %v2309 = vpow.pop %v2308
    %v2310 = vadd.f32 %v2307, 1.0
    %v2311 = vadd.f32 %v2309, 1.0
    %v2312 = vrcp.pop %v2310
    %v2313 = vmul.f32 %v2310, %v2312
    %v2314 = vsub.f32 1.0, %v2313
    %v2315 = vmul.f32 %v2312, %v2314
    %v2316 = vadd.f32 %v2312, %v2315
    %vm2317 = vweird.f32 %v2310
    %vm2318 = vweird.f32 %v2312
    %vm2319 = vmor %vm2317, %vm2318
    %v2320 = vsel %vm2319, %v2312, %v2316
    %v2321 = vand.u32 2147483647, %v2310
    %vm2322 = vcmp.eq.f32.partialorder %v2321, 8.507059e+37
    %v2323 = vand.u32 %v2310, 2147483648
    %v2324 = vor.u32 1.1754944e-38, %v2323
    %v2325 = vsel %vm2322, %v2324, %v2320
    %v2326 = vmul.f32 1.0, %v2325
    %v2327 = vrcp.pop %v2311
    %v2328 = vmul.f32 %v2311, %v2327
    %v2329 = vsub.f32 1.0, %v2328
    %v2330 = vmul.f32 %v2327, %v2329
    %v2331 = vadd.f32 %v2327, %v2330
    %vm2332 = vweird.f32 %v2311
    %vm2333 = vweird.f32 %v2327
    %vm2334 = vmor %vm2332, %vm2333
    %v2335 = vsel %vm2334, %v2327, %v2331
    %v2336 = vand.u32 2147483647, %v2311
    %vm2337 = vcmp.eq.f32.partialorder %v2336, 8.507059e+37
    %v2338 = vand.u32 %v2311, 2147483648
    %v2339 = vor.u32 1.1754944e-38, %v2338
    %v2340 = vsel %vm2337, %v2339, %v2335
    %v2341 = vmul.f32 1.0, %v2340
    %v2342 = vtanh.pop %v2303
    %v2343 = vmul.f32 %v2326, %v2246
    %2345 = vrot.lane.b32.xlu0 %v2342, 64
    %v2346 = vpop.permute.xlu0 %2345
    %v2348 = vmul.f32 %v2326, %v2346
    %2350 = vrot.lane.b32.xlu0 %v2348, 64
    %v2351 = vpop.permute.xlu0 %2350
    %v2353 = vadd.f32 %v2343, %v2351
    %v2354 = vtanh.pop %v2353
    %2356 = vrot.lane.b32.xlu0 %v2354, 64
    %v2357 = vpop.permute.xlu0 %2356
    %v2359 = vmul.f32 %v2341, %v2357
    %s2360 = scalar_lea.vmem [#allocation5], 56
    %2361 = vst.msk [vmem:[%s2360] sm:$0xff] %vm483, %v2359
    %v2362 = vld [vmem:[#allocation5] sm:$0xff]
    %v2363 = vld [vmem:[#allocation5 + $0x8] sm:$0xff]
    %v2364 = vld [vmem:[#allocation5 + $0x10] sm:$0xff]
    %v2365 = vld [vmem:[#allocation5 + $0x18] sm:$0xff]
    %v2366 = vld [vmem:[#allocation5 + $0x20] sm:$0xff]
    %v2367 = vld [vmem:[#allocation5 + $0x28] sm:$0xff]
    %v2368 = vld [vmem:[#allocation5 + $0x30] sm:$0xff]
    %v2369 = vld [vmem:[#allocation5 + $0x38] sm:$0xff]
    %v2370 = vld [vmem:[#allocation14] sm:$0xff]
    %v2371 = vld [vmem:[#allocation14 + $0x8] sm:$0xff]
    %v2372 = vld [vmem:[#allocation14 + $0x10] sm:$0xff]
    %v2373 = vld [vmem:[#allocation14 + $0x18] sm:$0xff]
    %v2374 = vld [vmem:[#allocation14 + $0x20] sm:$0xff]
    %v2375 = vld [vmem:[#allocation14 + $0x28] sm:$0xff]
    %v2376 = vld [vmem:[#allocation14 + $0x30] sm:$0xff]
    %v2377 = vld [vmem:[#allocation14 + $0x38] sm:$0xff]
    %v2378 = vld [vmem:[%s12] sm:$0x1]
    %v2380 = vperm.slane %v2378, 0
    %v2383 = vsel %vm483, %v2362, 0
    %v2386 = vsel %vm483, %v2363, 0
    %v2389 = vsel %vm483, %v2364, 0
    %v2392 = vsel %vm483, %v2365, 0
    %v2395 = vsel %vm483, %v2366, 0
    %v2398 = vsel %vm483, %v2367, 0
    %v2401 = vsel %vm483, %v2368, 0
    %v2404 = vsel %vm483, %v2369, 0
    %2406 = vmatpush.msra.mxu0 0.0
    %2407 = vmatpush.msra.mxu0 0.0
    %2408 = vmatpush.msra.mxu0 0.0
    %2409 = vmatpush.msra.mxu0 0.0
    %2410 = vmatpush.msra.mxu0 0.0
    %2411 = vmatpush.msra.mxu0 0.0
    %2412 = vmatpush.msra.mxu0 0.0
    %2413 = vmatpush.msra.mxu0 0.0
    %2414 = vmatpush.msra.mxu0 %v2377
    %2415 = vmatpush.msra.mxu0 %v2376
    %2416 = vmatpush.msra.mxu0 %v2375
    %2417 = vmatpush.msra.mxu0 %v2374
    %2418 = vmatpush.msra.mxu0 %v2373
    %2419 = vmatpush.msra.mxu0 %v2372
    %2420 = vmatpush.msra.mxu0 %v2371
    %2421 = vmatpush.msra.mxu0 %v2370
    %2422 = vmatmul.f32.gmra.mxu0 %v2383
    %v2423 = vpop.f32.mrf.mxu0
    %v2424 = vadd.f32 %v2380, %v2423
    %2425 = vmatmul.f32.gmra.mxu0 %v2386
    %v2426 = vpop.f32.mrf.mxu0
    %v2427 = vadd.f32 %v2380, %v2426
    %2428 = vmatmul.f32.gmra.mxu0 %v2389
    %v2429 = vpop.f32.mrf.mxu0
    %v2430 = vadd.f32 %v2380, %v2429
    %2431 = vmatmul.f32.gmra.mxu0 %v2392
    %v2432 = vpop.f32.mrf.mxu0
    %v2433 = vadd.f32 %v2380, %v2432
    %2434 = vmatmul.f32.gmra.mxu0 %v2395
    %v2435 = vpop.f32.mrf.mxu0
    %v2436 = vadd.f32 %v2380, %v2435
    %2437 = vmatmul.f32.gmra.mxu0 %v2398
    %v2438 = vpop.f32.mrf.mxu0
    %v2439 = vadd.f32 %v2380, %v2438
    %2440 = vmatmul.f32.gmra.mxu0 %v2401
    %v2441 = vpop.f32.mrf.mxu0
    %v2442 = vadd.f32 %v2380, %v2441
    %2443 = vmatmul.f32.gmra.mxu0 %v2404
    %v2444 = vpop.f32.mrf.mxu0
    %v2445 = vadd.f32 %v2380, %v2444
    %2446 = vdwg.mxu0
    %v2447 = vld [vmem:[#allocation15] sm:$0xff]
    %v2448 = vld [vmem:[#allocation15 + $0x8] sm:$0xff]
    %v2449 = vld [vmem:[#allocation15 + $0x10] sm:$0xff]
    %v2450 = vld [vmem:[#allocation15 + $0x18] sm:$0xff]
    %v2451 = vld [vmem:[#allocation15 + $0x20] sm:$0xff]
    %v2452 = vld [vmem:[#allocation15 + $0x28] sm:$0xff]
    %v2453 = vld [vmem:[#allocation15 + $0x30] sm:$0xff]
    %v2454 = vld [vmem:[#allocation15 + $0x38] sm:$0xff]
    %v2455 = vld [vmem:[%s14] sm:$0x1]
    %v2457 = vperm.slane %v2455, 0
    %2459 = vmatpush.msra.mxu0 0.0
    %2460 = vmatpush.msra.mxu0 0.0
    %2461 = vmatpush.msra.mxu0 0.0
    %2462 = vmatpush.msra.mxu0 0.0
    %2463 = vmatpush.msra.mxu0 0.0
    %2464 = vmatpush.msra.mxu0 0.0
    %2465 = vmatpush.msra.mxu0 0.0
    %2466 = vmatpush.msra.mxu0 0.0
    %2467 = vmatpush.msra.mxu0 %v2454
    %2468 = vmatpush.msra.mxu0 %v2453
    %2469 = vmatpush.msra.mxu0 %v2452
    %2470 = vmatpush.msra.mxu0 %v2451
    %2471 = vmatpush.msra.mxu0 %v2450
    %2472 = vmatpush.msra.mxu0 %v2449
    %2473 = vmatpush.msra.mxu0 %v2448
    %2474 = vmatpush.msra.mxu0 %v2447
    %2475 = vmatmul.f32.gmra.mxu0 %v2383
    %v2476 = vpop.f32.mrf.mxu0
    %v2477 = vadd.f32 %v2457, %v2476
    %2478 = vmatmul.f32.gmra.mxu0 %v2386
    %v2479 = vpop.f32.mrf.mxu0
    %v2480 = vadd.f32 %v2457, %v2479
    %2481 = vmatmul.f32.gmra.mxu0 %v2389
    %v2482 = vpop.f32.mrf.mxu0
    %v2483 = vadd.f32 %v2457, %v2482
    %2484 = vmatmul.f32.gmra.mxu0 %v2392
    %v2485 = vpop.f32.mrf.mxu0
    %v2486 = vadd.f32 %v2457, %v2485
    %2487 = vmatmul.f32.gmra.mxu0 %v2395
    %v2488 = vpop.f32.mrf.mxu0
    %v2489 = vadd.f32 %v2457, %v2488
    %2490 = vmatmul.f32.gmra.mxu0 %v2398
    %v2491 = vpop.f32.mrf.mxu0
    %v2492 = vadd.f32 %v2457, %v2491
    %2493 = vmatmul.f32.gmra.mxu0 %v2401
    %v2494 = vpop.f32.mrf.mxu0
    %v2495 = vadd.f32 %v2457, %v2494
    %2496 = vmatmul.f32.gmra.mxu0 %v2404
    %v2497 = vpop.f32.mrf.mxu0
    %v2498 = vadd.f32 %v2457, %v2497
    %2499 = vdwg.mxu0
    %v2500 = vld [vmem:[#allocation12] sm:$0xff]
    %v2501 = vld [vmem:[#allocation12 + $0x8] sm:$0xff]
    %v2502 = vld [vmem:[#allocation12 + $0x10] sm:$0xff]
    %v2503 = vld [vmem:[#allocation12 + $0x18] sm:$0xff]
    %v2504 = vld [vmem:[#allocation12 + $0x20] sm:$0xff]
    %v2505 = vld [vmem:[#allocation12 + $0x28] sm:$0xff]
    %v2506 = vld [vmem:[#allocation12 + $0x30] sm:$0xff]
    %v2507 = vld [vmem:[#allocation12 + $0x38] sm:$0xff]
    %v2508 = vld [vmem:[%s10] sm:$0x1]
    %v2510 = vperm.slane %v2508, 0
    %2512 = vmatpush.msra.mxu0 0.0
    %2513 = vmatpush.msra.mxu0 0.0
    %2514 = vmatpush.msra.mxu0 0.0
    %2515 = vmatpush.msra.mxu0 0.0
    %2516 = vmatpush.msra.mxu0 0.0
    %2517 = vmatpush.msra.mxu0 0.0
    %2518 = vmatpush.msra.mxu0 0.0
    %2519 = vmatpush.msra.mxu0 0.0
    %2520 = vmatpush.msra.mxu0 %v2507
    %2521 = vmatpush.msra.mxu0 %v2506
    %2522 = vmatpush.msra.mxu0 %v2505
    %2523 = vmatpush.msra.mxu0 %v2504
    %2524 = vmatpush.msra.mxu0 %v2503
    %2525 = vmatpush.msra.mxu0 %v2502
    %2526 = vmatpush.msra.mxu0 %v2501
    %2527 = vmatpush.msra.mxu0 %v2500
    %2528 = vmatmul.f32.gmra.mxu0 %v2404
    %v2529 = vpop.f32.mrf.mxu0
    %v2530 = vadd.f32 %v2510, %v2529
    %2531 = vdwg.mxu0
    %v2532 = vmul.f32 %v2424, %v2530
    %v2533 = vmul.f32 %v2427, %v2530
    %v2534 = vmul.f32 %v2430, %v2530
    %v2535 = vmul.f32 %v2433, %v2530
    %v2536 = vmul.f32 %v2436, %v2530
    %v2537 = vmul.f32 %v2439, %v2530
    %v2538 = vmul.f32 %v2442, %v2530
    %v2539 = vmul.f32 %v2445, %v2530
    %v2540 = vld [vmem:[#allocation18] sm:$0xff]
    %v2541 = vld [vmem:[#allocation18 + $0x8] sm:$0xff]
    %v2542 = vld [vmem:[#allocation18 + $0x10] sm:$0xff]
    %v2543 = vld [vmem:[#allocation18 + $0x18] sm:$0xff]
    %v2544 = vld [vmem:[#allocation18 + $0x20] sm:$0xff]
    %v2545 = vld [vmem:[#allocation18 + $0x28] sm:$0xff]
    %v2546 = vld [vmem:[#allocation18 + $0x30] sm:$0xff]
    %v2547 = vld [vmem:[#allocation18 + $0x38] sm:$0xff]
    %v2549 = vsel %vm483, %v2532, 0
    %v2552 = vsel %vm483, %v2533, 0
    %v2555 = vsel %vm483, %v2534, 0
    %v2558 = vsel %vm483, %v2535, 0
    %v2561 = vsel %vm483, %v2536, 0
    %v2564 = vsel %vm483, %v2537, 0
    %v2567 = vsel %vm483, %v2538, 0
    %v2570 = vsel %vm483, %v2539, 0
    %2572 = vmatpush.msra.mxu0 0.0
    %2573 = vmatpush.msra.mxu0 0.0
    %2574 = vmatpush.msra.mxu0 0.0
    %2575 = vmatpush.msra.mxu0 0.0
    %2576 = vmatpush.msra.mxu0 0.0
    %2577 = vmatpush.msra.mxu0 0.0
    %2578 = vmatpush.msra.mxu0 0.0
    %2579 = vmatpush.msra.mxu0 0.0
    %2580 = vmatpush.msra.mxu0 %v2547
    %2581 = vmatpush.msra.mxu0 %v2546
    %2582 = vmatpush.msra.mxu0 %v2545
    %2583 = vmatpush.msra.mxu0 %v2544
    %2584 = vmatpush.msra.mxu0 %v2543
    %2585 = vmatpush.msra.mxu0 %v2542
    %2586 = vmatpush.msra.mxu0 %v2541
    %2587 = vmatpush.msra.mxu0 %v2540
    %2588 = vmatmul.f32.gmra.mxu0 %v2549
    %v2589 = vpop.f32.mrf.mxu0
    %v2590 = vadd.f32 0.0, %v2589
    %2591 = vmatmul.f32.gmra.mxu0 %v2552
    %v2592 = vpop.f32.mrf.mxu0
    %v2593 = vadd.f32 0.0, %v2592
    %2594 = vmatmul.f32.gmra.mxu0 %v2555
    %v2595 = vpop.f32.mrf.mxu0
    %v2596 = vadd.f32 0.0, %v2595
    %2597 = vmatmul.f32.gmra.mxu0 %v2558
    %v2598 = vpop.f32.mrf.mxu0
    %v2599 = vadd.f32 0.0, %v2598
    %2600 = vmatmul.f32.gmra.mxu0 %v2561
    %v2601 = vpop.f32.mrf.mxu0
    %v2602 = vadd.f32 0.0, %v2601
    %2603 = vmatmul.f32.gmra.mxu0 %v2564
    %v2604 = vpop.f32.mrf.mxu0
    %v2605 = vadd.f32 0.0, %v2604
    %2606 = vmatmul.f32.gmra.mxu0 %v2567
    %v2607 = vpop.f32.mrf.mxu0
    %v2608 = vadd.f32 0.0, %v2607
    %2609 = vmatmul.f32.gmra.mxu0 %v2570
    %v2610 = vpop.f32.mrf.mxu0
    %v2611 = vadd.f32 0.0, %v2610
    %2612 = vdwg.mxu0
    %v2613 = vmax.f32 %v2590, %v2593
    %v2614 = vmax.f32 %v2613, %v2596
    %v2615 = vmax.f32 %v2614, %v2599
    %v2616 = vmax.f32 %v2615, %v2602
    %v2617 = vmax.f32 %v2616, %v2605
    %v2618 = vmax.f32 %v2617, %v2608
    %v2619 = vmax.f32 %v2618, %v2611
    %v2620 = vsub.f32 %v2590, %v2619
    %v2621 = vmul.f32 %v2620, 1.442695
    %v2622 = vpow.pop %v2621
    %v2623 = vadd.f32 %v2622, 0.0
    %v2624 = vmul.f32 %v2622, %v2477
    %v2625 = vadd.f32 %v2624, 0.0
    %v2626 = vsub.f32 %v2593, %v2619
    %v2627 = vmul.f32 %v2626, 1.442695
    %v2628 = vpow.pop %v2627
    %v2629 = vadd.f32 %v2623, %v2628
    %v2630 = vmul.f32 %v2628, %v2480
    %v2631 = vadd.f32 %v2625, %v2630
    %v2632 = vsub.f32 %v2596, %v2619
    %v2633 = vmul.f32 %v2632, 1.442695
    %v2634 = vpow.pop %v2633
    %v2635 = vadd.f32 %v2629, %v2634
    %v2636 = vmul.f32 %v2634, %v2483
    %v2637 = vadd.f32 %v2631, %v2636
    %v2638 = vsub.f32 %v2599, %v2619
    %v2639 = vmul.f32 %v2638, 1.442695
    %v2640 = vpow.pop %v2639
    %v2641 = vadd.f32 %v2635, %v2640
    %v2642 = vmul.f32 %v2640, %v2486
    %v2643 = vadd.f32 %v2637, %v2642
    %v2644 = vsub.f32 %v2602, %v2619
    %v2645 = vmul.f32 %v2644, 1.442695
    %v2646 = vpow.pop %v2645
    %v2647 = vadd.f32 %v2641, %v2646
    %v2648 = vmul.f32 %v2646, %v2489
    %v2649 = vadd.f32 %v2643, %v2648
    %v2650 = vsub.f32 %v2605, %v2619
    %v2651 = vmul.f32 %v2650, 1.442695
    %v2652 = vpow.pop %v2651
    %v2653 = vadd.f32 %v2647, %v2652
    %v2654 = vmul.f32 %v2652, %v2492
    %v2655 = vadd.f32 %v2649, %v2654
    %v2656 = vsub.f32 %v2608, %v2619
    %v2657 = vmul.f32 %v2656, 1.442695
    %v2658 = vpow.pop %v2657
    %v2659 = vadd.f32 %v2653, %v2658
    %v2660 = vmul.f32 %v2658, %v2495
    %v2661 = vadd.f32 %v2655, %v2660
    %v2662 = vsub.f32 %v2611, %v2619
    %v2663 = vmul.f32 %v2662, 1.442695
    %v2664 = vpow.pop %v2663
    %v2665 = vadd.f32 %v2659, %v2664
    %v2666 = vmul.f32 %v2664, %v2498
    %v2667 = vadd.f32 %v2661, %v2666
    %v2668 = vrcp.pop %v2665
    %v2669 = vmul.f32 %v2667, %v2668
    %v2670 = vld [vmem:[#allocation17] sm:$0xff]
    %v2671 = vld [vmem:[#allocation17 + $0x8] sm:$0xff]
    %v2672 = vld [vmem:[#allocation17 + $0x10] sm:$0xff]
    %v2673 = vld [vmem:[#allocation17 + $0x18] sm:$0xff]
    %v2674 = vld [vmem:[#allocation17 + $0x20] sm:$0xff]
    %v2675 = vld [vmem:[#allocation17 + $0x28] sm:$0xff]
    %v2676 = vld [vmem:[#allocation17 + $0x30] sm:$0xff]
    %v2677 = vld [vmem:[#allocation17 + $0x38] sm:$0xff]
    %v2678 = vld [vmem:[%s16] sm:$0x1]
    %v2680 = vperm.slane %v2678, 0
    %v2683 = vsel %vm483, %v2669, 0
    %2685 = vmatpush.msra.mxu0 0.0
    %2686 = vmatpush.msra.mxu0 0.0
    %2687 = vmatpush.msra.mxu0 0.0
    %2688 = vmatpush.msra.mxu0 0.0
    %2689 = vmatpush.msra.mxu0 0.0
    %2690 = vmatpush.msra.mxu0 0.0
    %2691 = vmatpush.msra.mxu0 0.0
    %2692 = vmatpush.msra.mxu0 0.0
    %2693 = vmatpush.msra.mxu0 %v2677
    %2694 = vmatpush.msra.mxu0 %v2676
    %2695 = vmatpush.msra.mxu0 %v2675
    %2696 = vmatpush.msra.mxu0 %v2674
    %2697 = vmatpush.msra.mxu0 %v2673
    %2698 = vmatpush.msra.mxu0 %v2672
    %2699 = vmatpush.msra.mxu0 %v2671
    %2700 = vmatpush.msra.mxu0 %v2670
    %2701 = vmatmul.f32.gmra.mxu0 %v2683
    %v2702 = vpop.f32.mrf.mxu0
    %v2703 = vadd.f32 %v2680, %v2702
    %2704 = vdwg.mxu0
    %v2705 = vld [vmem:[#allocation20] sm:$0xff]
    %v2706 = vld [vmem:[#allocation20 + $0x8] sm:$0xff]
    %v2707 = vld [vmem:[#allocation20 + $0x10] sm:$0xff]
    %v2708 = vld [vmem:[#allocation20 + $0x18] sm:$0xff]
    %v2709 = vld [vmem:[#allocation20 + $0x20] sm:$0xff]
    %v2710 = vld [vmem:[#allocation20 + $0x28] sm:$0xff]
    %v2711 = vld [vmem:[#allocation20 + $0x30] sm:$0xff]
    %v2712 = vld [vmem:[#allocation20 + $0x38] sm:$0xff]
    %v2713 = vld [vmem:[#allocation20 + $0x40] sm:$0xff]
    %v2714 = vld [vmem:[#allocation20 + $0x48] sm:$0xff]
    %v2715 = vld [vmem:[#allocation20 + $0x50] sm:$0xff]
    %v2716 = vld [vmem:[#allocation20 + $0x58] sm:$0xff]
    %v2717 = vld [vmem:[#allocation20 + $0x60] sm:$0xff]
    %v2718 = vld [vmem:[#allocation20 + $0x68] sm:$0xff]
    %v2719 = vld [vmem:[#allocation20 + $0x70] sm:$0xff]
    %v2720 = vld [vmem:[#allocation20 + $0x78] sm:$0xff]
    %v2721 = vld [vmem:[#allocation20 + $0x80] sm:$0xff]
    %v2722 = vld [vmem:[#allocation20 + $0x88] sm:$0xff]
    %v2723 = vld [vmem:[#allocation20 + $0x90] sm:$0xff]
    %v2724 = vld [vmem:[#allocation20 + $0x98] sm:$0xff]
    %v2725 = vld [vmem:[#allocation20 + $0xa0] sm:$0xff]
    %v2726 = vld [vmem:[#allocation20 + $0xa8] sm:$0xff]
    %v2727 = vld [vmem:[#allocation20 + $0xb0] sm:$0xff]
    %v2728 = vld [vmem:[#allocation20 + $0xb8] sm:$0xff]
    %v2729 = vld [vmem:[#allocation20 + $0xc0] sm:$0xff]
    %v2730 = vld [vmem:[#allocation20 + $0xc8] sm:$0xff]
    %v2731 = vld [vmem:[#allocation20 + $0xd0] sm:$0xff]
    %v2732 = vld [vmem:[#allocation20 + $0xd8] sm:$0xff]
    %v2733 = vld [vmem:[#allocation20 + $0xe0] sm:$0xff]
    %v2734 = vld [vmem:[#allocation20 + $0xe8] sm:$0xff]
    %v2735 = vld [vmem:[#allocation20 + $0xf0] sm:$0xff]
    %v2736 = vld [vmem:[#allocation20 + $0xf8] sm:$0xff]
    %v2737 = vld [vmem:[%s19] sm:$0xf]
    %v2739 = vperm.slane %v2737, 0
    %v2740 = vperm.slane %v2737, 1
    %v2741 = vperm.slane %v2737, 2
    %v2742 = vperm.slane %v2737, 3
    %v2748 = vsel %vm483, %v2703, 0
    %2750 = vmatpush.msra.mxu0 0.0
    %2751 = vmatpush.msra.mxu0 0.0
    %2752 = vmatpush.msra.mxu0 0.0
    %2753 = vmatpush.msra.mxu0 0.0
    %2754 = vmatpush.msra.mxu0 0.0
    %2755 = vmatpush.msra.mxu0 0.0
    %2756 = vmatpush.msra.mxu0 0.0
    %2757 = vmatpush.msra.mxu0 0.0
    %2758 = vmatpush.msra.mxu0 %v2733
    %2759 = vmatpush.msra.mxu0 %v2729
    %2760 = vmatpush.msra.mxu0 %v2725
    %2761 = vmatpush.msra.mxu0 %v2721
    %2762 = vmatpush.msra.mxu0 %v2717
    %2763 = vmatpush.msra.mxu0 %v2713
    %2764 = vmatpush.msra.mxu0 %v2709
    %2765 = vmatpush.msra.mxu0 %v2705
    %2766 = vmatmul.f32.gmra.mxu0 %v2748
    %v2767 = vpop.f32.mrf.mxu0
    %v2768 = vadd.f32 %v2739, %v2767
    %2769 = vdwg.mxu0
    %2770 = vmatpush.msra.mxu0 0.0
    %2771 = vmatpush.msra.mxu0 0.0
    %2772 = vmatpush.msra.mxu0 0.0
    %2773 = vmatpush.msra.mxu0 0.0
    %2774 = vmatpush.msra.mxu0 0.0
    %2775 = vmatpush.msra.mxu0 0.0
    %2776 = vmatpush.msra.mxu0 0.0
    %2777 = vmatpush.msra.mxu0 0.0
    %2778 = vmatpush.msra.mxu0 %v2734
    %2779 = vmatpush.msra.mxu0 %v2730
    %2780 = vmatpush.msra.mxu0 %v2726
    %2781 = vmatpush.msra.mxu0 %v2722
    %2782 = vmatpush.msra.mxu0 %v2718
    %2783 = vmatpush.msra.mxu0 %v2714
    %2784 = vmatpush.msra.mxu0 %v2710
    %2785 = vmatpush.msra.mxu0 %v2706
    %2786 = vmatmul.f32.gmra.mxu0 %v2748
    %v2787 = vpop.f32.mrf.mxu0
    %v2788 = vadd.f32 %v2740, %v2787
    %2789 = vdwg.mxu0
    %2790 = vmatpush.msra.mxu0 0.0
    %2791 = vmatpush.msra.mxu0 0.0
    %2792 = vmatpush.msra.mxu0 0.0
    %2793 = vmatpush.msra.mxu0 0.0
    %2794 = vmatpush.msra.mxu0 0.0
    %2795 = vmatpush.msra.mxu0 0.0
    %2796 = vmatpush.msra.mxu0 0.0
    %2797 = vmatpush.msra.mxu0 0.0
    %2798 = vmatpush.msra.mxu0 %v2735
    %2799 = vmatpush.msra.mxu0 %v2731
    %2800 = vmatpush.msra.mxu0 %v2727
    %2801 = vmatpush.msra.mxu0 %v2723
    %2802 = vmatpush.msra.mxu0 %v2719
    %2803 = vmatpush.msra.mxu0 %v2715
    %2804 = vmatpush.msra.mxu0 %v2711
    %2805 = vmatpush.msra.mxu0 %v2707
    %2806 = vmatmul.f32.gmra.mxu0 %v2748
    %v2807 = vpop.f32.mrf.mxu0
    %v2808 = vadd.f32 %v2741, %v2807
    %2809 = vdwg.mxu0
    %2810 = vmatpush.msra.mxu0 0.0
    %2811 = vmatpush.msra.mxu0 0.0
    %2812 = vmatpush.msra.mxu0 0.0
    %2813 = vmatpush.msra.mxu0 0.0
    %2814 = vmatpush.msra.mxu0 0.0
    %2815 = vmatpush.msra.mxu0 0.0
    %2816 = vmatpush.msra.mxu0 0.0
    %2817 = vmatpush.msra.mxu0 0.0
    %2818 = vmatpush.msra.mxu0 %v2736
    %2819 = vmatpush.msra.mxu0 %v2732
    %2820 = vmatpush.msra.mxu0 %v2728
    %2821 = vmatpush.msra.mxu0 %v2724
    %2822 = vmatpush.msra.mxu0 %v2720
    %2823 = vmatpush.msra.mxu0 %v2716
    %2824 = vmatpush.msra.mxu0 %v2712
    %2825 = vmatpush.msra.mxu0 %v2708
    %2826 = vmatmul.f32.gmra.mxu0 %v2748
    %v2827 = vpop.f32.mrf.mxu0
    %v2828 = vadd.f32 %v2742, %v2827
    %2829 = vdwg.mxu0
    %v2830 = vmax.f32 %v2768, 0.0
    %v2831 = vmax.f32 %v2788, 0.0
    %v2832 = vmax.f32 %v2808, 0.0
    %v2833 = vmax.f32 %v2828, 0.0
    %v2834 = vld [vmem:[#allocation21] sm:$0xff]
    %v2835 = vld [vmem:[#allocation21 + $0x8] sm:$0xff]
    %v2836 = vld [vmem:[#allocation21 + $0x10] sm:$0xff]
    %v2837 = vld [vmem:[#allocation21 + $0x18] sm:$0xff]
    %v2838 = vld [vmem:[#allocation21 + $0x20] sm:$0xff]
    %v2839 = vld [vmem:[#allocation21 + $0x28] sm:$0xff]
    %v2840 = vld [vmem:[#allocation21 + $0x30] sm:$0xff]
    %v2841 = vld [vmem:[#allocation21 + $0x38] sm:$0xff]
    %v2842 = vld [vmem:[#allocation21 + $0x40] sm:$0xff]
    %v2843 = vld [vmem:[#allocation21 + $0x48] sm:$0xff]
    %v2844 = vld [vmem:[#allocation21 + $0x50] sm:$0xff]
    %v2845 = vld [vmem:[#allocation21 + $0x58] sm:$0xff]
    %v2846 = vld [vmem:[#allocation21 + $0x60] sm:$0xff]
    %v2847 = vld [vmem:[#allocation21 + $0x68] sm:$0xff]
    %v2848 = vld [vmem:[#allocation21 + $0x70] sm:$0xff]
    %v2849 = vld [vmem:[#allocation21 + $0x78] sm:$0xff]
    %v2850 = vld [vmem:[#allocation21 + $0x80] sm:$0xff]
    %v2851 = vld [vmem:[#allocation21 + $0x88] sm:$0xff]
    %v2852 = vld [vmem:[#allocation21 + $0x90] sm:$0xff]
    %v2853 = vld [vmem:[#allocation21 + $0x98] sm:$0xff]
    %v2854 = vld [vmem:[#allocation21 + $0xa0] sm:$0xff]
    %v2855 = vld [vmem:[#allocation21 + $0xa8] sm:$0xff]
    %v2856 = vld [vmem:[#allocation21 + $0xb0] sm:$0xff]
    %v2857 = vld [vmem:[#allocation21 + $0xb8] sm:$0xff]
    %v2858 = vld [vmem:[#allocation21 + $0xc0] sm:$0xff]
    %v2859 = vld [vmem:[#allocation21 + $0xc8] sm:$0xff]
    %v2860 = vld [vmem:[#allocation21 + $0xd0] sm:$0xff]
    %v2861 = vld [vmem:[#allocation21 + $0xd8] sm:$0xff]
    %v2862 = vld [vmem:[#allocation21 + $0xe0] sm:$0xff]
    %v2863 = vld [vmem:[#allocation21 + $0xe8] sm:$0xff]
    %v2864 = vld [vmem:[#allocation21 + $0xf0] sm:$0xff]
    %v2865 = vld [vmem:[#allocation21 + $0xf8] sm:$0xff]
    %v2866 = vld [vmem:[#allocation21 + $0x100] sm:$0xff]
    %v2867 = vld [vmem:[#allocation21 + $0x108] sm:$0xff]
    %v2868 = vld [vmem:[#allocation21 + $0x110] sm:$0xff]
    %v2869 = vld [vmem:[#allocation21 + $0x118] sm:$0xff]
    %v2870 = vld [vmem:[#allocation21 + $0x120] sm:$0xff]
    %v2871 = vld [vmem:[#allocation21 + $0x128] sm:$0xff]
    %v2872 = vld [vmem:[#allocation21 + $0x130] sm:$0xff]
    %v2873 = vld [vmem:[#allocation21 + $0x138] sm:$0xff]
    %v2874 = vld [vmem:[#allocation21 + $0x140] sm:$0xff]
    %v2875 = vld [vmem:[#allocation21 + $0x148] sm:$0xff]
    %v2876 = vld [vmem:[#allocation21 + $0x150] sm:$0xff]
    %v2877 = vld [vmem:[#allocation21 + $0x158] sm:$0xff]
    %v2878 = vld [vmem:[#allocation21 + $0x160] sm:$0xff]
    %v2879 = vld [vmem:[#allocation21 + $0x168] sm:$0xff]
    %v2880 = vld [vmem:[#allocation21 + $0x170] sm:$0xff]
    %v2881 = vld [vmem:[#allocation21 + $0x178] sm:$0xff]
    %v2882 = vld [vmem:[#allocation21 + $0x180] sm:$0xff]
    %v2883 = vld [vmem:[#allocation21 + $0x188] sm:$0xff]
    %v2884 = vld [vmem:[#allocation21 + $0x190] sm:$0xff]
    %v2885 = vld [vmem:[#allocation21 + $0x198] sm:$0xff]
    %v2886 = vld [vmem:[#allocation21 + $0x1a0] sm:$0xff]
    %v2887 = vld [vmem:[#allocation21 + $0x1a8] sm:$0xff]
    %v2888 = vld [vmem:[#allocation21 + $0x1b0] sm:$0xff]
    %v2889 = vld [vmem:[#allocation21 + $0x1b8] sm:$0xff]
    %v2890 = vld [vmem:[#allocation21 + $0x1c0] sm:$0xff]
    %v2891 = vld [vmem:[#allocation21 + $0x1c8] sm:$0xff]
    %v2892 = vld [vmem:[#allocation21 + $0x1d0] sm:$0xff]
    %v2893 = vld [vmem:[#allocation21 + $0x1d8] sm:$0xff]
    %v2894 = vld [vmem:[#allocation21 + $0x1e0] sm:$0xff]
    %v2895 = vld [vmem:[#allocation21 + $0x1e8] sm:$0xff]
    %v2896 = vld [vmem:[#allocation21 + $0x1f0] sm:$0xff]
    %v2897 = vld [vmem:[#allocation21 + $0x1f8] sm:$0xff]
    %v2898 = vld [vmem:[%s21] sm:$0x1]
    %v2900 = vperm.slane %v2898, 0
    %2902 = vmatpush.msra.mxu0 %v2849
    %2903 = vmatpush.msra.mxu0 %v2848
    %2904 = vmatpush.msra.mxu0 %v2847
    %2905 = vmatpush.msra.mxu0 %v2846
    %2906 = vmatpush.msra.mxu0 %v2845
    %2907 = vmatpush.msra.mxu0 %v2844
    %2908 = vmatpush.msra.mxu0 %v2843
    %2909 = vmatpush.msra.mxu0 %v2842
    %2910 = vmatpush.msra.mxu0 %v2841
    %2911 = vmatpush.msra.mxu0 %v2840
    %2912 = vmatpush.msra.mxu0 %v2839
    %2913 = vmatpush.msra.mxu0 %v2838
    %2914 = vmatpush.msra.mxu0 %v2837
    %2915 = vmatpush.msra.mxu0 %v2836
    %2916 = vmatpush.msra.mxu0 %v2835
    %2917 = vmatpush.msra.mxu0 %v2834
    %2918 = vmatmul.f32.gmra.mxu0 %v2830
    %v2919 = vpop.f32.mrf.mxu0
    %v2920 = vadd.f32 %v2900, %v2919
    %2921 = vdwg.mxu0
    %2922 = vmatpush.msra.mxu0 %v2865
    %2923 = vmatpush.msra.mxu0 %v2864
    %2924 = vmatpush.msra.mxu0 %v2863
    %2925 = vmatpush.msra.mxu0 %v2862
    %2926 = vmatpush.msra.mxu0 %v2861
    %2927 = vmatpush.msra.mxu0 %v2860
    %2928 = vmatpush.msra.mxu0 %v2859
    %2929 = vmatpush.msra.mxu0 %v2858
    %2930 = vmatpush.msra.mxu0 %v2857
    %2931 = vmatpush.msra.mxu0 %v2856
    %2932 = vmatpush.msra.mxu0 %v2855
    %2933 = vmatpush.msra.mxu0 %v2854
    %2934 = vmatpush.msra.mxu0 %v2853
    %2935 = vmatpush.msra.mxu0 %v2852
    %2936 = vmatpush.msra.mxu0 %v2851
    %2937 = vmatpush.msra.mxu0 %v2850
    %2938 = vmatmul.f32.gmra.mxu0 %v2831
    %v2939 = vpop.f32.mrf.mxu0
    %v2940 = vadd.f32 %v2920, %v2939
    %2941 = vdwg.mxu0
    %2942 = vmatpush.msra.mxu0 %v2881
    %2943 = vmatpush.msra.mxu0 %v2880
    %2944 = vmatpush.msra.mxu0 %v2879
    %2945 = vmatpush.msra.mxu0 %v2878
    %2946 = vmatpush.msra.mxu0 %v2877
    %2947 = vmatpush.msra.mxu0 %v2876
    %2948 = vmatpush.msra.mxu0 %v2875
    %2949 = vmatpush.msra.mxu0 %v2874
    %2950 = vmatpush.msra.mxu0 %v2873
    %2951 = vmatpush.msra.mxu0 %v2872
    %2952 = vmatpush.msra.mxu0 %v2871
    %2953 = vmatpush.msra.mxu0 %v2870
    %2954 = vmatpush.msra.mxu0 %v2869
    %2955 = vmatpush.msra.mxu0 %v2868
    %2956 = vmatpush.msra.mxu0 %v2867
    %2957 = vmatpush.msra.mxu0 %v2866
    %2958 = vmatmul.f32.gmra.mxu0 %v2832
    %v2959 = vpop.f32.mrf.mxu0
    %v2960 = vadd.f32 %v2940, %v2959
    %2961 = vdwg.mxu0
    %2962 = vmatpush.msra.mxu0 %v2897
    %2963 = vmatpush.msra.mxu0 %v2896
    %2964 = vmatpush.msra.mxu0 %v2895
    %2965 = vmatpush.msra.mxu0 %v2894
    %2966 = vmatpush.msra.mxu0 %v2893
    %2967 = vmatpush.msra.mxu0 %v2892
    %2968 = vmatpush.msra.mxu0 %v2891
    %2969 = vmatpush.msra.mxu0 %v2890
    %2970 = vmatpush.msra.mxu0 %v2889
    %2971 = vmatpush.msra.mxu0 %v2888
    %2972 = vmatpush.msra.mxu0 %v2887
    %2973 = vmatpush.msra.mxu0 %v2886
    %2974 = vmatpush.msra.mxu0 %v2885
    %2975 = vmatpush.msra.mxu0 %v2884
    %2976 = vmatpush.msra.mxu0 %v2883
    %2977 = vmatpush.msra.mxu0 %v2882
    %2978 = vmatmul.f32.gmra.mxu0 %v2833
    %v2979 = vpop.f32.mrf.mxu0
    %v2980 = vadd.f32 %v2960, %v2979
    %2981 = vdwg.mxu0
    %v2982 = vmax.f32 %v2980, 0.0
    %v2983 = vld [vmem:[%s22] sm:$0xff]
    %v2984 = vld [vmem:[%s22 + $0x8] sm:$0xff]
    %v2985 = vld [vmem:[%s22 + $0x10] sm:$0xff]
    %v2986 = vld [vmem:[%s22 + $0x18] sm:$0xff]
    %v2987 = vld [vmem:[%s22 + $0x20] sm:$0xff]
    %v2988 = vld [vmem:[%s22 + $0x28] sm:$0xff]
    %v2989 = vld [vmem:[%s22 + $0x30] sm:$0xff]
    %v2990 = vld [vmem:[%s22 + $0x38] sm:$0xff]
    %v2991 = vld [vmem:[%s22 + $0x40] sm:$0xff]
    %v2992 = vld [vmem:[%s22 + $0x48] sm:$0xff]
    %v2993 = vld [vmem:[%s22 + $0x50] sm:$0xff]
    %v2994 = vld [vmem:[%s22 + $0x58] sm:$0xff]
    %v2995 = vld [vmem:[%s22 + $0x60] sm:$0xff]
    %v2996 = vld [vmem:[%s22 + $0x68] sm:$0xff]
    %v2997 = vld [vmem:[%s22 + $0x70] sm:$0xff]
    %v2998 = vld [vmem:[%s22 + $0x78] sm:$0xff]
    %v2999 = vld [vmem:[#allocation6] sm:$0x1]
    %v3001 = vperm.slane %v2999, 0
    %3003 = vmatpush.msra.mxu0 %v2998
    %3004 = vmatpush.msra.mxu0 %v2997
    %3005 = vmatpush.msra.mxu0 %v2996
    %3006 = vmatpush.msra.mxu0 %v2995
    %3007 = vmatpush.msra.mxu0 %v2994
    %3008 = vmatpush.msra.mxu0 %v2993
    %3009 = vmatpush.msra.mxu0 %v2992
    %3010 = vmatpush.msra.mxu0 %v2991
    %3011 = vmatpush.msra.mxu0 %v2990
    %3012 = vmatpush.msra.mxu0 %v2989
    %3013 = vmatpush.msra.mxu0 %v2988
    %3014 = vmatpush.msra.mxu0 %v2987
    %3015 = vmatpush.msra.mxu0 %v2986
    %3016 = vmatpush.msra.mxu0 %v2985
    %3017 = vmatpush.msra.mxu0 %v2984
    %3018 = vmatpush.msra.mxu0 %v2983
    %3019 = vmatmul.f32.gmra.mxu0 %v2982
    %v3020 = vpop.f32.mrf.mxu0
    %v3021 = vadd.f32 %v3001, %v3020
    %3022 = vdwg.mxu0
    %vm3023 = vcmask 7168
    %3024 = vst.msk [vmem:[%s24] sm:$0xff] %vm3023, %v3021
    // Predicated region
    $region138: #{tpu_custom_call.1} parent=1 // pred_check
      _
    $region139: #{tpu_custom_call.1} parent=1 // pred_check_branch
      %3026 = sbr.rel (0) target = $region141
    $region140: #{tpu_custom_call.1} parent=1 // pred_region
      _
    $region141: #{tpu_custom_call.1} parent=1 // pred_fallthru
      _
    // Predicated region
    $region142: #{tpu_custom_call.1} parent=1 // pred_check
      _
    $region143: #{tpu_custom_call.1} parent=1 // pred_check_branch
      %3028 = sbr.rel (0) target = $region145
    $region144: #{tpu_custom_call.1} parent=1 // pred_region
      _
    $region145: #{tpu_custom_call.1} parent=1 // pred_fallthru
      _
    %3029 = vsyncpa [#allocation8], 1
    %3030 = vsyncpa [#allocation10], 1
    %3031 = vsyncpa [#allocation13], 1
    %3032 = vsyncpa [#allocation16], 1
    %3033 = vsyncpa [#allocation19], 1
    %3034 = vsyncpa [#allocation22], 1

</llo_original>
